<compile_context>
chip_gen: v6e
topology: v6e:2x2x1
jax: 0.10.0
libtpu: 0.0.40
codegen_flags: <defaults>
</compile_context>

<pallas_src>
import math
import functools

import numpy as np
import jax
import jax.numpy as jnp
from jax import lax
from jax.experimental import pallas as pl
from jax.experimental.pallas import tpu as pltpu


def _round_up(x, m):
    return ((x + m - 1) // m) * m


def _pick_tile(n, align, max_tile, min_blocks=1):
    """Pick (tile, padded_n): tile is a multiple of `align`, <= max(max_tile, align),
    and divides padded_n. Minimize padding; among minimal-padding options prefer
    >= min_blocks grid blocks (megacore), then the largest tile (fewest steps)."""
    n = int(n)
    n_aligned = _round_up(max(n, 1), align)
    max_tile = max(align, (max_tile // align) * align)
    candidates = []
    tile = align
    while tile <= min(max_tile, n_aligned):
        padded = _round_up(n, tile)
        blocks = padded // tile
        # sort key: (padding, not-enough-blocks, -tile)
        candidates.append((padded, 0 if blocks >= min_blocks else 1, -tile, tile))
        tile += align
    if not candidates:
        return n_aligned, n_aligned
    candidates.sort()
    best_tile = candidates[0][3]
    return best_tile, _round_up(n, best_tile)


# ----------------------------------------------------------------------------
# Fused embedding + Gram kernel:  K = X_e @ Y_e.T with X_e/Y_e built in VMEM
# ----------------------------------------------------------------------------
def _fused_gram_kernel(cs_x_ref, cs_y_ref, cb_ref, sb_ref, o_ref,
                       xe_ref, ye_ref, *, approx_order, phase_pad):
    # cs_x_ref: (tn, 2L) f32  [scale_l*cos(<k_l,x_n>) | scale_l*sin(<k_l,x_n>)]
    # cs_y_ref: (tm, 2L) f32  same for y
    # cb_ref  : (L, P)  f32   cos(<k_l, phase_p>)   (P zero-padded)
    # sb_ref  : (L, P)  f32   sin(<k_l, phase_p>)   (P zero-padded)
    # o_ref   : (tn, tm) f32  output K tile
    # xe_ref  : (tn, L*P) VMEM scratch (embedding dtype)
    # ye_ref  : (tm, L*P) VMEM scratch (embedding dtype)
    L, P = approx_order, phase_pad

    def build_tile(src_ref, dst_ref):
        # cos(a-b) = cos(a)cos(b) + sin(a)sin(b): 2 muls + 1 add per element,
        # no transcendental; scale already folded into the point-side factors.
        for l in range(L):
            ca = src_ref[:, l:l + 1]            # (T, 1)
            sa = src_ref[:, L + l:L + l + 1]    # (T, 1)
            cb = cb_ref[l:l + 1, :]             # (1, P)
            sb = sb_ref[l:l + 1, :]             # (1, P)
            dst_ref[:, l * P:(l + 1) * P] = (ca * cb + sa * sb).astype(dst_ref.dtype)

    # x tile depends only on grid axis 0; j sweeps sequentially ("arbitrary"),
    # so rebuild the x embedding only when the inner axis restarts.
    @pl.when(pl.program_id(1) == 0)
    def _():
        build_tile(cs_x_ref, xe_ref)

    build_tile(cs_y_ref, ye_ref)

    # Contract the last dim of both tiles (no in-kernel transpose), f32 MXU acc.
    o_ref[...] = lax.dot_general(
        xe_ref[...], ye_ref[...],
        dimension_numbers=(((1,), (1,)), ((), ())),
        preferred_element_type=jnp.float32)


def fused_gram_pallas(cs_x, cs_y, cb, sb, tn, tm, embed_dtype=jnp.bfloat16):
    n = cs_x.shape[0]
    m = cs_y.shape[0]
    L, P = cb.shape
    D = L * P
    assert n % tn == 0 and m % tm == 0
    # TODO(synk): for very large D (L*P >~ 8k) add a K-axis grid dimension
    # ("arbitrary") with an f32 accumulator instead of keeping D fully resident.
    kernel = functools.partial(_fused_gram_kernel, approx_order=L, phase_pad=P)

    embed_bytes = jnp.dtype(embed_dtype).itemsize
    est = (2 * (tn + tm) * 2 * L * 4        # double-buffered cos/sin point blocks
           + 2 * 2 * D * 4                  # cb/sb blocks (double-buffered, tiny)
           + 2 * tn * tm * 4                # double-buffered f32 output block
           + (tn + tm) * D * embed_bytes)   # embedding scratch (single-buffered)
    vmem_limit = int(min(48 * 1024 * 1024, max(32 * 1024 * 1024, 2 * est)))

    return pl.pallas_call(
        kernel,
        out_shape=jax.ShapeDtypeStruct((n, m), jnp.float32),
        grid_spec=pltpu.PrefetchScalarGridSpec(
            num_scalar_prefetch=0,
            grid=(n // tn, m // tm),
            in_specs=[
                pl.BlockSpec((tn, 2 * L), lambda i, j: (i, 0)),
                pl.BlockSpec((tm, 2 * L), lambda i, j: (j, 0)),
                pl.BlockSpec((L, P), lambda i, j: (0, 0)),
                pl.BlockSpec((L, P), lambda i, j: (0, 0)),
            ],
            out_specs=pl.BlockSpec((tn, tm), lambda i, j: (i, j)),
            scratch_shapes=[pltpu.VMEM((tn, D), embed_dtype),
                            pltpu.VMEM((tm, D), embed_dtype)]),
        compiler_params=pltpu.CompilerParams(
            dimension_semantics=("parallel", "arbitrary"),
            vmem_limit_bytes=vmem_limit),
    )(cs_x, cs_y, cb, sb)


# ----------------------------------------------------------------------------
# RandomPhaseKernel.forward
# ----------------------------------------------------------------------------
def random_phase_kernel_forward(x, y, phases, freqs, eigvals,
                                lengthscale, variance, normalize=True,
                                max_row_tile=512, max_col_tile=512,
                                embed_dtype=jnp.bfloat16):
    N, M = x.shape[0], y.shape[0]
    P = phases.shape[0]
    L = freqs.shape[0]

    # glue: tiny (n, dim) @ (dim, L) projections and O((N+M+P)*L) cos/sin.
    a_x = (x @ freqs.T).astype(jnp.float32)           # (N, L)   <k_l, x_n>
    a_y = (y @ freqs.T).astype(jnp.float32)           # (M, L)   <k_l, y_m>
    bt = (freqs @ phases.T).astype(jnp.float32)       # (L, P)   <k_l, phase_p>

    measure_vals = jnp.exp(-0.5 * (lengthscale ** 2) * eigvals)        # measure(lmd_l)
    base_scale = (jnp.sqrt(measure_vals) / math.sqrt(P)).astype(jnp.float32)  # (L,)

    if normalize:
        # compute_normalizer(): ||embed(id=0)||^2 in closed form (plain JAX scalar):
        #   embed(0)[0, l*P+p] = base_scale[l] * cos(<k_l, phase_p>)
        normalizer = jnp.sum((base_scale[:, None] ** 2) * jnp.cos(bt) ** 2)
        c = jnp.sqrt(jnp.abs(variance)) / jnp.sqrt(normalizer)
        scale = (base_scale * c).astype(jnp.float32)
    else:
        scale = base_scale

    # cos(a-b) factorization: fold the per-eigenspace scale into the point-side
    # cos/sin factors (so the kernel inner loop has no per-element scale).
    cs_x = jnp.concatenate([jnp.cos(a_x) * scale[None, :],
                            jnp.sin(a_x) * scale[None, :]], axis=1)    # (N, 2L)
    cs_y = jnp.concatenate([jnp.cos(a_y) * scale[None, :],
                            jnp.sin(a_y) * scale[None, :]], axis=1)    # (M, 2L)

    # Pad the phase axis so D = L*P_pad is lane-dense and a multiple of 256
    # (full MXU column fill on v6e/v7x). Zero-padded cos/sin phase columns give
    # exactly-zero embedding columns -> no contribution to K.
    P_pad = _round_up(P, 128)
    if (L * P_pad) % 256 != 0:
        P_pad = _round_up(P, 256)
    cb = jnp.pad(jnp.cos(bt), ((0, 0), (0, P_pad - P)))
    sb = jnp.pad(jnp.sin(bt), ((0, 0), (0, P_pad - P)))

    # Pad point counts to tiles; padded (zero) cos/sin rows give zero embedding
    # rows -> zero K rows/cols, sliced off at the end. Row axis prefers >=2
    # blocks so the "parallel" grid axis can feed both v7x TensorCores.
    tn, n_pad = _pick_tile(N, 128, max_row_tile, min_blocks=2)
    tm, m_pad = _pick_tile(M, 128, max_col_tile, min_blocks=1)
    cs_x = jnp.pad(cs_x, ((0, n_pad - N), (0, 0)))
    cs_y = jnp.pad(cs_y, ((0, m_pad - M), (0, 0)))

    K = fused_gram_pallas(cs_x, cs_y, cb, sb, tn, tm, embed_dtype=embed_dtype)
    # TODO(synk): MatmulLazyTensor is returned densely evaluated (x_e @ y_e.T).
    return K[:N, :M]


# ----------------------------------------------------------------------------
# Pure-JAX f32 reference mirroring the PyTorch control flow
# ----------------------------------------------------------------------------
def reference_forward(x, y, phases, freqs, eigvals, lengthscale, variance):
    P, L = phases.shape[0], freqs.shape[0]

    def embed(pts, scale_vec):
        diff = pts[None, :, :] - phases[:, None, :]                  # (P, Np, d)
        cols = []
        for l in range(L):
            e = jnp.cos(jnp.einsum('pnd,d->pn', diff, freqs[l])).T   # (Np, P)
            cols.append(scale_vec[l] * e)
        return jnp.concatenate(cols, axis=1)

    measure_vals = jnp.exp(-0.5 * (lengthscale ** 2) * eigvals)
    base = jnp.sqrt(measure_vals) / math.sqrt(P)
    e_id = embed(jnp.zeros((1, phases.shape[1]), jnp.float32), base)
    normalizer = (e_id @ e_id.T)[0, 0]
    c = jnp.sqrt(jnp.abs(variance)) / jnp.sqrt(normalizer)
    xe = embed(x, base * c)
    ye = embed(y, base * c)
    return xe @ ye.T


if __name__ == "__main__":
    key = jax.random.PRNGKey(0)
    k_phase, k_x, k_y = jax.random.split(key, 3)

    dim = 3
    phase_order = 128      # P  (self.phase_order)
    approx_order = 4       # manifold.order -> number of eigenspaces used
    N, M = 300, 300        # non-multiples of the tile sizes -> exercises padding

    two_pi = 2.0 * math.pi
    # self.phases = self.sample_phases()  (deterministic via PRNGKey)
    phases = jax.random.uniform(k_phase, (phase_order, dim), jnp.float32, 0.0, two_pi)
    x = jax.random.uniform(k_x, (N, dim), jnp.float32, 0.0, two_pi)
    y = jax.random.uniform(k_y, (M, dim), jnp.float32, 0.0, two_pi)

    # deterministic synthetic manifold / measure parameters
    freqs = jnp.array([[1., 0., 0.],
                       [0., 1., 0.],
                       [0., 0., 1.],
                       [1., 1., 1.]], jnp.float32)       # torus character frequencies
    eigvals = jnp.sum(freqs ** 2, axis=1)                # LB eigenvalues ||k_l||^2
    lengthscale = jnp.float32(0.7)
    variance = jnp.float32(1.5)                          # measure.variance[0]

    out = random_phase_kernel_forward(x, y, phases, freqs, eigvals,
                                      lengthscale, variance, normalize=True)
    out = jax.block_until_ready(out)

    ref = reference_forward(x, y, phases, freqs, eigvals, lengthscale, variance)
    # bf16 embedding tiles with f32 MXU accumulation: loosen tolerance accordingly.
    # (pass embed_dtype=jnp.float32 to random_phase_kernel_forward for a stricter
    #  f32 path if K feeds a Cholesky/GP solve.)
    np.testing.assert_allclose(np.asarray(out), np.asarray(ref),
                               rtol=2e-2, atol=5e-3)
    assert out.shape == (N, M)
    print("KERNEL_OK")
</pallas_src>

<mosaic_0001>
module attributes {stable_mosaic.version = 11 : i64} {
  func.func @_fused_gram_kernel(%arg0: i32, %arg1: i32, %arg2: memref<128x8xf32, #tpu.memory_space<vmem>>, %arg3: memref<384x8xf32, #tpu.memory_space<vmem>>, %arg4: memref<4x128xf32, #tpu.memory_space<vmem>>, %arg5: memref<4x128xf32, #tpu.memory_space<vmem>>, %arg6: memref<128x384xf32, #tpu.memory_space<vmem>>, %arg7: memref<128x512xbf16, #tpu.memory_space<vmem>>, %arg8: memref<384x512xbf16, #tpu.memory_space<vmem>>) attributes {dimension_semantics = [#tpu.dimension_semantics<parallel>, #tpu.dimension_semantics<arbitrary>], iteration_bounds = array<i64: 3, 1>, scalar_prefetch = 0 : i64, scratch_operands = 2 : i64, tpu.core_type = #tpu.core_type<tc>, window_params = [{transform_indices = @transform_0, window_bounds = array<i64: 128, 8>}, {transform_indices = @transform_1, window_bounds = array<i64: 384, 8>}, {pipeline_mode = #tpu.pipeline_mode<synchronous>, transform_indices = @transform_2, window_bounds = array<i64: 4, 128>}, {pipeline_mode = #tpu.pipeline_mode<synchronous>, transform_indices = @transform_3, window_bounds = array<i64: 4, 128>}, {transform_indices = @transform_4, window_bounds = array<i64: 128, 384>}]} {
    %c0_i32 = arith.constant 0 : i32
    %0 = arith.cmpi eq, %arg1, %c0_i32 : i32
    %1 = arith.extui %0 : i1 to i32
    %c0_i32_0 = arith.constant 0 : i32
    %2 = arith.cmpi ne, %1, %c0_i32_0 : i32
    scf.if %2 {
      %c0_36 = arith.constant 0 : index
      %c0_37 = arith.constant 0 : index
      %59 = vector.load %arg2[%c0_36, %c0_37] : memref<128x8xf32, #tpu.memory_space<vmem>>, vector<128x1xf32>
      %c0_38 = arith.constant 0 : index
      %c4_39 = arith.constant 4 : index
      %60 = vector.load %arg2[%c0_38, %c4_39] : memref<128x8xf32, #tpu.memory_space<vmem>>, vector<128x1xf32>
      %c0_40 = arith.constant 0 : index
      %c0_41 = arith.constant 0 : index
      %61 = vector.load %arg4[%c0_40, %c0_41] : memref<4x128xf32, #tpu.memory_space<vmem>>, vector<1x128xf32>
      %c0_42 = arith.constant 0 : index
      %c0_43 = arith.constant 0 : index
      %62 = vector.load %arg5[%c0_42, %c0_43] : memref<4x128xf32, #tpu.memory_space<vmem>>, vector<1x128xf32>
      %63 = vector.broadcast %59 : vector<128x1xf32> to vector<128x128xf32>
      %64 = vector.broadcast %61 : vector<1x128xf32> to vector<128x128xf32>
      %65 = arith.mulf %63, %64 : vector<128x128xf32>
      %66 = vector.broadcast %60 : vector<128x1xf32> to vector<128x128xf32>
      %67 = vector.broadcast %62 : vector<1x128xf32> to vector<128x128xf32>
      %68 = arith.mulf %66, %67 : vector<128x128xf32>
      %69 = arith.addf %65, %68 : vector<128x128xf32>
      %70 = arith.truncf %69 : vector<128x128xf32> to vector<128x128xbf16>
      %c0_44 = arith.constant 0 : index
      %c0_45 = arith.constant 0 : index
      %71 = vector.load %arg7[%c0_44, %c0_45] : memref<128x512xbf16, #tpu.memory_space<vmem>>, vector<128x128xbf16>
      tpu.vector_store %arg7[%c0_44, %c0_45], %70 {strides = array<i32>} : memref<128x512xbf16, #tpu.memory_space<vmem>>, vector<128x128xbf16>,
      %c0_46 = arith.constant 0 : index
      %c1_47 = arith.constant 1 : index
      %72 = vector.load %arg2[%c0_46, %c1_47] : memref<128x8xf32, #tpu.memory_space<vmem>>, vector<128x1xf32>
      %c0_48 = arith.constant 0 : index
      %c5_49 = arith.constant 5 : index
      %73 = vector.load %arg2[%c0_48, %c5_49] : memref<128x8xf32, #tpu.memory_space<vmem>>, vector<128x1xf32>
      %c1_50 = arith.constant 1 : index
      %c0_51 = arith.constant 0 : index
      %74 = vector.load %arg4[%c1_50, %c0_51] : memref<4x128xf32, #tpu.memory_space<vmem>>, vector<1x128xf32>
      %c1_52 = arith.constant 1 : index
      %c0_53 = arith.constant 0 : index
      %75 = vector.load %arg5[%c1_52, %c0_53] : memref<4x128xf32, #tpu.memory_space<vmem>>, vector<1x128xf32>
      %76 = vector.broadcast %72 : vector<128x1xf32> to vector<128x128xf32>
      %77 = vector.broadcast %74 : vector<1x128xf32> to vector<128x128xf32>
      %78 = arith.mulf %76, %77 : vector<128x128xf32>
      %79 = vector.broadcast %73 : vector<128x1xf32> to vector<128x128xf32>
      %80 = vector.broadcast %75 : vector<1x128xf32> to vector<128x128xf32>
      %81 = arith.mulf %79, %80 : vector<128x128xf32>
      %82 = arith.addf %78, %81 : vector<128x128xf32>
      %83 = arith.truncf %82 : vector<128x128xf32> to vector<128x128xbf16>
      %c0_54 = arith.constant 0 : index
      %c128_55 = arith.constant 128 : index
      %84 = vector.load %arg7[%c0_54, %c128_55] : memref<128x512xbf16, #tpu.memory_space<vmem>>, vector<128x128xbf16>
      tpu.vector_store %arg7[%c0_54, %c128_55], %83 {strides = array<i32>} : memref<128x512xbf16, #tpu.memory_space<vmem>>, vector<128x128xbf16>,
      %c0_56 = arith.constant 0 : index
      %c2_57 = arith.constant 2 : index
      %85 = vector.load %arg2[%c0_56, %c2_57] : memref<128x8xf32, #tpu.memory_space<vmem>>, vector<128x1xf32>
      %c0_58 = arith.constant 0 : index
      %c6_59 = arith.constant 6 : index
      %86 = vector.load %arg2[%c0_58, %c6_59] : memref<128x8xf32, #tpu.memory_space<vmem>>, vector<128x1xf32>
      %c2_60 = arith.constant 2 : index
      %c0_61 = arith.constant 0 : index
      %87 = vector.load %arg4[%c2_60, %c0_61] : memref<4x128xf32, #tpu.memory_space<vmem>>, vector<1x128xf32>
      %c2_62 = arith.constant 2 : index
      %c0_63 = arith.constant 0 : index
      %88 = vector.load %arg5[%c2_62, %c0_63] : memref<4x128xf32, #tpu.memory_space<vmem>>, vector<1x128xf32>
      %89 = vector.broadcast %85 : vector<128x1xf32> to vector<128x128xf32>
      %90 = vector.broadcast %87 : vector<1x128xf32> to vector<128x128xf32>
      %91 = arith.mulf %89, %90 : vector<128x128xf32>
      %92 = vector.broadcast %86 : vector<128x1xf32> to vector<128x128xf32>
      %93 = vector.broadcast %88 : vector<1x128xf32> to vector<128x128xf32>
      %94 = arith.mulf %92, %93 : vector<128x128xf32>
      %95 = arith.addf %91, %94 : vector<128x128xf32>
      %96 = arith.truncf %95 : vector<128x128xf32> to vector<128x128xbf16>
      %c0_64 = arith.constant 0 : index
      %c256_65 = arith.constant 256 : index
      %97 = vector.load %arg7[%c0_64, %c256_65] : memref<128x512xbf16, #tpu.memory_space<vmem>>, vector<128x128xbf16>
      tpu.vector_store %arg7[%c0_64, %c256_65], %96 {strides = array<i32>} : memref<128x512xbf16, #tpu.memory_space<vmem>>, vector<128x128xbf16>,
      %c0_66 = arith.constant 0 : index
      %c3_67 = arith.constant 3 : index
      %98 = vector.load %arg2[%c0_66, %c3_67] : memref<128x8xf32, #tpu.memory_space<vmem>>, vector<128x1xf32>
      %c0_68 = arith.constant 0 : index
      %c7_69 = arith.constant 7 : index
      %99 = vector.load %arg2[%c0_68, %c7_69] : memref<128x8xf32, #tpu.memory_space<vmem>>, vector<128x1xf32>
      %c3_70 = arith.constant 3 : index
      %c0_71 = arith.constant 0 : index
      %100 = vector.load %arg4[%c3_70, %c0_71] : memref<4x128xf32, #tpu.memory_space<vmem>>, vector<1x128xf32>
      %c3_72 = arith.constant 3 : index
      %c0_73 = arith.constant 0 : index
      %101 = vector.load %arg5[%c3_72, %c0_73] : memref<4x128xf32, #tpu.memory_space<vmem>>, vector<1x128xf32>
      %102 = vector.broadcast %98 : vector<128x1xf32> to vector<128x128xf32>
      %103 = vector.broadcast %100 : vector<1x128xf32> to vector<128x128xf32>
      %104 = arith.mulf %102, %103 : vector<128x128xf32>
      %105 = vector.broadcast %99 : vector<128x1xf32> to vector<128x128xf32>
      %106 = vector.broadcast %101 : vector<1x128xf32> to vector<128x128xf32>
      %107 = arith.mulf %105, %106 : vector<128x128xf32>
      %108 = arith.addf %104, %107 : vector<128x128xf32>
      %109 = arith.truncf %108 : vector<128x128xf32> to vector<128x128xbf16>
      %c0_74 = arith.constant 0 : index
      %c384_75 = arith.constant 384 : index
      %110 = vector.load %arg7[%c0_74, %c384_75] : memref<128x512xbf16, #tpu.memory_space<vmem>>, vector<128x128xbf16>
      tpu.vector_store %arg7[%c0_74, %c384_75], %109 {strides = array<i32>} : memref<128x512xbf16, #tpu.memory_space<vmem>>, vector<128x128xbf16>,
    } else {
    }
    %c0 = arith.constant 0 : index
    %c0_1 = arith.constant 0 : index
    %3 = vector.load %arg3[%c0, %c0_1] : memref<384x8xf32, #tpu.memory_space<vmem>>, vector<384x1xf32>
    %c0_2 = arith.constant 0 : index
    %c4 = arith.constant 4 : index
    %4 = vector.load %arg3[%c0_2, %c4] : memref<384x8xf32, #tpu.memory_space<vmem>>, vector<384x1xf32>
    %c0_3 = arith.constant 0 : index
    %c0_4 = arith.constant 0 : index
    %5 = vector.load %arg4[%c0_3, %c0_4] : memref<4x128xf32, #tpu.memory_space<vmem>>, vector<1x128xf32>
    %c0_5 = arith.constant 0 : index
    %c0_6 = arith.constant 0 : index
    %6 = vector.load %arg5[%c0_5, %c0_6] : memref<4x128xf32, #tpu.memory_space<vmem>>, vector<1x128xf32>
    %7 = vector.broadcast %3 : vector<384x1xf32> to vector<384x128xf32>
    %8 = vector.broadcast %5 : vector<1x128xf32> to vector<384x128xf32>
    %9 = arith.mulf %7, %8 : vector<384x128xf32>
    %10 = vector.broadcast %4 : vector<384x1xf32> to vector<384x128xf32>
    %11 = vector.broadcast %6 : vector<1x128xf32> to vector<384x128xf32>
    %12 = arith.mulf %10, %11 : vector<384x128xf32>
    %13 = arith.addf %9, %12 : vector<384x128xf32>
    %14 = arith.truncf %13 : vector<384x128xf32> to vector<384x128xbf16>
    %c0_7 = arith.constant 0 : index
    %c0_8 = arith.constant 0 : index
    %15 = vector.load %arg8[%c0_7, %c0_8] : memref<384x512xbf16, #tpu.memory_space<vmem>>, vector<384x128xbf16>
    tpu.vector_store %arg8[%c0_7, %c0_8], %14 {strides = array<i32>} : memref<384x512xbf16, #tpu.memory_space<vmem>>, vector<384x128xbf16>,
    %c0_9 = arith.constant 0 : index
    %c1 = arith.constant 1 : index
    %16 = vector.load %arg3[%c0_9, %c1] : memref<384x8xf32, #tpu.memory_space<vmem>>, vector<384x1xf32>
    %c0_10 = arith.constant 0 : index
    %c5 = arith.constant 5 : index
    %17 = vector.load %arg3[%c0_10, %c5] : memref<384x8xf32, #tpu.memory_space<vmem>>, vector<384x1xf32>
    %c1_11 = arith.constant 1 : index
    %c0_12 = arith.constant 0 : index
    %18 = vector.load %arg4[%c1_11, %c0_12] : memref<4x128xf32, #tpu.memory_space<vmem>>, vector<1x128xf32>
    %c1_13 = arith.constant 1 : index
    %c0_14 = arith.constant 0 : index
    %19 = vector.load %arg5[%c1_13, %c0_14] : memref<4x128xf32, #tpu.memory_space<vmem>>, vector<1x128xf32>
    %20 = vector.broadcast %16 : vector<384x1xf32> to vector<384x128xf32>
    %21 = vector.broadcast %18 : vector<1x128xf32> to vector<384x128xf32>
    %22 = arith.mulf %20, %21 : vector<384x128xf32>
    %23 = vector.broadcast %17 : vector<384x1xf32> to vector<384x128xf32>
    %24 = vector.broadcast %19 : vector<1x128xf32> to vector<384x128xf32>
    %25 = arith.mulf %23, %24 : vector<384x128xf32>
    %26 = arith.addf %22, %25 : vector<384x128xf32>
    %27 = arith.truncf %26 : vector<384x128xf32> to vector<384x128xbf16>
    %c0_15 = arith.constant 0 : index
    %c128 = arith.constant 128 : index
    %28 = vector.load %arg8[%c0_15, %c128] : memref<384x512xbf16, #tpu.memory_space<vmem>>, vector<384x128xbf16>
    tpu.vector_store %arg8[%c0_15, %c128], %27 {strides = array<i32>} : memref<384x512xbf16, #tpu.memory_space<vmem>>, vector<384x128xbf16>,
    %c0_16 = arith.constant 0 : index
    %c2 = arith.constant 2 : index
    %29 = vector.load %arg3[%c0_16, %c2] : memref<384x8xf32, #tpu.memory_space<vmem>>, vector<384x1xf32>
    %c0_17 = arith.constant 0 : index
    %c6 = arith.constant 6 : index
    %30 = vector.load %arg3[%c0_17, %c6] : memref<384x8xf32, #tpu.memory_space<vmem>>, vector<384x1xf32>
    %c2_18 = arith.constant 2 : index
    %c0_19 = arith.constant 0 : index
    %31 = vector.load %arg4[%c2_18, %c0_19] : memref<4x128xf32, #tpu.memory_space<vmem>>, vector<1x128xf32>
    %c2_20 = arith.constant 2 : index
    %c0_21 = arith.constant 0 : index
    %32 = vector.load %arg5[%c2_20, %c0_21] : memref<4x128xf32, #tpu.memory_space<vmem>>, vector<1x128xf32>
    %33 = vector.broadcast %29 : vector<384x1xf32> to vector<384x128xf32>
    %34 = vector.broadcast %31 : vector<1x128xf32> to vector<384x128xf32>
    %35 = arith.mulf %33, %34 : vector<384x128xf32>
    %36 = vector.broadcast %30 : vector<384x1xf32> to vector<384x128xf32>
    %37 = vector.broadcast %32 : vector<1x128xf32> to vector<384x128xf32>
    %38 = arith.mulf %36, %37 : vector<384x128xf32>
    %39 = arith.addf %35, %38 : vector<384x128xf32>
    %40 = arith.truncf %39 : vector<384x128xf32> to vector<384x128xbf16>
    %c0_22 = arith.constant 0 : index
    %c256 = arith.constant 256 : index
    %41 = vector.load %arg8[%c0_22, %c256] : memref<384x512xbf16, #tpu.memory_space<vmem>>, vector<384x128xbf16>
    tpu.vector_store %arg8[%c0_22, %c256], %40 {strides = array<i32>} : memref<384x512xbf16, #tpu.memory_space<vmem>>, vector<384x128xbf16>,
    %c0_23 = arith.constant 0 : index
    %c3 = arith.constant 3 : index
    %42 = vector.load %arg3[%c0_23, %c3] : memref<384x8xf32, #tpu.memory_space<vmem>>, vector<384x1xf32>
    %c0_24 = arith.constant 0 : index
    %c7 = arith.constant 7 : index
    %43 = vector.load %arg3[%c0_24, %c7] : memref<384x8xf32, #tpu.memory_space<vmem>>, vector<384x1xf32>
    %c3_25 = arith.constant 3 : index
    %c0_26 = arith.constant 0 : index
    %44 = vector.load %arg4[%c3_25, %c0_26] : memref<4x128xf32, #tpu.memory_space<vmem>>, vector<1x128xf32>
    %c3_27 = arith.constant 3 : index
    %c0_28 = arith.constant 0 : index
    %45 = vector.load %arg5[%c3_27, %c0_28] : memref<4x128xf32, #tpu.memory_space<vmem>>, vector<1x128xf32>
    %46 = vector.broadcast %42 : vector<384x1xf32> to vector<384x128xf32>
    %47 = vector.broadcast %44 : vector<1x128xf32> to vector<384x128xf32>
    %48 = arith.mulf %46, %47 : vector<384x128xf32>
    %49 = vector.broadcast %43 : vector<384x1xf32> to vector<384x128xf32>
    %50 = vector.broadcast %45 : vector<1x128xf32> to vector<384x128xf32>
    %51 = arith.mulf %49, %50 : vector<384x128xf32>
    %52 = arith.addf %48, %51 : vector<384x128xf32>
    %53 = arith.truncf %52 : vector<384x128xf32> to vector<384x128xbf16>
    %c0_29 = arith.constant 0 : index
    %c384 = arith.constant 384 : index
    %54 = vector.load %arg8[%c0_29, %c384] : memref<384x512xbf16, #tpu.memory_space<vmem>>, vector<384x128xbf16>
    tpu.vector_store %arg8[%c0_29, %c384], %53 {strides = array<i32>} : memref<384x512xbf16, #tpu.memory_space<vmem>>, vector<384x128xbf16>,
    %c0_30 = arith.constant 0 : index
    %c0_31 = arith.constant 0 : index
    %55 = vector.load %arg7[%c0_30, %c0_31] : memref<128x512xbf16, #tpu.memory_space<vmem>>, vector<128x512xbf16>
    %c0_32 = arith.constant 0 : index
    %c0_33 = arith.constant 0 : index
    %56 = vector.load %arg8[%c0_32, %c0_33] : memref<384x512xbf16, #tpu.memory_space<vmem>>, vector<384x512xbf16>
    %cst = arith.constant dense<0.000000e+00> : vector<128x384xf32>
    %57 = tpu.matmul %55, %56, %cst {dimension_numbers = #tpu.dot_dimension_numbers<[1], [1], [0], [0], [0, 0, 1, 0], [], []>} : vector<128x512xbf16>, vector<384x512xbf16>, vector<128x384xf32> -> vector<128x384xf32>
    %c0_34 = arith.constant 0 : index
    %c0_35 = arith.constant 0 : index
    %58 = vector.load %arg6[%c0_34, %c0_35] : memref<128x384xf32, #tpu.memory_space<vmem>>, vector<128x384xf32>
    tpu.vector_store %arg6[%c0_34, %c0_35], %57 {strides = array<i32>} : memref<128x384xf32, #tpu.memory_space<vmem>>, vector<128x384xf32>,
    return
  }
  func.func @transform_0(%arg0: i32, %arg1: i32) -> (i32, i32) {
    %c0_i32 = arith.constant 0 : i32
    %c0_i32_0 = arith.constant 0 : i32
    return %arg0, %c0_i32 : i32, i32
  }
  func.func @transform_1(%arg0: i32, %arg1: i32) -> (i32, i32) {
    %c0_i32 = arith.constant 0 : i32
    %c0_i32_0 = arith.constant 0 : i32
    return %arg1, %c0_i32 : i32, i32
  }
  func.func @transform_2(%arg0: i32, %arg1: i32) -> (i32, i32) {
    %c0_i32 = arith.constant 0 : i32
    %c0_i32_0 = arith.constant 0 : i32
    %c0_i32_1 = arith.constant 0 : i32
    return %c0_i32, %c0_i32_0 : i32, i32
  }
  func.func @transform_3(%arg0: i32, %arg1: i32) -> (i32, i32) {
    %c0_i32 = arith.constant 0 : i32
    %c0_i32_0 = arith.constant 0 : i32
    %c0_i32_1 = arith.constant 0 : i32
    return %c0_i32, %c0_i32_0 : i32, i32
  }
  func.func @transform_4(%arg0: i32, %arg1: i32) -> (i32, i32) {
    %c0_i32 = arith.constant 0 : i32
    return %arg0, %arg1 : i32, i32
  }
}

</mosaic_0001>

<llo_original>
// kernel: tpu_custom_call.1
$region0: #{tpu_custom_call.1}
  #allocation0 [shape = 'u32[]', space=smem, size = 0x4, offset = 0x4, fixed_abs, tag = 'smem constant byte address 0x4 - core index']
  #allocation1 [shape = 'u32[144,128]{1,0:T(1,128)}', space=vmem, size = 0x12000, scoped, tag = 'internal scratch']
  #allocation2 [shape = 'bf16[128,512]{1,0:T(8,128)(2,1)}', space=vmem, size = 0x20000, scoped, tag = 'scratch operand']
  #allocation3 [shape = 'bf16[384,512]{1,0:T(8,128)(2,1)}', space=vmem, size = 0x60000, scoped, tag = 'scratch operand']
  %s0 = inlined_call_operand.vmem [shape: f32[384,8], index: 0, kind: input, shape index: {}]
  %s1 = inlined_call_operand.vmem [shape: f32[384,8], index: 1, kind: input, shape index: {}]
  %s2 = inlined_call_operand.vmem [shape: f32[4,128], index: 2, kind: input, shape index: {}]
  %s3 = inlined_call_operand.vmem [shape: f32[4,128], index: 3, kind: input, shape index: {}]
  %s4 = inlined_call_operand.hbm [shape: f32[384,384], index: 4, kind: output, shape index: {}]
  %s5 = sld [smem:[#allocation0]]
  $region53: #{tpu_custom_call.1} parent=0
    _
  %s7 = ssub.s32 1, %s5
  %s8 = scalar_select 0, %s7, %s5
  $region1: #{tpu_custom_call.1} parent=0
    #allocation4 [shape = 'u8[393216]{0}', space=vmem, size = 0x60000, scoped, tag = 'output window, operand 0']
    #allocation5 [shape = 's32[2]{0}', space=sflag, size = 0x8, scoped, tag = 'scoped memory for tpu_custom_call.1']
    %9 = vsyncpa [#allocation5], 0
    %s10 = scalar_lea.sflag [#allocation5], 1
    %11 = vsyncpa %s10, 0
    loop: start=0, step=1, limit=5
    $region2: #{tpu_custom_call.1} parent=1 // loop_pre_header
      _
    $region3: #{tpu_custom_call.1} parent=1 // loop_header
      %s13 = sphi 0, %s17
      %p14 = scmp.ge.s32.totalorder %s13, 5
      %s20 = sphi 0, %s32
      %s21 = sphi 0, %s28
      %s22 = sphi 0, %s20
      %s23 = sphi 0, %s21
      %s24 = sphi 0, %s22
      %s25 = sphi 0, %s23
      %s35 = sphi 0, %s37
      %s38 = sphi 0, %s35
      %s39 = sphi 0, %s38
      %s55 = sphi 0, %s39
      %s61 = sphi 0, %s63
      %s64 = sphi 0, %s61
      %s65 = sphi 0, %s64
      %s81 = sphi 0, %s65
      %s85 = sphi 0, %s85
      %s87 = sphi 0, %s85
      %s88 = sphi 0, %s87
      %s102 = sphi 0, %s88
      %s106 = sphi 0, %s106
      %s108 = sphi 0, %s106
      %s109 = sphi 0, %s108
      %s123 = sphi 0, %s109
      %s131 = sphi 0, %s133
      %s134 = sphi 0, %s131
      %s135 = sphi 0, %s134
      %s151 = sphi 0, %s135
    $region4: #{tpu_custom_call.1} parent=1 // loop_header_branch
      %16 = sbr.rel (%p14) target = $region8
    $region5: #{tpu_custom_call.1} parent=1 // loop_body
      %s18 = ssub.s32 %s13, 1
      %s19 = ssub.s32 %s13, 2
      %s26 = sadd.s32 1, %s21
      %p27 = scmp.ge.s32.totalorder %s26, 1
      %s28 = scalar_select %p27, 0, %s26
      %s29 = sadd.s32 1, %s20
      %s30 = scalar_select %p27, %s29, %s20
      %p31 = scmp.ge.s32.totalorder %s30, 3
      %s32 = scalar_select %p31, 0, %s30
      %s33 = ssub.s32 %s20, %s32
      %p34 = scmp.eq.s32.totalorder %s33, 0
      %s36 = sadd.s32 %s35, 1
      %s37 = scalar_select %p34, %s35, %s36
      %p40 = pneg %p34
      %p41 = scmp.eq.s32.totalorder %s13, 2
      %p42 = por %p40, %p41
      %p43 = scmp.ne.s32.totalorder %s35, %s38
      %p44 = scmp.eq.s32.totalorder %s13, 0
      %p45 = por %p43, %p44
      %p46 = scmp.ne.s32.totalorder %s35, %s38
      %p47 = scmp.eq.s32.totalorder %s18, 2
      %p48 = por %p46, %p47
      %p49 = scmp.ne.s32.totalorder %s38, %s39
      %p50 = scmp.eq.s32.totalorder %s18, 0
      %p51 = por %p49, %p50
      %p52 = scmp.ne.s32.totalorder %s38, %s39
      %p53 = scmp.eq.s32.totalorder %s19, 2
      %p54 = por %p52, %p53
      %p56 = scmp.ne.s32.totalorder %s39, %s55
      %p57 = scmp.eq.s32.totalorder %s19, 0
      %p58 = por %p56, %p57
      %s59 = ssub.s32 %s21, %s28
      %p60 = scmp.eq.s32.totalorder %s59, 0
      %s62 = sadd.s32 %s61, 1
      %s63 = scalar_select %p60, %s61, %s62
      %p66 = pneg %p60
      %p67 = scmp.eq.s32.totalorder %s13, 2
      %p68 = por %p66, %p67
      %p69 = scmp.ne.s32.totalorder %s61, %s64
      %p70 = scmp.eq.s32.totalorder %s13, 0
      %p71 = por %p69, %p70
      %p72 = scmp.ne.s32.totalorder %s61, %s64
      %p73 = scmp.eq.s32.totalorder %s18, 2
      %p74 = por %p72, %p73
      %p75 = scmp.ne.s32.totalorder %s64, %s65
      %p76 = scmp.eq.s32.totalorder %s18, 0
      %p77 = por %p75, %p76
      %p78 = scmp.ne.s32.totalorder %s64, %s65
      %p79 = scmp.eq.s32.totalorder %s19, 2
      %p80 = por %p78, %p79
      %p82 = scmp.ne.s32.totalorder %s65, %s81
      %p83 = scmp.eq.s32.totalorder %s19, 0
      %p84 = por %p82, %p83
      %s86 = sadd.s32 %s85, 1
      %p89 = scmp.eq.s32.totalorder %s13, 2
      %p90 = scmp.ne.s32.totalorder %s85, %s87
      %p91 = scmp.eq.s32.totalorder %s13, 0
      %p92 = por %p90, %p91
      %p93 = scmp.ne.s32.totalorder %s85, %s87
      %p94 = scmp.eq.s32.totalorder %s18, 2
      %p95 = por %p93, %p94
      %p96 = scmp.ne.s32.totalorder %s87, %s88
      %p97 = scmp.eq.s32.totalorder %s18, 0
      %p98 = por %p96, %p97
      %p99 = scmp.ne.s32.totalorder %s87, %s88
      %p100 = scmp.eq.s32.totalorder %s19, 2
      %p101 = por %p99, %p100
      %p103 = scmp.ne.s32.totalorder %s88, %s102
      %p104 = scmp.eq.s32.totalorder %s19, 0
      %p105 = por %p103, %p104
      %s107 = sadd.s32 %s106, 1
      %p110 = scmp.eq.s32.totalorder %s13, 2
      %p111 = scmp.ne.s32.totalorder %s106, %s108
      %p112 = scmp.eq.s32.totalorder %s13, 0
      %p113 = por %p111, %p112
      %p114 = scmp.ne.s32.totalorder %s106, %s108
      %p115 = scmp.eq.s32.totalorder %s18, 2
      %p116 = por %p114, %p115
      %p117 = scmp.ne.s32.totalorder %s108, %s109
      %p118 = scmp.eq.s32.totalorder %s18, 0
      %p119 = por %p117, %p118
      %p120 = scmp.ne.s32.totalorder %s108, %s109
      %p121 = scmp.eq.s32.totalorder %s19, 2
      %p122 = por %p120, %p121
      %p124 = scmp.ne.s32.totalorder %s109, %s123
      %p125 = scmp.eq.s32.totalorder %s19, 0
      %p126 = por %p124, %p125
      %s127 = ssub.s32 %s20, %s32
      %s128 = ssub.s32 %s21, %s28
      %s129 = sor.u32 %s127, %s128
      %p130 = scmp.eq.s32.totalorder %s129, 0
      %s132 = sadd.s32 %s131, 1
      %s133 = scalar_select %p130, %s131, %s132
      %p136 = pneg %p130
      %p137 = scmp.eq.s32.totalorder %s13, 2
      %p138 = por %p136, %p137
      %p139 = scmp.ne.s32.totalorder %s131, %s134
      %p140 = scmp.eq.s32.totalorder %s13, 0
      %p141 = por %p139, %p140
      %p142 = scmp.ne.s32.totalorder %s131, %s134
      %p143 = scmp.eq.s32.totalorder %s18, 2
      %p144 = por %p142, %p143
      %p145 = scmp.ne.s32.totalorder %s134, %s135
      %p146 = scmp.eq.s32.totalorder %s18, 0
      %p147 = por %p145, %p146
      %p148 = scmp.ne.s32.totalorder %s134, %s135
      %p149 = scmp.eq.s32.totalorder %s19, 2
      %p150 = por %p148, %p149
      %p152 = scmp.ne.s32.totalorder %s135, %s151
      %p153 = scmp.eq.s32.totalorder %s19, 0
      %p154 = por %p152, %p153
      %p155 = scmp.le.s32.totalorder 1, %s13
      %p156 = scmp.lt.s32.totalorder %s13, 4
      %p157 = pnand %p155, %p156
      %p158 = pneg %p157
      // Predicated region
      $region9: #{tpu_custom_call.1} parent=5 // pred_check
        _
      $region10: #{tpu_custom_call.1} parent=5 // pred_check_branch
        %160 = sbr.rel (%p157) target = $region12
      $region11: #{tpu_custom_call.1} parent=5 // pred_region
        %s161 = ssub.s32 %s13, 1
        // Predicated region
        $region13: #{tpu_custom_call.1} parent=11 // pred_check
          %p162 = pneg %p77
        $region14: #{tpu_custom_call.1} parent=11 // pred_check_branch
          %164 = sbr.rel (%p162) target = $region16
        $region15: #{tpu_custom_call.1} parent=11 // pred_region
          %s165 = smul.u32 48, %s23
          %p166 = scmp.lt.s32.totalorder %s165, 47
          %s167 = scalar_select %p166, %s165, 47
          %s168 = smul.addr %s167, 8
          %s169 = scalar_lea.vmem %s1, %s168
          %s170 = smul.u32 48, %s23
        $region16: #{tpu_custom_call.1} parent=11 // pred_fallthru
          _
        // Predicated region
        $region17: #{tpu_custom_call.1} parent=11 // pred_check
          %p171 = pneg %p98
        $region18: #{tpu_custom_call.1} parent=11 // pred_check_branch
          %173 = sbr.rel (%p171) target = $region20
        $region19: #{tpu_custom_call.1} parent=11 // pred_region
          _
        $region20: #{tpu_custom_call.1} parent=11 // pred_fallthru
          _
        // Predicated region
        $region21: #{tpu_custom_call.1} parent=11 // pred_check
          %p174 = pneg %p119
        $region22: #{tpu_custom_call.1} parent=11 // pred_check_branch
          %176 = sbr.rel (%p174) target = $region24
        $region23: #{tpu_custom_call.1} parent=11 // pred_region
          _
        $region24: #{tpu_custom_call.1} parent=11 // pred_fallthru
          _
      $region12: #{tpu_custom_call.1} parent=5 // pred_fallthru
        _
      %p177 = scmp.lt.s32.totalorder %s13, 3
      // Predicated region
      $region25: #{tpu_custom_call.1} parent=5 // pred_check
        %p178 = pneg %p177
      $region26: #{tpu_custom_call.1} parent=5 // pred_check_branch
        %180 = sbr.rel (%p178) target = $region28
      $region27: #{tpu_custom_call.1} parent=5 // pred_region
        // Predicated region
        $region29: #{tpu_custom_call.1} parent=27 // pred_check
          %p181 = pneg %p45
        $region30: #{tpu_custom_call.1} parent=27 // pred_check_branch
          %183 = sbr.rel (%p181) target = $region32
        $region31: #{tpu_custom_call.1} parent=27 // pred_region
          %s184 = smul.u32 16, %s20
          %p185 = scmp.lt.s32.totalorder %s184, 47
          %s186 = scalar_select %p185, %s184, 47
          %s187 = smul.addr %s186, 8
          %s188 = scalar_lea.vmem %s0, %s187
          %s189 = smul.u32 16, %s20
        $region32: #{tpu_custom_call.1} parent=27 // pred_fallthru
          _
      $region28: #{tpu_custom_call.1} parent=5 // pred_fallthru
        _
      %p190 = scmp.le.s32.totalorder 1, %s13
      %p191 = scmp.lt.s32.totalorder %s13, 4
      %p192 = pnand %p190, %p191
      %p193 = pneg %p192
      // Predicated region
      $region33: #{tpu_custom_call.1} parent=5 // pred_check
        _
      $region34: #{tpu_custom_call.1} parent=5 // pred_check_branch
        %195 = sbr.rel (%p192) target = $region36
      $region35: #{tpu_custom_call.1} parent=5 // pred_region
        %s196 = ssub.s32 %s13, 1
        %s197 = smul.u32 16, %s22
        %p198 = scmp.lt.s32.totalorder %s197, 47
        %s199 = scalar_select %p198, %s197, 47
        %s200 = smul.addr %s199, 8
        %s201 = scalar_lea.vmem %s0, %s200
        %p202 = pneg %p51
        %p203 = pneg %p48
        %s204 = smul.u32 48, %s23
        %p205 = scmp.lt.s32.totalorder %s204, 47
        %s206 = scalar_select %p205, %s204, 47
        %s207 = smul.addr %s206, 8
        %s208 = scalar_lea.vmem %s1, %s207
        %p209 = pneg %p77
        %p210 = pneg %p74
        %p211 = pneg %p98
        %p212 = pneg %p95
        %p213 = pneg %p119
        %p214 = pneg %p116
        %p215 = pneg %p147
        %p216 = pneg %p144
        %s217 = sand.u32 %s134, 1
        %s218 = scalar_lea.sflag [#allocation5], %s217
        %s219 = sand.u32 %s134, 1
        %s220 = smul.addr %s219, 384
        %s221 = scalar_lea.vmem [#allocation4], %s220
        %s222 = smul.u32 16, %s22
        %p223 = scmp.lt.s32.totalorder %s222, 47
        %s224 = scalar_select %p223, %s222, 47
        %s225 = smul.addr %s224, 8
        %s226 = scalar_lea.vmem %s0, %s225
        %s227 = smul.u32 16, %s22
        %s228 = smul.u32 48, %s23
        %p229 = scmp.lt.s32.totalorder %s228, 47
        %s230 = scalar_select %p229, %s228, 47
        %s231 = smul.addr %s230, 8
        %s232 = scalar_lea.vmem %s1, %s231
        %s233 = smul.u32 48, %s23
        %s234 = smul.u32 16, %s22
        %s235 = smul.u32 3, %s23
        %p237 = scmp.eq.s32.totalorder %s23, 0
        // Predicated region
        $region37: #{tpu_custom_call.1} parent=35 // pred_check
          %p238 = pneg %p237
        $region38: #{tpu_custom_call.1} parent=35 // pred_check_branch
          %240 = sbr.rel (%p238) target = $region40
        $region39: #{tpu_custom_call.1} parent=35 // pred_region
          %v241 = vld [vmem:[%s226] sm:$0xff]
          %v242 = vld [vmem:[%s226 + $0x8] sm:$0xff]
          %v243 = vld [vmem:[%s226 + $0x10] sm:$0xff]
          %v244 = vld [vmem:[%s226 + $0x18] sm:$0xff]
          %v245 = vld [vmem:[%s226 + $0x20] sm:$0xff]
          %v246 = vld [vmem:[%s226 + $0x28] sm:$0xff]
          %v247 = vld [vmem:[%s226 + $0x30] sm:$0xff]
          %v248 = vld [vmem:[%s226 + $0x38] sm:$0xff]
          %v249 = vld [vmem:[%s226 + $0x40] sm:$0xff]
          %v250 = vld [vmem:[%s226 + $0x48] sm:$0xff]
          %v251 = vld [vmem:[%s226 + $0x50] sm:$0xff]
          %v252 = vld [vmem:[%s226 + $0x58] sm:$0xff]
          %v253 = vld [vmem:[%s226 + $0x60] sm:$0xff]
          %v254 = vld [vmem:[%s226 + $0x68] sm:$0xff]
          %v255 = vld [vmem:[%s226 + $0x70] sm:$0xff]
          %v256 = vld [vmem:[%s226 + $0x78] sm:$0xff]
          %v257 = vld [vmem:[%s2] sm:$0x1]
          %v258 = vld [vmem:[%s3] sm:$0x1]
          %260 = vset.pattern.permute.xlu0 0
          %261 = vperm.xlu0 %260, %v241
          %v262 = vpop.permute.xlu0 %261
          %265 = vset.pattern.permute.xlu0 0
          %266 = vperm.xlu0 %265, %v242
          %v267 = vpop.permute.xlu0 %266
          %270 = vset.pattern.permute.xlu0 0
          %271 = vperm.xlu0 %270, %v243
          %v272 = vpop.permute.xlu0 %271
          %275 = vset.pattern.permute.xlu0 0
          %276 = vperm.xlu0 %275, %v244
          %v277 = vpop.permute.xlu0 %276
          %280 = vset.pattern.permute.xlu0 0
          %281 = vperm.xlu0 %280, %v245
          %v282 = vpop.permute.xlu0 %281
          %285 = vset.pattern.permute.xlu0 0
          %286 = vperm.xlu0 %285, %v246
          %v287 = vpop.permute.xlu0 %286
          %290 = vset.pattern.permute.xlu0 0
          %291 = vperm.xlu0 %290, %v247
          %v292 = vpop.permute.xlu0 %291
          %295 = vset.pattern.permute.xlu0 0
          %296 = vperm.xlu0 %295, %v248
          %v297 = vpop.permute.xlu0 %296
          %300 = vset.pattern.permute.xlu0 0
          %301 = vperm.xlu0 %300, %v249
          %v302 = vpop.permute.xlu0 %301
          %305 = vset.pattern.permute.xlu0 0
          %306 = vperm.xlu0 %305, %v250
          %v307 = vpop.permute.xlu0 %306
          %310 = vset.pattern.permute.xlu0 0
          %311 = vperm.xlu0 %310, %v251
          %v312 = vpop.permute.xlu0 %311
          %315 = vset.pattern.permute.xlu0 0
          %316 = vperm.xlu0 %315, %v252
          %v317 = vpop.permute.xlu0 %316
          %320 = vset.pattern.permute.xlu0 0
          %321 = vperm.xlu0 %320, %v253
          %v322 = vpop.permute.xlu0 %321
          %325 = vset.pattern.permute.xlu0 0
          %326 = vperm.xlu0 %325, %v254
          %v327 = vpop.permute.xlu0 %326
          %330 = vset.pattern.permute.xlu0 0
          %331 = vperm.xlu0 %330, %v255
          %v332 = vpop.permute.xlu0 %331
          %335 = vset.pattern.permute.xlu0 0
          %336 = vperm.xlu0 %335, %v256
          %v337 = vpop.permute.xlu0 %336
          %v339 = vlaneseq
          %v340 = vshrl.u32 %v339, 7
          %v341 = vsub.s32 0, %v340
          %v342 = vrot.slane %v257, %v341
          %v343 = vmul.f32 %v262, %v342
          %v344 = vmul.f32 %v267, %v342
          %v345 = vmul.f32 %v272, %v342
          %v346 = vmul.f32 %v277, %v342
          %v347 = vmul.f32 %v282, %v342
          %v348 = vmul.f32 %v287, %v342
          %v349 = vmul.f32 %v292, %v342
          %v350 = vmul.f32 %v297, %v342
          %v351 = vmul.f32 %v302, %v342
          %v352 = vmul.f32 %v307, %v342
          %v353 = vmul.f32 %v312, %v342
          %v354 = vmul.f32 %v317, %v342
          %v355 = vmul.f32 %v322, %v342
          %v356 = vmul.f32 %v327, %v342
          %v357 = vmul.f32 %v332, %v342
          %v358 = vmul.f32 %v337, %v342
          %359 = vset.pattern.permute.xlu0 4
          %360 = vperm.xlu0 %359, %v241
          %v361 = vpop.permute.xlu0 %360
          %363 = vset.pattern.permute.xlu0 4
          %364 = vperm.xlu0 %363, %v242
          %v365 = vpop.permute.xlu0 %364
          %367 = vset.pattern.permute.xlu0 4
          %368 = vperm.xlu0 %367, %v243
          %v369 = vpop.permute.xlu0 %368
          %371 = vset.pattern.permute.xlu0 4
          %372 = vperm.xlu0 %371, %v244
          %v373 = vpop.permute.xlu0 %372
          %375 = vset.pattern.permute.xlu0 4
          %376 = vperm.xlu0 %375, %v245
          %v377 = vpop.permute.xlu0 %376
          %379 = vset.pattern.permute.xlu0 4
          %380 = vperm.xlu0 %379, %v246
          %v381 = vpop.permute.xlu0 %380
          %383 = vset.pattern.permute.xlu0 4
          %384 = vperm.xlu0 %383, %v247
          %v385 = vpop.permute.xlu0 %384
          %387 = vset.pattern.permute.xlu0 4
          %388 = vperm.xlu0 %387, %v248
          %v389 = vpop.permute.xlu0 %388
          %391 = vset.pattern.permute.xlu0 4
          %392 = vperm.xlu0 %391, %v249
          %v393 = vpop.permute.xlu0 %392
          %395 = vset.pattern.permute.xlu0 4
          %396 = vperm.xlu0 %395, %v250
          %v397 = vpop.permute.xlu0 %396
          %399 = vset.pattern.permute.xlu0 4
          %400 = vperm.xlu0 %399, %v251
          %v401 = vpop.permute.xlu0 %400
          %403 = vset.pattern.permute.xlu0 4
          %404 = vperm.xlu0 %403, %v252
          %v405 = vpop.permute.xlu0 %404
          %407 = vset.pattern.permute.xlu0 4
          %408 = vperm.xlu0 %407, %v253
          %v409 = vpop.permute.xlu0 %408
          %411 = vset.pattern.permute.xlu0 4
          %412 = vperm.xlu0 %411, %v254
          %v413 = vpop.permute.xlu0 %412
          %415 = vset.pattern.permute.xlu0 4
          %416 = vperm.xlu0 %415, %v255
          %v417 = vpop.permute.xlu0 %416
          %419 = vset.pattern.permute.xlu0 4
          %420 = vperm.xlu0 %419, %v256
          %v421 = vpop.permute.xlu0 %420
          %v423 = vlaneseq
          %v424 = vshrl.u32 %v423, 7
          %v425 = vsub.s32 0, %v424
          %v426 = vrot.slane %v258, %v425
          %v427 = vmul.f32 %v361, %v426
          %v428 = vmul.f32 %v365, %v426
          %v429 = vmul.f32 %v369, %v426
          %v430 = vmul.f32 %v373, %v426
          %v431 = vmul.f32 %v377, %v426
          %v432 = vmul.f32 %v381, %v426
          %v433 = vmul.f32 %v385, %v426
          %v434 = vmul.f32 %v389, %v426
          %v435 = vmul.f32 %v393, %v426
          %v436 = vmul.f32 %v397, %v426
          %v437 = vmul.f32 %v401, %v426
          %v438 = vmul.f32 %v405, %v426
          %v439 = vmul.f32 %v409, %v426
          %v440 = vmul.f32 %v413, %v426
          %v441 = vmul.f32 %v417, %v426
          %v442 = vmul.f32 %v421, %v426
          %v443 = vadd.f32 %v343, %v427
          %v444 = vadd.f32 %v344, %v428
          %v445 = vadd.f32 %v345, %v429
          %v446 = vadd.f32 %v346, %v430
          %v447 = vadd.f32 %v347, %v431
          %v448 = vadd.f32 %v348, %v432
          %v449 = vadd.f32 %v349, %v433
          %v450 = vadd.f32 %v350, %v434
          %v451 = vadd.f32 %v351, %v435
          %v452 = vadd.f32 %v352, %v436
          %v453 = vadd.f32 %v353, %v437
          %v454 = vadd.f32 %v354, %v438
          %v455 = vadd.f32 %v355, %v439
          %v456 = vadd.f32 %v356, %v440
          %v457 = vadd.f32 %v357, %v441
          %v458 = vadd.f32 %v358, %v442
          %v459 = vpack.c.bf16 %v444, %v443
          %v460 = vpack.c.bf16 %v446, %v445
          %v461 = vpack.c.bf16 %v448, %v447
          %v462 = vpack.c.bf16 %v450, %v449
          %v463 = vpack.c.bf16 %v452, %v451
          %v464 = vpack.c.bf16 %v454, %v453
          %v465 = vpack.c.bf16 %v456, %v455
          %v466 = vpack.c.bf16 %v458, %v457
          %v475 = vunpack.c.l.b16 %v459
          %v476 = vunpack.c.h.b16 %v459
          %v477 = vunpack.c.l.b16 %v460
          %v478 = vunpack.c.h.b16 %v460
          %v479 = vunpack.c.l.b16 %v461
          %v480 = vunpack.c.h.b16 %v461
          %v481 = vunpack.c.l.b16 %v462
          %v482 = vunpack.c.h.b16 %v462
          %v483 = vunpack.c.l.b16 %v463
          %v484 = vunpack.c.h.b16 %v463
          %v485 = vunpack.c.l.b16 %v464
          %v486 = vunpack.c.h.b16 %v464
          %v487 = vunpack.c.l.b16 %v465
          %v488 = vunpack.c.h.b16 %v465
          %v489 = vunpack.c.l.b16 %v466
          %v490 = vunpack.c.h.b16 %v466
          %v491 = vpack.c.b16 %v475, %v475
          %v492 = vpack.c.b16 %v476, %v476
          %v493 = vpack.c.b16 %v477, %v477
          %v494 = vpack.c.b16 %v478, %v478
          %v495 = vpack.c.b16 %v479, %v479
          %v496 = vpack.c.b16 %v480, %v480
          %v497 = vpack.c.b16 %v481, %v481
          %v498 = vpack.c.b16 %v482, %v482
          %v499 = vpack.c.b16 %v483, %v483
          %v500 = vpack.c.b16 %v484, %v484
          %v501 = vpack.c.b16 %v485, %v485
          %v502 = vpack.c.b16 %v486, %v486
          %v503 = vpack.c.b16 %v487, %v487
          %v504 = vpack.c.b16 %v488, %v488
          %v505 = vpack.c.b16 %v489, %v489
          %v506 = vpack.c.b16 %v490, %v490
          %523 = vst [vmem:[#allocation2] sm:$0xf] %v491
          %524 = vst [vmem:[#allocation2 + $0x10] sm:$0xf] %v492
          %525 = vst [vmem:[#allocation2 + $0x20] sm:$0xf] %v493
          %526 = vst [vmem:[#allocation2 + $0x30] sm:$0xf] %v494
          %527 = vst [vmem:[#allocation2 + $0x40] sm:$0xf] %v495
          %528 = vst [vmem:[#allocation2 + $0x50] sm:$0xf] %v496
          %529 = vst [vmem:[#allocation2 + $0x60] sm:$0xf] %v497
          %530 = vst [vmem:[#allocation2 + $0x70] sm:$0xf] %v498
          %531 = vst [vmem:[#allocation2 + $0x80] sm:$0xf] %v499
          %532 = vst [vmem:[#allocation2 + $0x90] sm:$0xf] %v500
          %533 = vst [vmem:[#allocation2 + $0xa0] sm:$0xf] %v501
          %534 = vst [vmem:[#allocation2 + $0xb0] sm:$0xf] %v502
          %535 = vst [vmem:[#allocation2 + $0xc0] sm:$0xf] %v503
          %536 = vst [vmem:[#allocation2 + $0xd0] sm:$0xf] %v504
          %537 = vst [vmem:[#allocation2 + $0xe0] sm:$0xf] %v505
          %538 = vst [vmem:[#allocation2 + $0xf0] sm:$0xf] %v506
          %v539 = vld [vmem:[%s226] sm:$0xff]
          %v540 = vld [vmem:[%s226 + $0x8] sm:$0xff]
          %v541 = vld [vmem:[%s226 + $0x10] sm:$0xff]
          %v542 = vld [vmem:[%s226 + $0x18] sm:$0xff]
          %v543 = vld [vmem:[%s226 + $0x20] sm:$0xff]
          %v544 = vld [vmem:[%s226 + $0x28] sm:$0xff]
          %v545 = vld [vmem:[%s226 + $0x30] sm:$0xff]
          %v546 = vld [vmem:[%s226 + $0x38] sm:$0xff]
          %v547 = vld [vmem:[%s226 + $0x40] sm:$0xff]
          %v548 = vld [vmem:[%s226 + $0x48] sm:$0xff]
          %v549 = vld [vmem:[%s226 + $0x50] sm:$0xff]
          %v550 = vld [vmem:[%s226 + $0x58] sm:$0xff]
          %v551 = vld [vmem:[%s226 + $0x60] sm:$0xff]
          %v552 = vld [vmem:[%s226 + $0x68] sm:$0xff]
          %v553 = vld [vmem:[%s226 + $0x70] sm:$0xff]
          %v554 = vld [vmem:[%s226 + $0x78] sm:$0xff]
          %v555 = vld [vmem:[%s2 + $0x1] sm:$0x1]
          %v556 = vld [vmem:[%s3 + $0x1] sm:$0x1]
          %558 = vset.pattern.permute.xlu0 1
          %559 = vperm.xlu0 %558, %v539
          %v560 = vpop.permute.xlu0 %559
          %563 = vset.pattern.permute.xlu0 1
          %564 = vperm.xlu0 %563, %v540
          %v565 = vpop.permute.xlu0 %564
          %568 = vset.pattern.permute.xlu0 1
          %569 = vperm.xlu0 %568, %v541
          %v570 = vpop.permute.xlu0 %569
          %573 = vset.pattern.permute.xlu0 1
          %574 = vperm.xlu0 %573, %v542
          %v575 = vpop.permute.xlu0 %574
          %578 = vset.pattern.permute.xlu0 1
          %579 = vperm.xlu0 %578, %v543
          %v580 = vpop.permute.xlu0 %579
          %583 = vset.pattern.permute.xlu0 1
          %584 = vperm.xlu0 %583, %v544
          %v585 = vpop.permute.xlu0 %584
          %588 = vset.pattern.permute.xlu0 1
          %589 = vperm.xlu0 %588, %v545
          %v590 = vpop.permute.xlu0 %589
          %593 = vset.pattern.permute.xlu0 1
          %594 = vperm.xlu0 %593, %v546
          %v595 = vpop.permute.xlu0 %594
          %598 = vset.pattern.permute.xlu0 1
          %599 = vperm.xlu0 %598, %v547
          %v600 = vpop.permute.xlu0 %599
          %603 = vset.pattern.permute.xlu0 1
          %604 = vperm.xlu0 %603, %v548
          %v605 = vpop.permute.xlu0 %604
          %608 = vset.pattern.permute.xlu0 1
          %609 = vperm.xlu0 %608, %v549
          %v610 = vpop.permute.xlu0 %609
          %613 = vset.pattern.permute.xlu0 1
          %614 = vperm.xlu0 %613, %v550
          %v615 = vpop.permute.xlu0 %614
          %618 = vset.pattern.permute.xlu0 1
          %619 = vperm.xlu0 %618, %v551
          %v620 = vpop.permute.xlu0 %619
          %623 = vset.pattern.permute.xlu0 1
          %624 = vperm.xlu0 %623, %v552
          %v625 = vpop.permute.xlu0 %624
          %628 = vset.pattern.permute.xlu0 1
          %629 = vperm.xlu0 %628, %v553
          %v630 = vpop.permute.xlu0 %629
          %633 = vset.pattern.permute.xlu0 1
          %634 = vperm.xlu0 %633, %v554
          %v635 = vpop.permute.xlu0 %634
          %v637 = vlaneseq
          %v638 = vshrl.u32 %v637, 7
          %v639 = vsub.s32 0, %v638
          %v640 = vrot.slane %v555, %v639
          %v641 = vmul.f32 %v560, %v640
          %v642 = vmul.f32 %v565, %v640
          %v643 = vmul.f32 %v570, %v640
          %v644 = vmul.f32 %v575, %v640
          %v645 = vmul.f32 %v580, %v640
          %v646 = vmul.f32 %v585, %v640
          %v647 = vmul.f32 %v590, %v640
          %v648 = vmul.f32 %v595, %v640
          %v649 = vmul.f32 %v600, %v640
          %v650 = vmul.f32 %v605, %v640
          %v651 = vmul.f32 %v610, %v640
          %v652 = vmul.f32 %v615, %v640
          %v653 = vmul.f32 %v620, %v640
          %v654 = vmul.f32 %v625, %v640
          %v655 = vmul.f32 %v630, %v640
          %v656 = vmul.f32 %v635, %v640
          %657 = vset.pattern.permute.xlu0 5
          %658 = vperm.xlu0 %657, %v539
          %v659 = vpop.permute.xlu0 %658
          %661 = vset.pattern.permute.xlu0 5
          %662 = vperm.xlu0 %661, %v540
          %v663 = vpop.permute.xlu0 %662
          %665 = vset.pattern.permute.xlu0 5
          %666 = vperm.xlu0 %665, %v541
          %v667 = vpop.permute.xlu0 %666
          %669 = vset.pattern.permute.xlu0 5
          %670 = vperm.xlu0 %669, %v542
          %v671 = vpop.permute.xlu0 %670
          %673 = vset.pattern.permute.xlu0 5
          %674 = vperm.xlu0 %673, %v543
          %v675 = vpop.permute.xlu0 %674
          %677 = vset.pattern.permute.xlu0 5
          %678 = vperm.xlu0 %677, %v544
          %v679 = vpop.permute.xlu0 %678
          %681 = vset.pattern.permute.xlu0 5
          %682 = vperm.xlu0 %681, %v545
          %v683 = vpop.permute.xlu0 %682
          %685 = vset.pattern.permute.xlu0 5
          %686 = vperm.xlu0 %685, %v546
          %v687 = vpop.permute.xlu0 %686
          %689 = vset.pattern.permute.xlu0 5
          %690 = vperm.xlu0 %689, %v547
          %v691 = vpop.permute.xlu0 %690
          %693 = vset.pattern.permute.xlu0 5
          %694 = vperm.xlu0 %693, %v548
          %v695 = vpop.permute.xlu0 %694
          %697 = vset.pattern.permute.xlu0 5
          %698 = vperm.xlu0 %697, %v549
          %v699 = vpop.permute.xlu0 %698
          %701 = vset.pattern.permute.xlu0 5
          %702 = vperm.xlu0 %701, %v550
          %v703 = vpop.permute.xlu0 %702
          %705 = vset.pattern.permute.xlu0 5
          %706 = vperm.xlu0 %705, %v551
          %v707 = vpop.permute.xlu0 %706
          %709 = vset.pattern.permute.xlu0 5
          %710 = vperm.xlu0 %709, %v552
          %v711 = vpop.permute.xlu0 %710
          %713 = vset.pattern.permute.xlu0 5
          %714 = vperm.xlu0 %713, %v553
          %v715 = vpop.permute.xlu0 %714
          %717 = vset.pattern.permute.xlu0 5
          %718 = vperm.xlu0 %717, %v554
          %v719 = vpop.permute.xlu0 %718
          %v721 = vlaneseq
          %v722 = vshrl.u32 %v721, 7
          %v723 = vsub.s32 0, %v722
          %v724 = vrot.slane %v556, %v723
          %v725 = vmul.f32 %v659, %v724
          %v726 = vmul.f32 %v663, %v724
          %v727 = vmul.f32 %v667, %v724
          %v728 = vmul.f32 %v671, %v724
          %v729 = vmul.f32 %v675, %v724
          %v730 = vmul.f32 %v679, %v724
          %v731 = vmul.f32 %v683, %v724
          %v732 = vmul.f32 %v687, %v724
          %v733 = vmul.f32 %v691, %v724
          %v734 = vmul.f32 %v695, %v724
          %v735 = vmul.f32 %v699, %v724
          %v736 = vmul.f32 %v703, %v724
          %v737 = vmul.f32 %v707, %v724
          %v738 = vmul.f32 %v711, %v724
          %v739 = vmul.f32 %v715, %v724
          %v740 = vmul.f32 %v719, %v724
          %v741 = vadd.f32 %v641, %v725
          %v742 = vadd.f32 %v642, %v726
          %v743 = vadd.f32 %v643, %v727
          %v744 = vadd.f32 %v644, %v728
          %v745 = vadd.f32 %v645, %v729
          %v746 = vadd.f32 %v646, %v730
          %v747 = vadd.f32 %v647, %v731
          %v748 = vadd.f32 %v648, %v732
          %v749 = vadd.f32 %v649, %v733
          %v750 = vadd.f32 %v650, %v734
          %v751 = vadd.f32 %v651, %v735
          %v752 = vadd.f32 %v652, %v736
          %v753 = vadd.f32 %v653, %v737
          %v754 = vadd.f32 %v654, %v738
          %v755 = vadd.f32 %v655, %v739
          %v756 = vadd.f32 %v656, %v740
          %v757 = vpack.c.bf16 %v742, %v741
          %v758 = vpack.c.bf16 %v744, %v743
          %v759 = vpack.c.bf16 %v746, %v745
          %v760 = vpack.c.bf16 %v748, %v747
          %v761 = vpack.c.bf16 %v750, %v749
          %v762 = vpack.c.bf16 %v752, %v751
          %v763 = vpack.c.bf16 %v754, %v753
          %v764 = vpack.c.bf16 %v756, %v755
          %v773 = vunpack.c.l.b16 %v757
          %v774 = vunpack.c.h.b16 %v757
          %v775 = vunpack.c.l.b16 %v758
          %v776 = vunpack.c.h.b16 %v758
          %v777 = vunpack.c.l.b16 %v759
          %v778 = vunpack.c.h.b16 %v759
          %v779 = vunpack.c.l.b16 %v760
          %v780 = vunpack.c.h.b16 %v760
          %v781 = vunpack.c.l.b16 %v761
          %v782 = vunpack.c.h.b16 %v761
          %v783 = vunpack.c.l.b16 %v762
          %v784 = vunpack.c.h.b16 %v762
          %v785 = vunpack.c.l.b16 %v763
          %v786 = vunpack.c.h.b16 %v763
          %v787 = vunpack.c.l.b16 %v764
          %v788 = vunpack.c.h.b16 %v764
          %v789 = vpack.c.b16 %v773, %v773
          %v790 = vpack.c.b16 %v774, %v774
          %v791 = vpack.c.b16 %v775, %v775
          %v792 = vpack.c.b16 %v776, %v776
          %v793 = vpack.c.b16 %v777, %v777
          %v794 = vpack.c.b16 %v778, %v778
          %v795 = vpack.c.b16 %v779, %v779
          %v796 = vpack.c.b16 %v780, %v780
          %v797 = vpack.c.b16 %v781, %v781
          %v798 = vpack.c.b16 %v782, %v782
          %v799 = vpack.c.b16 %v783, %v783
          %v800 = vpack.c.b16 %v784, %v784
          %v801 = vpack.c.b16 %v785, %v785
          %v802 = vpack.c.b16 %v786, %v786
          %v803 = vpack.c.b16 %v787, %v787
          %v804 = vpack.c.b16 %v788, %v788
          %821 = vst [vmem:[#allocation2 + $0x4] sm:$0xf] %v789
          %822 = vst [vmem:[#allocation2 + $0x14] sm:$0xf] %v790
          %823 = vst [vmem:[#allocation2 + $0x24] sm:$0xf] %v791
          %824 = vst [vmem:[#allocation2 + $0x34] sm:$0xf] %v792
          %825 = vst [vmem:[#allocation2 + $0x44] sm:$0xf] %v793
          %826 = vst [vmem:[#allocation2 + $0x54] sm:$0xf] %v794
          %827 = vst [vmem:[#allocation2 + $0x64] sm:$0xf] %v795
          %828 = vst [vmem:[#allocation2 + $0x74] sm:$0xf] %v796
          %829 = vst [vmem:[#allocation2 + $0x84] sm:$0xf] %v797
          %830 = vst [vmem:[#allocation2 + $0x94] sm:$0xf] %v798
          %831 = vst [vmem:[#allocation2 + $0xa4] sm:$0xf] %v799
          %832 = vst [vmem:[#allocation2 + $0xb4] sm:$0xf] %v800
          %833 = vst [vmem:[#allocation2 + $0xc4] sm:$0xf] %v801
          %834 = vst [vmem:[#allocation2 + $0xd4] sm:$0xf] %v802
          %835 = vst [vmem:[#allocation2 + $0xe4] sm:$0xf] %v803
          %836 = vst [vmem:[#allocation2 + $0xf4] sm:$0xf] %v804
          %v837 = vld [vmem:[%s226] sm:$0xff]
          %v838 = vld [vmem:[%s226 + $0x8] sm:$0xff]
          %v839 = vld [vmem:[%s226 + $0x10] sm:$0xff]
          %v840 = vld [vmem:[%s226 + $0x18] sm:$0xff]
          %v841 = vld [vmem:[%s226 + $0x20] sm:$0xff]
          %v842 = vld [vmem:[%s226 + $0x28] sm:$0xff]
          %v843 = vld [vmem:[%s226 + $0x30] sm:$0xff]
          %v844 = vld [vmem:[%s226 + $0x38] sm:$0xff]
          %v845 = vld [vmem:[%s226 + $0x40] sm:$0xff]
          %v846 = vld [vmem:[%s226 + $0x48] sm:$0xff]
          %v847 = vld [vmem:[%s226 + $0x50] sm:$0xff]
          %v848 = vld [vmem:[%s226 + $0x58] sm:$0xff]
          %v849 = vld [vmem:[%s226 + $0x60] sm:$0xff]
          %v850 = vld [vmem:[%s226 + $0x68] sm:$0xff]
          %v851 = vld [vmem:[%s226 + $0x70] sm:$0xff]
          %v852 = vld [vmem:[%s226 + $0x78] sm:$0xff]
          %v853 = vld [vmem:[%s2 + $0x2] sm:$0x1]
          %v854 = vld [vmem:[%s3 + $0x2] sm:$0x1]
          %856 = vset.pattern.permute.xlu0 2
          %857 = vperm.xlu0 %856, %v837
          %v858 = vpop.permute.xlu0 %857
          %861 = vset.pattern.permute.xlu0 2
          %862 = vperm.xlu0 %861, %v838
          %v863 = vpop.permute.xlu0 %862
          %866 = vset.pattern.permute.xlu0 2
          %867 = vperm.xlu0 %866, %v839
          %v868 = vpop.permute.xlu0 %867
          %871 = vset.pattern.permute.xlu0 2
          %872 = vperm.xlu0 %871, %v840
          %v873 = vpop.permute.xlu0 %872
          %876 = vset.pattern.permute.xlu0 2
          %877 = vperm.xlu0 %876, %v841
          %v878 = vpop.permute.xlu0 %877
          %881 = vset.pattern.permute.xlu0 2
          %882 = vperm.xlu0 %881, %v842
          %v883 = vpop.permute.xlu0 %882
          %886 = vset.pattern.permute.xlu0 2
          %887 = vperm.xlu0 %886, %v843
          %v888 = vpop.permute.xlu0 %887
          %891 = vset.pattern.permute.xlu0 2
          %892 = vperm.xlu0 %891, %v844
          %v893 = vpop.permute.xlu0 %892
          %896 = vset.pattern.permute.xlu0 2
          %897 = vperm.xlu0 %896, %v845
          %v898 = vpop.permute.xlu0 %897
          %901 = vset.pattern.permute.xlu0 2
          %902 = vperm.xlu0 %901, %v846
          %v903 = vpop.permute.xlu0 %902
          %906 = vset.pattern.permute.xlu0 2
          %907 = vperm.xlu0 %906, %v847
          %v908 = vpop.permute.xlu0 %907
          %911 = vset.pattern.permute.xlu0 2
          %912 = vperm.xlu0 %911, %v848
          %v913 = vpop.permute.xlu0 %912
          %916 = vset.pattern.permute.xlu0 2
          %917 = vperm.xlu0 %916, %v849
          %v918 = vpop.permute.xlu0 %917
          %921 = vset.pattern.permute.xlu0 2
          %922 = vperm.xlu0 %921, %v850
          %v923 = vpop.permute.xlu0 %922
          %926 = vset.pattern.permute.xlu0 2
          %927 = vperm.xlu0 %926, %v851
          %v928 = vpop.permute.xlu0 %927
          %931 = vset.pattern.permute.xlu0 2
          %932 = vperm.xlu0 %931, %v852
          %v933 = vpop.permute.xlu0 %932
          %v935 = vlaneseq
          %v936 = vshrl.u32 %v935, 7
          %v937 = vsub.s32 0, %v936
          %v938 = vrot.slane %v853, %v937
          %v939 = vmul.f32 %v858, %v938
          %v940 = vmul.f32 %v863, %v938
          %v941 = vmul.f32 %v868, %v938
          %v942 = vmul.f32 %v873, %v938
          %v943 = vmul.f32 %v878, %v938
          %v944 = vmul.f32 %v883, %v938
          %v945 = vmul.f32 %v888, %v938
          %v946 = vmul.f32 %v893, %v938
          %v947 = vmul.f32 %v898, %v938
          %v948 = vmul.f32 %v903, %v938
          %v949 = vmul.f32 %v908, %v938
          %v950 = vmul.f32 %v913, %v938
          %v951 = vmul.f32 %v918, %v938
          %v952 = vmul.f32 %v923, %v938
          %v953 = vmul.f32 %v928, %v938
          %v954 = vmul.f32 %v933, %v938
          %955 = vset.pattern.permute.xlu0 6
          %956 = vperm.xlu0 %955, %v837
          %v957 = vpop.permute.xlu0 %956
          %959 = vset.pattern.permute.xlu0 6
          %960 = vperm.xlu0 %959, %v838
          %v961 = vpop.permute.xlu0 %960
          %963 = vset.pattern.permute.xlu0 6
          %964 = vperm.xlu0 %963, %v839
          %v965 = vpop.permute.xlu0 %964
          %967 = vset.pattern.permute.xlu0 6
          %968 = vperm.xlu0 %967, %v840
          %v969 = vpop.permute.xlu0 %968
          %971 = vset.pattern.permute.xlu0 6
          %972 = vperm.xlu0 %971, %v841
          %v973 = vpop.permute.xlu0 %972
          %975 = vset.pattern.permute.xlu0 6
          %976 = vperm.xlu0 %975, %v842
          %v977 = vpop.permute.xlu0 %976
          %979 = vset.pattern.permute.xlu0 6
          %980 = vperm.xlu0 %979, %v843
          %v981 = vpop.permute.xlu0 %980
          %983 = vset.pattern.permute.xlu0 6
          %984 = vperm.xlu0 %983, %v844
          %v985 = vpop.permute.xlu0 %984
          %987 = vset.pattern.permute.xlu0 6
          %988 = vperm.xlu0 %987, %v845
          %v989 = vpop.permute.xlu0 %988
          %991 = vset.pattern.permute.xlu0 6
          %992 = vperm.xlu0 %991, %v846
          %v993 = vpop.permute.xlu0 %992
          %995 = vset.pattern.permute.xlu0 6
          %996 = vperm.xlu0 %995, %v847
          %v997 = vpop.permute.xlu0 %996
          %999 = vset.pattern.permute.xlu0 6
          %1000 = vperm.xlu0 %999, %v848
          %v1001 = vpop.permute.xlu0 %1000
          %1003 = vset.pattern.permute.xlu0 6
          %1004 = vperm.xlu0 %1003, %v849
          %v1005 = vpop.permute.xlu0 %1004
          %1007 = vset.pattern.permute.xlu0 6
          %1008 = vperm.xlu0 %1007, %v850
          %v1009 = vpop.permute.xlu0 %1008
          %1011 = vset.pattern.permute.xlu0 6
          %1012 = vperm.xlu0 %1011, %v851
          %v1013 = vpop.permute.xlu0 %1012
          %1015 = vset.pattern.permute.xlu0 6
          %1016 = vperm.xlu0 %1015, %v852
          %v1017 = vpop.permute.xlu0 %1016
          %v1019 = vlaneseq
          %v1020 = vshrl.u32 %v1019, 7
          %v1021 = vsub.s32 0, %v1020
          %v1022 = vrot.slane %v854, %v1021
          %v1023 = vmul.f32 %v957, %v1022
          %v1024 = vmul.f32 %v961, %v1022
          %v1025 = vmul.f32 %v965, %v1022
          %v1026 = vmul.f32 %v969, %v1022
          %v1027 = vmul.f32 %v973, %v1022
          %v1028 = vmul.f32 %v977, %v1022
          %v1029 = vmul.f32 %v981, %v1022
          %v1030 = vmul.f32 %v985, %v1022
          %v1031 = vmul.f32 %v989, %v1022
          %v1032 = vmul.f32 %v993, %v1022
          %v1033 = vmul.f32 %v997, %v1022
          %v1034 = vmul.f32 %v1001, %v1022
          %v1035 = vmul.f32 %v1005, %v1022
          %v1036 = vmul.f32 %v1009, %v1022
          %v1037 = vmul.f32 %v1013, %v1022
          %v1038 = vmul.f32 %v1017, %v1022
          %v1039 = vadd.f32 %v939, %v1023
          %v1040 = vadd.f32 %v940, %v1024
          %v1041 = vadd.f32 %v941, %v1025
          %v1042 = vadd.f32 %v942, %v1026
          %v1043 = vadd.f32 %v943, %v1027
          %v1044 = vadd.f32 %v944, %v1028
          %v1045 = vadd.f32 %v945, %v1029
          %v1046 = vadd.f32 %v946, %v1030
          %v1047 = vadd.f32 %v947, %v1031
          %v1048 = vadd.f32 %v948, %v1032
          %v1049 = vadd.f32 %v949, %v1033
          %v1050 = vadd.f32 %v950, %v1034
          %v1051 = vadd.f32 %v951, %v1035
          %v1052 = vadd.f32 %v952, %v1036
          %v1053 = vadd.f32 %v953, %v1037
          %v1054 = vadd.f32 %v954, %v1038
          %v1055 = vpack.c.bf16 %v1040, %v1039
          %v1056 = vpack.c.bf16 %v1042, %v1041
          %v1057 = vpack.c.bf16 %v1044, %v1043
          %v1058 = vpack.c.bf16 %v1046, %v1045
          %v1059 = vpack.c.bf16 %v1048, %v1047
          %v1060 = vpack.c.bf16 %v1050, %v1049
          %v1061 = vpack.c.bf16 %v1052, %v1051
          %v1062 = vpack.c.bf16 %v1054, %v1053
          %v1071 = vunpack.c.l.b16 %v1055
          %v1072 = vunpack.c.h.b16 %v1055
          %v1073 = vunpack.c.l.b16 %v1056
          %v1074 = vunpack.c.h.b16 %v1056
          %v1075 = vunpack.c.l.b16 %v1057
          %v1076 = vunpack.c.h.b16 %v1057
          %v1077 = vunpack.c.l.b16 %v1058
          %v1078 = vunpack.c.h.b16 %v1058
          %v1079 = vunpack.c.l.b16 %v1059
          %v1080 = vunpack.c.h.b16 %v1059
          %v1081 = vunpack.c.l.b16 %v1060
          %v1082 = vunpack.c.h.b16 %v1060
          %v1083 = vunpack.c.l.b16 %v1061
          %v1084 = vunpack.c.h.b16 %v1061
          %v1085 = vunpack.c.l.b16 %v1062
          %v1086 = vunpack.c.h.b16 %v1062
          %v1087 = vpack.c.b16 %v1071, %v1071
          %v1088 = vpack.c.b16 %v1072, %v1072
          %v1089 = vpack.c.b16 %v1073, %v1073
          %v1090 = vpack.c.b16 %v1074, %v1074
          %v1091 = vpack.c.b16 %v1075, %v1075
          %v1092 = vpack.c.b16 %v1076, %v1076
          %v1093 = vpack.c.b16 %v1077, %v1077
          %v1094 = vpack.c.b16 %v1078, %v1078
          %v1095 = vpack.c.b16 %v1079, %v1079
          %v1096 = vpack.c.b16 %v1080, %v1080
          %v1097 = vpack.c.b16 %v1081, %v1081
          %v1098 = vpack.c.b16 %v1082, %v1082
          %v1099 = vpack.c.b16 %v1083, %v1083
          %v1100 = vpack.c.b16 %v1084, %v1084
          %v1101 = vpack.c.b16 %v1085, %v1085
          %v1102 = vpack.c.b16 %v1086, %v1086
          %1119 = vst [vmem:[#allocation2 + $0x8] sm:$0xf] %v1087
          %1120 = vst [vmem:[#allocation2 + $0x18] sm:$0xf] %v1088
          %1121 = vst [vmem:[#allocation2 + $0x28] sm:$0xf] %v1089
          %1122 = vst [vmem:[#allocation2 + $0x38] sm:$0xf] %v1090
          %1123 = vst [vmem:[#allocation2 + $0x48] sm:$0xf] %v1091
          %1124 = vst [vmem:[#allocation2 + $0x58] sm:$0xf] %v1092
          %1125 = vst [vmem:[#allocation2 + $0x68] sm:$0xf] %v1093
          %1126 = vst [vmem:[#allocation2 + $0x78] sm:$0xf] %v1094
          %1127 = vst [vmem:[#allocation2 + $0x88] sm:$0xf] %v1095
          %1128 = vst [vmem:[#allocation2 + $0x98] sm:$0xf] %v1096
          %1129 = vst [vmem:[#allocation2 + $0xa8] sm:$0xf] %v1097
          %1130 = vst [vmem:[#allocation2 + $0xb8] sm:$0xf] %v1098
          %1131 = vst [vmem:[#allocation2 + $0xc8] sm:$0xf] %v1099
          %1132 = vst [vmem:[#allocation2 + $0xd8] sm:$0xf] %v1100
          %1133 = vst [vmem:[#allocation2 + $0xe8] sm:$0xf] %v1101
          %1134 = vst [vmem:[#allocation2 + $0xf8] sm:$0xf] %v1102
          %v1135 = vld [vmem:[%s226] sm:$0xff]
          %v1136 = vld [vmem:[%s226 + $0x8] sm:$0xff]
          %v1137 = vld [vmem:[%s226 + $0x10] sm:$0xff]
          %v1138 = vld [vmem:[%s226 + $0x18] sm:$0xff]
          %v1139 = vld [vmem:[%s226 + $0x20] sm:$0xff]
          %v1140 = vld [vmem:[%s226 + $0x28] sm:$0xff]
          %v1141 = vld [vmem:[%s226 + $0x30] sm:$0xff]
          %v1142 = vld [vmem:[%s226 + $0x38] sm:$0xff]
          %v1143 = vld [vmem:[%s226 + $0x40] sm:$0xff]
          %v1144 = vld [vmem:[%s226 + $0x48] sm:$0xff]
          %v1145 = vld [vmem:[%s226 + $0x50] sm:$0xff]
          %v1146 = vld [vmem:[%s226 + $0x58] sm:$0xff]
          %v1147 = vld [vmem:[%s226 + $0x60] sm:$0xff]
          %v1148 = vld [vmem:[%s226 + $0x68] sm:$0xff]
          %v1149 = vld [vmem:[%s226 + $0x70] sm:$0xff]
          %v1150 = vld [vmem:[%s226 + $0x78] sm:$0xff]
          %v1151 = vld [vmem:[%s2 + $0x3] sm:$0x1]
          %v1152 = vld [vmem:[%s3 + $0x3] sm:$0x1]
          %1154 = vset.pattern.permute.xlu0 3
          %1155 = vperm.xlu0 %1154, %v1135
          %v1156 = vpop.permute.xlu0 %1155
          %1159 = vset.pattern.permute.xlu0 3
          %1160 = vperm.xlu0 %1159, %v1136
          %v1161 = vpop.permute.xlu0 %1160
          %1164 = vset.pattern.permute.xlu0 3
          %1165 = vperm.xlu0 %1164, %v1137
          %v1166 = vpop.permute.xlu0 %1165
          %1169 = vset.pattern.permute.xlu0 3
          %1170 = vperm.xlu0 %1169, %v1138
          %v1171 = vpop.permute.xlu0 %1170
          %1174 = vset.pattern.permute.xlu0 3
          %1175 = vperm.xlu0 %1174, %v1139
          %v1176 = vpop.permute.xlu0 %1175
          %1179 = vset.pattern.permute.xlu0 3
          %1180 = vperm.xlu0 %1179, %v1140
          %v1181 = vpop.permute.xlu0 %1180
          %1184 = vset.pattern.permute.xlu0 3
          %1185 = vperm.xlu0 %1184, %v1141
          %v1186 = vpop.permute.xlu0 %1185
          %1189 = vset.pattern.permute.xlu0 3
          %1190 = vperm.xlu0 %1189, %v1142
          %v1191 = vpop.permute.xlu0 %1190
          %1194 = vset.pattern.permute.xlu0 3
          %1195 = vperm.xlu0 %1194, %v1143
          %v1196 = vpop.permute.xlu0 %1195
          %1199 = vset.pattern.permute.xlu0 3
          %1200 = vperm.xlu0 %1199, %v1144
          %v1201 = vpop.permute.xlu0 %1200
          %1204 = vset.pattern.permute.xlu0 3
          %1205 = vperm.xlu0 %1204, %v1145
          %v1206 = vpop.permute.xlu0 %1205
          %1209 = vset.pattern.permute.xlu0 3
          %1210 = vperm.xlu0 %1209, %v1146
          %v1211 = vpop.permute.xlu0 %1210
          %1214 = vset.pattern.permute.xlu0 3
          %1215 = vperm.xlu0 %1214, %v1147
          %v1216 = vpop.permute.xlu0 %1215
          %1219 = vset.pattern.permute.xlu0 3
          %1220 = vperm.xlu0 %1219, %v1148
          %v1221 = vpop.permute.xlu0 %1220
          %1224 = vset.pattern.permute.xlu0 3
          %1225 = vperm.xlu0 %1224, %v1149
          %v1226 = vpop.permute.xlu0 %1225
          %1229 = vset.pattern.permute.xlu0 3
          %1230 = vperm.xlu0 %1229, %v1150
          %v1231 = vpop.permute.xlu0 %1230
          %v1233 = vlaneseq
          %v1234 = vshrl.u32 %v1233, 7
          %v1235 = vsub.s32 0, %v1234
          %v1236 = vrot.slane %v1151, %v1235
          %v1237 = vmul.f32 %v1156, %v1236
          %v1238 = vmul.f32 %v1161, %v1236
          %v1239 = vmul.f32 %v1166, %v1236
          %v1240 = vmul.f32 %v1171, %v1236
          %v1241 = vmul.f32 %v1176, %v1236
          %v1242 = vmul.f32 %v1181, %v1236
          %v1243 = vmul.f32 %v1186, %v1236
          %v1244 = vmul.f32 %v1191, %v1236
          %v1245 = vmul.f32 %v1196, %v1236
          %v1246 = vmul.f32 %v1201, %v1236
          %v1247 = vmul.f32 %v1206, %v1236
          %v1248 = vmul.f32 %v1211, %v1236
          %v1249 = vmul.f32 %v1216, %v1236
          %v1250 = vmul.f32 %v1221, %v1236
          %v1251 = vmul.f32 %v1226, %v1236
          %v1252 = vmul.f32 %v1231, %v1236
          %1253 = vset.pattern.permute.xlu0 7
          %1254 = vperm.xlu0 %1253, %v1135
          %v1255 = vpop.permute.xlu0 %1254
          %1257 = vset.pattern.permute.xlu0 7
          %1258 = vperm.xlu0 %1257, %v1136
          %v1259 = vpop.permute.xlu0 %1258
          %1261 = vset.pattern.permute.xlu0 7
          %1262 = vperm.xlu0 %1261, %v1137
          %v1263 = vpop.permute.xlu0 %1262
          %1265 = vset.pattern.permute.xlu0 7
          %1266 = vperm.xlu0 %1265, %v1138
          %v1267 = vpop.permute.xlu0 %1266
          %1269 = vset.pattern.permute.xlu0 7
          %1270 = vperm.xlu0 %1269, %v1139
          %v1271 = vpop.permute.xlu0 %1270
          %1273 = vset.pattern.permute.xlu0 7
          %1274 = vperm.xlu0 %1273, %v1140
          %v1275 = vpop.permute.xlu0 %1274
          %1277 = vset.pattern.permute.xlu0 7
          %1278 = vperm.xlu0 %1277, %v1141
          %v1279 = vpop.permute.xlu0 %1278
          %1281 = vset.pattern.permute.xlu0 7
          %1282 = vperm.xlu0 %1281, %v1142
          %v1283 = vpop.permute.xlu0 %1282
          %1285 = vset.pattern.permute.xlu0 7
          %1286 = vperm.xlu0 %1285, %v1143
          %v1287 = vpop.permute.xlu0 %1286
          %1289 = vset.pattern.permute.xlu0 7
          %1290 = vperm.xlu0 %1289, %v1144
          %v1291 = vpop.permute.xlu0 %1290
          %1293 = vset.pattern.permute.xlu0 7
          %1294 = vperm.xlu0 %1293, %v1145
          %v1295 = vpop.permute.xlu0 %1294
          %1297 = vset.pattern.permute.xlu0 7
          %1298 = vperm.xlu0 %1297, %v1146
          %v1299 = vpop.permute.xlu0 %1298
          %1301 = vset.pattern.permute.xlu0 7
          %1302 = vperm.xlu0 %1301, %v1147
          %v1303 = vpop.permute.xlu0 %1302
          %1305 = vset.pattern.permute.xlu0 7
          %1306 = vperm.xlu0 %1305, %v1148
          %v1307 = vpop.permute.xlu0 %1306
          %1309 = vset.pattern.permute.xlu0 7
          %1310 = vperm.xlu0 %1309, %v1149
          %v1311 = vpop.permute.xlu0 %1310
          %1313 = vset.pattern.permute.xlu0 7
          %1314 = vperm.xlu0 %1313, %v1150
          %v1315 = vpop.permute.xlu0 %1314
          %v1317 = vlaneseq
          %v1318 = vshrl.u32 %v1317, 7
          %v1319 = vsub.s32 0, %v1318
          %v1320 = vrot.slane %v1152, %v1319
          %v1321 = vmul.f32 %v1255, %v1320
          %v1322 = vmul.f32 %v1259, %v1320
          %v1323 = vmul.f32 %v1263, %v1320
          %v1324 = vmul.f32 %v1267, %v1320
          %v1325 = vmul.f32 %v1271, %v1320
          %v1326 = vmul.f32 %v1275, %v1320
          %v1327 = vmul.f32 %v1279, %v1320
          %v1328 = vmul.f32 %v1283, %v1320
          %v1329 = vmul.f32 %v1287, %v1320
          %v1330 = vmul.f32 %v1291, %v1320
          %v1331 = vmul.f32 %v1295, %v1320
          %v1332 = vmul.f32 %v1299, %v1320
          %v1333 = vmul.f32 %v1303, %v1320
          %v1334 = vmul.f32 %v1307, %v1320
          %v1335 = vmul.f32 %v1311, %v1320
          %v1336 = vmul.f32 %v1315, %v1320
          %v1337 = vadd.f32 %v1237, %v1321
          %v1338 = vadd.f32 %v1238, %v1322
          %v1339 = vadd.f32 %v1239, %v1323
          %v1340 = vadd.f32 %v1240, %v1324
          %v1341 = vadd.f32 %v1241, %v1325
          %v1342 = vadd.f32 %v1242, %v1326
          %v1343 = vadd.f32 %v1243, %v1327
          %v1344 = vadd.f32 %v1244, %v1328
          %v1345 = vadd.f32 %v1245, %v1329
          %v1346 = vadd.f32 %v1246, %v1330
          %v1347 = vadd.f32 %v1247, %v1331
          %v1348 = vadd.f32 %v1248, %v1332
          %v1349 = vadd.f32 %v1249, %v1333
          %v1350 = vadd.f32 %v1250, %v1334
          %v1351 = vadd.f32 %v1251, %v1335
          %v1352 = vadd.f32 %v1252, %v1336
          %v1353 = vpack.c.bf16 %v1338, %v1337
          %v1354 = vpack.c.bf16 %v1340, %v1339
          %v1355 = vpack.c.bf16 %v1342, %v1341
          %v1356 = vpack.c.bf16 %v1344, %v1343
          %v1357 = vpack.c.bf16 %v1346, %v1345
          %v1358 = vpack.c.bf16 %v1348, %v1347
          %v1359 = vpack.c.bf16 %v1350, %v1349
          %v1360 = vpack.c.bf16 %v1352, %v1351
          %v1369 = vunpack.c.l.b16 %v1353
          %v1370 = vunpack.c.h.b16 %v1353
          %v1371 = vunpack.c.l.b16 %v1354
          %v1372 = vunpack.c.h.b16 %v1354
          %v1373 = vunpack.c.l.b16 %v1355
          %v1374 = vunpack.c.h.b16 %v1355
          %v1375 = vunpack.c.l.b16 %v1356
          %v1376 = vunpack.c.h.b16 %v1356
          %v1377 = vunpack.c.l.b16 %v1357
          %v1378 = vunpack.c.h.b16 %v1357
          %v1379 = vunpack.c.l.b16 %v1358
          %v1380 = vunpack.c.h.b16 %v1358
          %v1381 = vunpack.c.l.b16 %v1359
          %v1382 = vunpack.c.h.b16 %v1359
          %v1383 = vunpack.c.l.b16 %v1360
          %v1384 = vunpack.c.h.b16 %v1360
          %v1385 = vpack.c.b16 %v1369, %v1369
          %v1386 = vpack.c.b16 %v1370, %v1370
          %v1387 = vpack.c.b16 %v1371, %v1371
          %v1388 = vpack.c.b16 %v1372, %v1372
          %v1389 = vpack.c.b16 %v1373, %v1373
          %v1390 = vpack.c.b16 %v1374, %v1374
          %v1391 = vpack.c.b16 %v1375, %v1375
          %v1392 = vpack.c.b16 %v1376, %v1376
          %v1393 = vpack.c.b16 %v1377, %v1377
          %v1394 = vpack.c.b16 %v1378, %v1378
          %v1395 = vpack.c.b16 %v1379, %v1379
          %v1396 = vpack.c.b16 %v1380, %v1380
          %v1397 = vpack.c.b16 %v1381, %v1381
          %v1398 = vpack.c.b16 %v1382, %v1382
          %v1399 = vpack.c.b16 %v1383, %v1383
          %v1400 = vpack.c.b16 %v1384, %v1384
          %1417 = vst [vmem:[#allocation2 + $0xc] sm:$0xf] %v1385
          %1418 = vst [vmem:[#allocation2 + $0x1c] sm:$0xf] %v1386
          %1419 = vst [vmem:[#allocation2 + $0x2c] sm:$0xf] %v1387
          %1420 = vst [vmem:[#allocation2 + $0x3c] sm:$0xf] %v1388
          %1421 = vst [vmem:[#allocation2 + $0x4c] sm:$0xf] %v1389
          %1422 = vst [vmem:[#allocation2 + $0x5c] sm:$0xf] %v1390
          %1423 = vst [vmem:[#allocation2 + $0x6c] sm:$0xf] %v1391
          %1424 = vst [vmem:[#allocation2 + $0x7c] sm:$0xf] %v1392
          %1425 = vst [vmem:[#allocation2 + $0x8c] sm:$0xf] %v1393
          %1426 = vst [vmem:[#allocation2 + $0x9c] sm:$0xf] %v1394
          %1427 = vst [vmem:[#allocation2 + $0xac] sm:$0xf] %v1395
          %1428 = vst [vmem:[#allocation2 + $0xbc] sm:$0xf] %v1396
          %1429 = vst [vmem:[#allocation2 + $0xcc] sm:$0xf] %v1397
          %1430 = vst [vmem:[#allocation2 + $0xdc] sm:$0xf] %v1398
          %1431 = vst [vmem:[#allocation2 + $0xec] sm:$0xf] %v1399
          %1432 = vst [vmem:[#allocation2 + $0xfc] sm:$0xf] %v1400
        $region40: #{tpu_custom_call.1} parent=35 // pred_fallthru
          _
        %v1433 = vld [vmem:[%s232] sm:$0xff]
        %v1434 = vld [vmem:[%s232 + $0x8] sm:$0xff]
        %v1435 = vld [vmem:[%s232 + $0x10] sm:$0xff]
        %v1436 = vld [vmem:[%s232 + $0x18] sm:$0xff]
        %v1437 = vld [vmem:[%s232 + $0x20] sm:$0xff]
        %v1438 = vld [vmem:[%s232 + $0x28] sm:$0xff]
        %v1439 = vld [vmem:[%s232 + $0x30] sm:$0xff]
        %v1440 = vld [vmem:[%s232 + $0x38] sm:$0xff]
        %v1441 = vld [vmem:[%s232 + $0x40] sm:$0xff]
        %v1442 = vld [vmem:[%s232 + $0x48] sm:$0xff]
        %v1443 = vld [vmem:[%s232 + $0x50] sm:$0xff]
        %v1444 = vld [vmem:[%s232 + $0x58] sm:$0xff]
        %v1445 = vld [vmem:[%s232 + $0x60] sm:$0xff]
        %v1446 = vld [vmem:[%s232 + $0x68] sm:$0xff]
        %v1447 = vld [vmem:[%s232 + $0x70] sm:$0xff]
        %v1448 = vld [vmem:[%s232 + $0x78] sm:$0xff]
        %v1449 = vld [vmem:[%s232 + $0x80] sm:$0xff]
        %v1450 = vld [vmem:[%s232 + $0x88] sm:$0xff]
        %v1451 = vld [vmem:[%s232 + $0x90] sm:$0xff]
        %v1452 = vld [vmem:[%s232 + $0x98] sm:$0xff]
        %v1453 = vld [vmem:[%s232 + $0xa0] sm:$0xff]
        %v1454 = vld [vmem:[%s232 + $0xa8] sm:$0xff]
        %v1455 = vld [vmem:[%s232 + $0xb0] sm:$0xff]
        %v1456 = vld [vmem:[%s232 + $0xb8] sm:$0xff]
        %v1457 = vld [vmem:[%s232 + $0xc0] sm:$0xff]
        %v1458 = vld [vmem:[%s232 + $0xc8] sm:$0xff]
        %v1459 = vld [vmem:[%s232 + $0xd0] sm:$0xff]
        %v1460 = vld [vmem:[%s232 + $0xd8] sm:$0xff]
        %v1461 = vld [vmem:[%s232 + $0xe0] sm:$0xff]
        %v1462 = vld [vmem:[%s232 + $0xe8] sm:$0xff]
        %v1463 = vld [vmem:[%s232 + $0xf0] sm:$0xff]
        %v1464 = vld [vmem:[%s232 + $0xf8] sm:$0xff]
        %v1465 = vld [vmem:[%s232 + $0x100] sm:$0xff]
        %v1466 = vld [vmem:[%s232 + $0x108] sm:$0xff]
        %v1467 = vld [vmem:[%s232 + $0x110] sm:$0xff]
        %v1468 = vld [vmem:[%s232 + $0x118] sm:$0xff]
        %v1469 = vld [vmem:[%s232 + $0x120] sm:$0xff]
        %v1470 = vld [vmem:[%s232 + $0x128] sm:$0xff]
        %v1471 = vld [vmem:[%s232 + $0x130] sm:$0xff]
        %v1472 = vld [vmem:[%s232 + $0x138] sm:$0xff]
        %v1473 = vld [vmem:[%s232 + $0x140] sm:$0xff]
        %v1474 = vld [vmem:[%s232 + $0x148] sm:$0xff]
        %v1475 = vld [vmem:[%s232 + $0x150] sm:$0xff]
        %v1476 = vld [vmem:[%s232 + $0x158] sm:$0xff]
        %v1477 = vld [vmem:[%s232 + $0x160] sm:$0xff]
        %v1478 = vld [vmem:[%s232 + $0x168] sm:$0xff]
        %v1479 = vld [vmem:[%s232 + $0x170] sm:$0xff]
        %v1480 = vld [vmem:[%s232 + $0x178] sm:$0xff]
        %v1481 = vld [vmem:[%s2] sm:$0x1]
        %v1482 = vld [vmem:[%s3] sm:$0x1]
        %1484 = vset.pattern.permute.xlu0 0
        %1485 = vperm.xlu0 %1484, %v1433
        %v1486 = vpop.permute.xlu0 %1485
        %1489 = vset.pattern.permute.xlu0 0
        %1490 = vperm.xlu0 %1489, %v1434
        %v1491 = vpop.permute.xlu0 %1490
        %1494 = vset.pattern.permute.xlu0 0
        %1495 = vperm.xlu0 %1494, %v1435
        %v1496 = vpop.permute.xlu0 %1495
        %1499 = vset.pattern.permute.xlu0 0
        %1500 = vperm.xlu0 %1499, %v1436
        %v1501 = vpop.permute.xlu0 %1500
        %1504 = vset.pattern.permute.xlu0 0
        %1505 = vperm.xlu0 %1504, %v1437
        %v1506 = vpop.permute.xlu0 %1505
        %1509 = vset.pattern.permute.xlu0 0
        %1510 = vperm.xlu0 %1509, %v1438
        %v1511 = vpop.permute.xlu0 %1510
        %1514 = vset.pattern.permute.xlu0 0
        %1515 = vperm.xlu0 %1514, %v1439
        %v1516 = vpop.permute.xlu0 %1515
        %1519 = vset.pattern.permute.xlu0 0
        %1520 = vperm.xlu0 %1519, %v1440
        %v1521 = vpop.permute.xlu0 %1520
        %1524 = vset.pattern.permute.xlu0 0
        %1525 = vperm.xlu0 %1524, %v1441
        %v1526 = vpop.permute.xlu0 %1525
        %1529 = vset.pattern.permute.xlu0 0
        %1530 = vperm.xlu0 %1529, %v1442
        %v1531 = vpop.permute.xlu0 %1530
        %1534 = vset.pattern.permute.xlu0 0
        %1535 = vperm.xlu0 %1534, %v1443
        %v1536 = vpop.permute.xlu0 %1535
        %1539 = vset.pattern.permute.xlu0 0
        %1540 = vperm.xlu0 %1539, %v1444
        %v1541 = vpop.permute.xlu0 %1540
        %1544 = vset.pattern.permute.xlu0 0
        %1545 = vperm.xlu0 %1544, %v1445
        %v1546 = vpop.permute.xlu0 %1545
        %1549 = vset.pattern.permute.xlu0 0
        %1550 = vperm.xlu0 %1549, %v1446
        %v1551 = vpop.permute.xlu0 %1550
        %1554 = vset.pattern.permute.xlu0 0
        %1555 = vperm.xlu0 %1554, %v1447
        %v1556 = vpop.permute.xlu0 %1555
        %1559 = vset.pattern.permute.xlu0 0
        %1560 = vperm.xlu0 %1559, %v1448
        %v1561 = vpop.permute.xlu0 %1560
        %1564 = vset.pattern.permute.xlu0 0
        %1565 = vperm.xlu0 %1564, %v1449
        %v1566 = vpop.permute.xlu0 %1565
        %1569 = vset.pattern.permute.xlu0 0
        %1570 = vperm.xlu0 %1569, %v1450
        %v1571 = vpop.permute.xlu0 %1570
        %1574 = vset.pattern.permute.xlu0 0
        %1575 = vperm.xlu0 %1574, %v1451
        %v1576 = vpop.permute.xlu0 %1575
        %1579 = vset.pattern.permute.xlu0 0
        %1580 = vperm.xlu0 %1579, %v1452
        %v1581 = vpop.permute.xlu0 %1580
        %1584 = vset.pattern.permute.xlu0 0
        %1585 = vperm.xlu0 %1584, %v1453
        %v1586 = vpop.permute.xlu0 %1585
        %1589 = vset.pattern.permute.xlu0 0
        %1590 = vperm.xlu0 %1589, %v1454
        %v1591 = vpop.permute.xlu0 %1590
        %1594 = vset.pattern.permute.xlu0 0
        %1595 = vperm.xlu0 %1594, %v1455
        %v1596 = vpop.permute.xlu0 %1595
        %1599 = vset.pattern.permute.xlu0 0
        %1600 = vperm.xlu0 %1599, %v1456
        %v1601 = vpop.permute.xlu0 %1600
        %1604 = vset.pattern.permute.xlu0 0
        %1605 = vperm.xlu0 %1604, %v1457
        %v1606 = vpop.permute.xlu0 %1605
        %1609 = vset.pattern.permute.xlu0 0
        %1610 = vperm.xlu0 %1609, %v1458
        %v1611 = vpop.permute.xlu0 %1610
        %1614 = vset.pattern.permute.xlu0 0
        %1615 = vperm.xlu0 %1614, %v1459
        %v1616 = vpop.permute.xlu0 %1615
        %1619 = vset.pattern.permute.xlu0 0
        %1620 = vperm.xlu0 %1619, %v1460
        %v1621 = vpop.permute.xlu0 %1620
        %1624 = vset.pattern.permute.xlu0 0
        %1625 = vperm.xlu0 %1624, %v1461
        %v1626 = vpop.permute.xlu0 %1625
        %1629 = vset.pattern.permute.xlu0 0
        %1630 = vperm.xlu0 %1629, %v1462
        %v1631 = vpop.permute.xlu0 %1630
        %1634 = vset.pattern.permute.xlu0 0
        %1635 = vperm.xlu0 %1634, %v1463
        %v1636 = vpop.permute.xlu0 %1635
        %1639 = vset.pattern.permute.xlu0 0
        %1640 = vperm.xlu0 %1639, %v1464
        %v1641 = vpop.permute.xlu0 %1640
        %1644 = vset.pattern.permute.xlu0 0
        %1645 = vperm.xlu0 %1644, %v1465
        %v1646 = vpop.permute.xlu0 %1645
        %1649 = vset.pattern.permute.xlu0 0
        %1650 = vperm.xlu0 %1649, %v1466
        %v1651 = vpop.permute.xlu0 %1650
        %1654 = vset.pattern.permute.xlu0 0
        %1655 = vperm.xlu0 %1654, %v1467
        %v1656 = vpop.permute.xlu0 %1655
        %1659 = vset.pattern.permute.xlu0 0
        %1660 = vperm.xlu0 %1659, %v1468
        %v1661 = vpop.permute.xlu0 %1660
        %1664 = vset.pattern.permute.xlu0 0
        %1665 = vperm.xlu0 %1664, %v1469
        %v1666 = vpop.permute.xlu0 %1665
        %1669 = vset.pattern.permute.xlu0 0
        %1670 = vperm.xlu0 %1669, %v1470
        %v1671 = vpop.permute.xlu0 %1670
        %1674 = vset.pattern.permute.xlu0 0
        %1675 = vperm.xlu0 %1674, %v1471
        %v1676 = vpop.permute.xlu0 %1675
        %1679 = vset.pattern.permute.xlu0 0
        %1680 = vperm.xlu0 %1679, %v1472
        %v1681 = vpop.permute.xlu0 %1680
        %1684 = vset.pattern.permute.xlu0 0
        %1685 = vperm.xlu0 %1684, %v1473
        %v1686 = vpop.permute.xlu0 %1685
        %1689 = vset.pattern.permute.xlu0 0
        %1690 = vperm.xlu0 %1689, %v1474
        %v1691 = vpop.permute.xlu0 %1690
        %1694 = vset.pattern.permute.xlu0 0
        %1695 = vperm.xlu0 %1694, %v1475
        %v1696 = vpop.permute.xlu0 %1695
        %1699 = vset.pattern.permute.xlu0 0
        %1700 = vperm.xlu0 %1699, %v1476
        %v1701 = vpop.permute.xlu0 %1700
        %1704 = vset.pattern.permute.xlu0 0
        %1705 = vperm.xlu0 %1704, %v1477
        %v1706 = vpop.permute.xlu0 %1705
        %1709 = vset.pattern.permute.xlu0 0
        %1710 = vperm.xlu0 %1709, %v1478
        %v1711 = vpop.permute.xlu0 %1710
        %1714 = vset.pattern.permute.xlu0 0
        %1715 = vperm.xlu0 %1714, %v1479
        %v1716 = vpop.permute.xlu0 %1715
        %1719 = vset.pattern.permute.xlu0 0
        %1720 = vperm.xlu0 %1719, %v1480
        %v1721 = vpop.permute.xlu0 %1720
        %v1723 = vlaneseq
        %v1724 = vshrl.u32 %v1723, 7
        %v1725 = vsub.s32 0, %v1724
        %v1726 = vrot.slane %v1481, %v1725
        %v1727 = vmul.f32 %v1486, %v1726
        %v1728 = vmul.f32 %v1491, %v1726
        %v1729 = vmul.f32 %v1496, %v1726
        %v1730 = vmul.f32 %v1501, %v1726
        %v1731 = vmul.f32 %v1506, %v1726
        %v1732 = vmul.f32 %v1511, %v1726
        %v1733 = vmul.f32 %v1516, %v1726
        %v1734 = vmul.f32 %v1521, %v1726
        %v1735 = vmul.f32 %v1526, %v1726
        %v1736 = vmul.f32 %v1531, %v1726
        %v1737 = vmul.f32 %v1536, %v1726
        %v1738 = vmul.f32 %v1541, %v1726
        %v1739 = vmul.f32 %v1546, %v1726
        %v1740 = vmul.f32 %v1551, %v1726
        %v1741 = vmul.f32 %v1556, %v1726
        %v1742 = vmul.f32 %v1561, %v1726
        %v1743 = vmul.f32 %v1566, %v1726
        %v1744 = vmul.f32 %v1571, %v1726
        %v1745 = vmul.f32 %v1576, %v1726
        %v1746 = vmul.f32 %v1581, %v1726
        %v1747 = vmul.f32 %v1586, %v1726
        %v1748 = vmul.f32 %v1591, %v1726
        %v1749 = vmul.f32 %v1596, %v1726
        %v1750 = vmul.f32 %v1601, %v1726
        %v1751 = vmul.f32 %v1606, %v1726
        %v1752 = vmul.f32 %v1611, %v1726
        %v1753 = vmul.f32 %v1616, %v1726
        %v1754 = vmul.f32 %v1621, %v1726
        %v1755 = vmul.f32 %v1626, %v1726
        %v1756 = vmul.f32 %v1631, %v1726
        %v1757 = vmul.f32 %v1636, %v1726
        %v1758 = vmul.f32 %v1641, %v1726
        %v1759 = vmul.f32 %v1646, %v1726
        %v1760 = vmul.f32 %v1651, %v1726
        %v1761 = vmul.f32 %v1656, %v1726
        %v1762 = vmul.f32 %v1661, %v1726
        %v1763 = vmul.f32 %v1666, %v1726
        %v1764 = vmul.f32 %v1671, %v1726
        %v1765 = vmul.f32 %v1676, %v1726
        %v1766 = vmul.f32 %v1681, %v1726
        %v1767 = vmul.f32 %v1686, %v1726
        %v1768 = vmul.f32 %v1691, %v1726
        %v1769 = vmul.f32 %v1696, %v1726
        %v1770 = vmul.f32 %v1701, %v1726
        %v1771 = vmul.f32 %v1706, %v1726
        %v1772 = vmul.f32 %v1711, %v1726
        %v1773 = vmul.f32 %v1716, %v1726
        %v1774 = vmul.f32 %v1721, %v1726
        %1775 = vset.pattern.permute.xlu0 4
        %1776 = vperm.xlu0 %1775, %v1433
        %v1777 = vpop.permute.xlu0 %1776
        %1779 = vset.pattern.permute.xlu0 4
        %1780 = vperm.xlu0 %1779, %v1434
        %v1781 = vpop.permute.xlu0 %1780
        %1783 = vset.pattern.permute.xlu0 4
        %1784 = vperm.xlu0 %1783, %v1435
        %v1785 = vpop.permute.xlu0 %1784
        %1787 = vset.pattern.permute.xlu0 4
        %1788 = vperm.xlu0 %1787, %v1436
        %v1789 = vpop.permute.xlu0 %1788
        %1791 = vset.pattern.permute.xlu0 4
        %1792 = vperm.xlu0 %1791, %v1437
        %v1793 = vpop.permute.xlu0 %1792
        %1795 = vset.pattern.permute.xlu0 4
        %1796 = vperm.xlu0 %1795, %v1438
        %v1797 = vpop.permute.xlu0 %1796
        %1799 = vset.pattern.permute.xlu0 4
        %1800 = vperm.xlu0 %1799, %v1439
        %v1801 = vpop.permute.xlu0 %1800
        %1803 = vset.pattern.permute.xlu0 4
        %1804 = vperm.xlu0 %1803, %v1440
        %v1805 = vpop.permute.xlu0 %1804
        %1807 = vset.pattern.permute.xlu0 4
        %1808 = vperm.xlu0 %1807, %v1441
        %v1809 = vpop.permute.xlu0 %1808
        %1811 = vset.pattern.permute.xlu0 4
        %1812 = vperm.xlu0 %1811, %v1442
        %v1813 = vpop.permute.xlu0 %1812
        %1815 = vset.pattern.permute.xlu0 4
        %1816 = vperm.xlu0 %1815, %v1443
        %v1817 = vpop.permute.xlu0 %1816
        %1819 = vset.pattern.permute.xlu0 4
        %1820 = vperm.xlu0 %1819, %v1444
        %v1821 = vpop.permute.xlu0 %1820
        %1823 = vset.pattern.permute.xlu0 4
        %1824 = vperm.xlu0 %1823, %v1445
        %v1825 = vpop.permute.xlu0 %1824
        %1827 = vset.pattern.permute.xlu0 4
        %1828 = vperm.xlu0 %1827, %v1446
        %v1829 = vpop.permute.xlu0 %1828
        %1831 = vset.pattern.permute.xlu0 4
        %1832 = vperm.xlu0 %1831, %v1447
        %v1833 = vpop.permute.xlu0 %1832
        %1835 = vset.pattern.permute.xlu0 4
        %1836 = vperm.xlu0 %1835, %v1448
        %v1837 = vpop.permute.xlu0 %1836
        %1839 = vset.pattern.permute.xlu0 4
        %1840 = vperm.xlu0 %1839, %v1449
        %v1841 = vpop.permute.xlu0 %1840
        %1843 = vset.pattern.permute.xlu0 4
        %1844 = vperm.xlu0 %1843, %v1450
        %v1845 = vpop.permute.xlu0 %1844
        %1847 = vset.pattern.permute.xlu0 4
        %1848 = vperm.xlu0 %1847, %v1451
        %v1849 = vpop.permute.xlu0 %1848
        %1851 = vset.pattern.permute.xlu0 4
        %1852 = vperm.xlu0 %1851, %v1452
        %v1853 = vpop.permute.xlu0 %1852
        %1855 = vset.pattern.permute.xlu0 4
        %1856 = vperm.xlu0 %1855, %v1453
        %v1857 = vpop.permute.xlu0 %1856
        %1859 = vset.pattern.permute.xlu0 4
        %1860 = vperm.xlu0 %1859, %v1454
        %v1861 = vpop.permute.xlu0 %1860
        %1863 = vset.pattern.permute.xlu0 4
        %1864 = vperm.xlu0 %1863, %v1455
        %v1865 = vpop.permute.xlu0 %1864
        %1867 = vset.pattern.permute.xlu0 4
        %1868 = vperm.xlu0 %1867, %v1456
        %v1869 = vpop.permute.xlu0 %1868
        %1871 = vset.pattern.permute.xlu0 4
        %1872 = vperm.xlu0 %1871, %v1457
        %v1873 = vpop.permute.xlu0 %1872
        %1875 = vset.pattern.permute.xlu0 4
        %1876 = vperm.xlu0 %1875, %v1458
        %v1877 = vpop.permute.xlu0 %1876
        %1879 = vset.pattern.permute.xlu0 4
        %1880 = vperm.xlu0 %1879, %v1459
        %v1881 = vpop.permute.xlu0 %1880
        %1883 = vset.pattern.permute.xlu0 4
        %1884 = vperm.xlu0 %1883, %v1460
        %v1885 = vpop.permute.xlu0 %1884
        %1887 = vset.pattern.permute.xlu0 4
        %1888 = vperm.xlu0 %1887, %v1461
        %v1889 = vpop.permute.xlu0 %1888
        %1891 = vset.pattern.permute.xlu0 4
        %1892 = vperm.xlu0 %1891, %v1462
        %v1893 = vpop.permute.xlu0 %1892
        %1895 = vset.pattern.permute.xlu0 4
        %1896 = vperm.xlu0 %1895, %v1463
        %v1897 = vpop.permute.xlu0 %1896
        %1899 = vset.pattern.permute.xlu0 4
        %1900 = vperm.xlu0 %1899, %v1464
        %v1901 = vpop.permute.xlu0 %1900
        %1903 = vset.pattern.permute.xlu0 4
        %1904 = vperm.xlu0 %1903, %v1465
        %v1905 = vpop.permute.xlu0 %1904
        %1907 = vset.pattern.permute.xlu0 4
        %1908 = vperm.xlu0 %1907, %v1466
        %v1909 = vpop.permute.xlu0 %1908
        %1911 = vset.pattern.permute.xlu0 4
        %1912 = vperm.xlu0 %1911, %v1467
        %v1913 = vpop.permute.xlu0 %1912
        %1915 = vset.pattern.permute.xlu0 4
        %1916 = vperm.xlu0 %1915, %v1468
        %v1917 = vpop.permute.xlu0 %1916
        %1919 = vset.pattern.permute.xlu0 4
        %1920 = vperm.xlu0 %1919, %v1469
        %v1921 = vpop.permute.xlu0 %1920
        %1923 = vset.pattern.permute.xlu0 4
        %1924 = vperm.xlu0 %1923, %v1470
        %v1925 = vpop.permute.xlu0 %1924
        %1927 = vset.pattern.permute.xlu0 4
        %1928 = vperm.xlu0 %1927, %v1471
        %v1929 = vpop.permute.xlu0 %1928
        %1931 = vset.pattern.permute.xlu0 4
        %1932 = vperm.xlu0 %1931, %v1472
        %v1933 = vpop.permute.xlu0 %1932
        %1935 = vset.pattern.permute.xlu0 4
        %1936 = vperm.xlu0 %1935, %v1473
        %v1937 = vpop.permute.xlu0 %1936
        %1939 = vset.pattern.permute.xlu0 4
        %1940 = vperm.xlu0 %1939, %v1474
        %v1941 = vpop.permute.xlu0 %1940
        %1943 = vset.pattern.permute.xlu0 4
        %1944 = vperm.xlu0 %1943, %v1475
        %v1945 = vpop.permute.xlu0 %1944
        %1947 = vset.pattern.permute.xlu0 4
        %1948 = vperm.xlu0 %1947, %v1476
        %v1949 = vpop.permute.xlu0 %1948
        %1951 = vset.pattern.permute.xlu0 4
        %1952 = vperm.xlu0 %1951, %v1477
        %v1953 = vpop.permute.xlu0 %1952
        %1955 = vset.pattern.permute.xlu0 4
        %1956 = vperm.xlu0 %1955, %v1478
        %v1957 = vpop.permute.xlu0 %1956
        %1959 = vset.pattern.permute.xlu0 4
        %1960 = vperm.xlu0 %1959, %v1479
        %v1961 = vpop.permute.xlu0 %1960
        %1963 = vset.pattern.permute.xlu0 4
        %1964 = vperm.xlu0 %1963, %v1480
        %v1965 = vpop.permute.xlu0 %1964
        %v1967 = vlaneseq
        %v1968 = vshrl.u32 %v1967, 7
        %v1969 = vsub.s32 0, %v1968
        %v1970 = vrot.slane %v1482, %v1969
        %v1971 = vmul.f32 %v1777, %v1970
        %v1972 = vmul.f32 %v1781, %v1970
        %v1973 = vmul.f32 %v1785, %v1970
        %v1974 = vmul.f32 %v1789, %v1970
        %v1975 = vmul.f32 %v1793, %v1970
        %v1976 = vmul.f32 %v1797, %v1970
        %v1977 = vmul.f32 %v1801, %v1970
        %v1978 = vmul.f32 %v1805, %v1970
        %v1979 = vmul.f32 %v1809, %v1970
        %v1980 = vmul.f32 %v1813, %v1970
        %v1981 = vmul.f32 %v1817, %v1970
        %v1982 = vmul.f32 %v1821, %v1970
        %v1983 = vmul.f32 %v1825, %v1970
        %v1984 = vmul.f32 %v1829, %v1970
        %v1985 = vmul.f32 %v1833, %v1970
        %v1986 = vmul.f32 %v1837, %v1970
        %v1987 = vmul.f32 %v1841, %v1970
        %v1988 = vmul.f32 %v1845, %v1970
        %v1989 = vmul.f32 %v1849, %v1970
        %v1990 = vmul.f32 %v1853, %v1970
        %v1991 = vmul.f32 %v1857, %v1970
        %v1992 = vmul.f32 %v1861, %v1970
        %v1993 = vmul.f32 %v1865, %v1970
        %v1994 = vmul.f32 %v1869, %v1970
        %v1995 = vmul.f32 %v1873, %v1970
        %v1996 = vmul.f32 %v1877, %v1970
        %v1997 = vmul.f32 %v1881, %v1970
        %v1998 = vmul.f32 %v1885, %v1970
        %v1999 = vmul.f32 %v1889, %v1970
        %v2000 = vmul.f32 %v1893, %v1970
        %v2001 = vmul.f32 %v1897, %v1970
        %v2002 = vmul.f32 %v1901, %v1970
        %v2003 = vmul.f32 %v1905, %v1970
        %v2004 = vmul.f32 %v1909, %v1970
        %v2005 = vmul.f32 %v1913, %v1970
        %v2006 = vmul.f32 %v1917, %v1970
        %v2007 = vmul.f32 %v1921, %v1970
        %v2008 = vmul.f32 %v1925, %v1970
        %v2009 = vmul.f32 %v1929, %v1970
        %v2010 = vmul.f32 %v1933, %v1970
        %v2011 = vmul.f32 %v1937, %v1970
        %v2012 = vmul.f32 %v1941, %v1970
        %v2013 = vmul.f32 %v1945, %v1970
        %v2014 = vmul.f32 %v1949, %v1970
        %v2015 = vmul.f32 %v1953, %v1970
        %v2016 = vmul.f32 %v1957, %v1970
        %v2017 = vmul.f32 %v1961, %v1970
        %v2018 = vmul.f32 %v1965, %v1970
        %v2019 = vadd.f32 %v1727, %v1971
        %v2020 = vadd.f32 %v1728, %v1972
        %v2021 = vadd.f32 %v1729, %v1973
        %v2022 = vadd.f32 %v1730, %v1974
        %v2023 = vadd.f32 %v1731, %v1975
        %v2024 = vadd.f32 %v1732, %v1976
        %v2025 = vadd.f32 %v1733, %v1977
        %v2026 = vadd.f32 %v1734, %v1978
        %v2027 = vadd.f32 %v1735, %v1979
        %v2028 = vadd.f32 %v1736, %v1980
        %v2029 = vadd.f32 %v1737, %v1981
        %v2030 = vadd.f32 %v1738, %v1982
        %v2031 = vadd.f32 %v1739, %v1983
        %v2032 = vadd.f32 %v1740, %v1984
        %v2033 = vadd.f32 %v1741, %v1985
        %v2034 = vadd.f32 %v1742, %v1986
        %v2035 = vadd.f32 %v1743, %v1987
        %v2036 = vadd.f32 %v1744, %v1988
        %v2037 = vadd.f32 %v1745, %v1989
        %v2038 = vadd.f32 %v1746, %v1990
        %v2039 = vadd.f32 %v1747, %v1991
        %v2040 = vadd.f32 %v1748, %v1992
        %v2041 = vadd.f32 %v1749, %v1993
        %v2042 = vadd.f32 %v1750, %v1994
        %v2043 = vadd.f32 %v1751, %v1995
        %v2044 = vadd.f32 %v1752, %v1996
        %v2045 = vadd.f32 %v1753, %v1997
        %v2046 = vadd.f32 %v1754, %v1998
        %v2047 = vadd.f32 %v1755, %v1999
        %v2048 = vadd.f32 %v1756, %v2000
        %v2049 = vadd.f32 %v1757, %v2001
        %v2050 = vadd.f32 %v1758, %v2002
        %v2051 = vadd.f32 %v1759, %v2003
        %v2052 = vadd.f32 %v1760, %v2004
        %v2053 = vadd.f32 %v1761, %v2005
        %v2054 = vadd.f32 %v1762, %v2006
        %v2055 = vadd.f32 %v1763, %v2007
        %v2056 = vadd.f32 %v1764, %v2008
        %v2057 = vadd.f32 %v1765, %v2009
        %v2058 = vadd.f32 %v1766, %v2010
        %v2059 = vadd.f32 %v1767, %v2011
        %v2060 = vadd.f32 %v1768, %v2012
        %v2061 = vadd.f32 %v1769, %v2013
        %v2062 = vadd.f32 %v1770, %v2014
        %v2063 = vadd.f32 %v1771, %v2015
        %v2064 = vadd.f32 %v1772, %v2016
        %v2065 = vadd.f32 %v1773, %v2017
        %v2066 = vadd.f32 %v1774, %v2018
        %v2067 = vpack.c.bf16 %v2020, %v2019
        %v2068 = vpack.c.bf16 %v2022, %v2021
        %v2069 = vpack.c.bf16 %v2024, %v2023
        %v2070 = vpack.c.bf16 %v2026, %v2025
        %v2071 = vpack.c.bf16 %v2028, %v2027
        %v2072 = vpack.c.bf16 %v2030, %v2029
        %v2073 = vpack.c.bf16 %v2032, %v2031
        %v2074 = vpack.c.bf16 %v2034, %v2033
        %v2075 = vpack.c.bf16 %v2036, %v2035
        %v2076 = vpack.c.bf16 %v2038, %v2037
        %v2077 = vpack.c.bf16 %v2040, %v2039
        %v2078 = vpack.c.bf16 %v2042, %v2041
        %v2079 = vpack.c.bf16 %v2044, %v2043
        %v2080 = vpack.c.bf16 %v2046, %v2045
        %v2081 = vpack.c.bf16 %v2048, %v2047
        %v2082 = vpack.c.bf16 %v2050, %v2049
        %v2083 = vpack.c.bf16 %v2052, %v2051
        %v2084 = vpack.c.bf16 %v2054, %v2053
        %v2085 = vpack.c.bf16 %v2056, %v2055
        %v2086 = vpack.c.bf16 %v2058, %v2057
        %v2087 = vpack.c.bf16 %v2060, %v2059
        %v2088 = vpack.c.bf16 %v2062, %v2061
        %v2089 = vpack.c.bf16 %v2064, %v2063
        %v2090 = vpack.c.bf16 %v2066, %v2065
        %v2115 = vunpack.c.l.b16 %v2067
        %v2116 = vunpack.c.h.b16 %v2067
        %v2117 = vunpack.c.l.b16 %v2068
        %v2118 = vunpack.c.h.b16 %v2068
        %v2119 = vunpack.c.l.b16 %v2069
        %v2120 = vunpack.c.h.b16 %v2069
        %v2121 = vunpack.c.l.b16 %v2070
        %v2122 = vunpack.c.h.b16 %v2070
        %v2123 = vunpack.c.l.b16 %v2071
        %v2124 = vunpack.c.h.b16 %v2071
        %v2125 = vunpack.c.l.b16 %v2072
        %v2126 = vunpack.c.h.b16 %v2072
        %v2127 = vunpack.c.l.b16 %v2073
        %v2128 = vunpack.c.h.b16 %v2073
        %v2129 = vunpack.c.l.b16 %v2074
        %v2130 = vunpack.c.h.b16 %v2074
        %v2131 = vunpack.c.l.b16 %v2075
        %v2132 = vunpack.c.h.b16 %v2075
        %v2133 = vunpack.c.l.b16 %v2076
        %v2134 = vunpack.c.h.b16 %v2076
        %v2135 = vunpack.c.l.b16 %v2077
        %v2136 = vunpack.c.h.b16 %v2077
        %v2137 = vunpack.c.l.b16 %v2078
        %v2138 = vunpack.c.h.b16 %v2078
        %v2139 = vunpack.c.l.b16 %v2079
        %v2140 = vunpack.c.h.b16 %v2079
        %v2141 = vunpack.c.l.b16 %v2080
        %v2142 = vunpack.c.h.b16 %v2080
        %v2143 = vunpack.c.l.b16 %v2081
        %v2144 = vunpack.c.h.b16 %v2081
        %v2145 = vunpack.c.l.b16 %v2082
        %v2146 = vunpack.c.h.b16 %v2082
        %v2147 = vunpack.c.l.b16 %v2083
        %v2148 = vunpack.c.h.b16 %v2083
        %v2149 = vunpack.c.l.b16 %v2084
        %v2150 = vunpack.c.h.b16 %v2084
        %v2151 = vunpack.c.l.b16 %v2085
        %v2152 = vunpack.c.h.b16 %v2085
        %v2153 = vunpack.c.l.b16 %v2086
        %v2154 = vunpack.c.h.b16 %v2086
        %v2155 = vunpack.c.l.b16 %v2087
        %v2156 = vunpack.c.h.b16 %v2087
        %v2157 = vunpack.c.l.b16 %v2088
        %v2158 = vunpack.c.h.b16 %v2088
        %v2159 = vunpack.c.l.b16 %v2089
        %v2160 = vunpack.c.h.b16 %v2089
        %v2161 = vunpack.c.l.b16 %v2090
        %v2162 = vunpack.c.h.b16 %v2090
        %v2163 = vpack.c.b16 %v2115, %v2115
        %v2164 = vpack.c.b16 %v2116, %v2116
        %v2165 = vpack.c.b16 %v2117, %v2117
        %v2166 = vpack.c.b16 %v2118, %v2118
        %v2167 = vpack.c.b16 %v2119, %v2119
        %v2168 = vpack.c.b16 %v2120, %v2120
        %v2169 = vpack.c.b16 %v2121, %v2121
        %v2170 = vpack.c.b16 %v2122, %v2122
        %v2171 = vpack.c.b16 %v2123, %v2123
        %v2172 = vpack.c.b16 %v2124, %v2124
        %v2173 = vpack.c.b16 %v2125, %v2125
        %v2174 = vpack.c.b16 %v2126, %v2126
        %v2175 = vpack.c.b16 %v2127, %v2127
        %v2176 = vpack.c.b16 %v2128, %v2128
        %v2177 = vpack.c.b16 %v2129, %v2129
        %v2178 = vpack.c.b16 %v2130, %v2130
        %v2179 = vpack.c.b16 %v2131, %v2131
        %v2180 = vpack.c.b16 %v2132, %v2132
        %v2181 = vpack.c.b16 %v2133, %v2133
        %v2182 = vpack.c.b16 %v2134, %v2134
        %v2183 = vpack.c.b16 %v2135, %v2135
        %v2184 = vpack.c.b16 %v2136, %v2136
        %v2185 = vpack.c.b16 %v2137, %v2137
        %v2186 = vpack.c.b16 %v2138, %v2138
        %v2187 = vpack.c.b16 %v2139, %v2139
        %v2188 = vpack.c.b16 %v2140, %v2140
        %v2189 = vpack.c.b16 %v2141, %v2141
        %v2190 = vpack.c.b16 %v2142, %v2142
        %v2191 = vpack.c.b16 %v2143, %v2143
        %v2192 = vpack.c.b16 %v2144, %v2144
        %v2193 = vpack.c.b16 %v2145, %v2145
        %v2194 = vpack.c.b16 %v2146, %v2146
        %v2195 = vpack.c.b16 %v2147, %v2147
        %v2196 = vpack.c.b16 %v2148, %v2148
        %v2197 = vpack.c.b16 %v2149, %v2149
        %v2198 = vpack.c.b16 %v2150, %v2150
        %v2199 = vpack.c.b16 %v2151, %v2151
        %v2200 = vpack.c.b16 %v2152, %v2152
        %v2201 = vpack.c.b16 %v2153, %v2153
        %v2202 = vpack.c.b16 %v2154, %v2154
        %v2203 = vpack.c.b16 %v2155, %v2155
        %v2204 = vpack.c.b16 %v2156, %v2156
        %v2205 = vpack.c.b16 %v2157, %v2157
        %v2206 = vpack.c.b16 %v2158, %v2158
        %v2207 = vpack.c.b16 %v2159, %v2159
        %v2208 = vpack.c.b16 %v2160, %v2160
        %v2209 = vpack.c.b16 %v2161, %v2161
        %v2210 = vpack.c.b16 %v2162, %v2162
        %2259 = vst [vmem:[#allocation3] sm:$0xf] %v2163
        %2260 = vst [vmem:[#allocation3 + $0x10] sm:$0xf] %v2164
        %2261 = vst [vmem:[#allocation3 + $0x20] sm:$0xf] %v2165
        %2262 = vst [vmem:[#allocation3 + $0x30] sm:$0xf] %v2166
        %2263 = vst [vmem:[#allocation3 + $0x40] sm:$0xf] %v2167
        %2264 = vst [vmem:[#allocation3 + $0x50] sm:$0xf] %v2168
        %2265 = vst [vmem:[#allocation3 + $0x60] sm:$0xf] %v2169
        %2266 = vst [vmem:[#allocation3 + $0x70] sm:$0xf] %v2170
        %2267 = vst [vmem:[#allocation3 + $0x80] sm:$0xf] %v2171
        %2268 = vst [vmem:[#allocation3 + $0x90] sm:$0xf] %v2172
        %2269 = vst [vmem:[#allocation3 + $0xa0] sm:$0xf] %v2173
        %2270 = vst [vmem:[#allocation3 + $0xb0] sm:$0xf] %v2174
        %2271 = vst [vmem:[#allocation3 + $0xc0] sm:$0xf] %v2175
        %2272 = vst [vmem:[#allocation3 + $0xd0] sm:$0xf] %v2176
        %2273 = vst [vmem:[#allocation3 + $0xe0] sm:$0xf] %v2177
        %2274 = vst [vmem:[#allocation3 + $0xf0] sm:$0xf] %v2178
        %2275 = vst [vmem:[#allocation3 + $0x100] sm:$0xf] %v2179
        %2276 = vst [vmem:[#allocation3 + $0x110] sm:$0xf] %v2180
        %2277 = vst [vmem:[#allocation3 + $0x120] sm:$0xf] %v2181
        %2278 = vst [vmem:[#allocation3 + $0x130] sm:$0xf] %v2182
        %2279 = vst [vmem:[#allocation3 + $0x140] sm:$0xf] %v2183
        %2280 = vst [vmem:[#allocation3 + $0x150] sm:$0xf] %v2184
        %2281 = vst [vmem:[#allocation3 + $0x160] sm:$0xf] %v2185
        %2282 = vst [vmem:[#allocation3 + $0x170] sm:$0xf] %v2186
        %2283 = vst [vmem:[#allocation3 + $0x180] sm:$0xf] %v2187
        %2284 = vst [vmem:[#allocation3 + $0x190] sm:$0xf] %v2188
        %2285 = vst [vmem:[#allocation3 + $0x1a0] sm:$0xf] %v2189
        %2286 = vst [vmem:[#allocation3 + $0x1b0] sm:$0xf] %v2190
        %2287 = vst [vmem:[#allocation3 + $0x1c0] sm:$0xf] %v2191
        %2288 = vst [vmem:[#allocation3 + $0x1d0] sm:$0xf] %v2192
        %2289 = vst [vmem:[#allocation3 + $0x1e0] sm:$0xf] %v2193
        %2290 = vst [vmem:[#allocation3 + $0x1f0] sm:$0xf] %v2194
        %2291 = vst [vmem:[#allocation3 + $0x200] sm:$0xf] %v2195
        %2292 = vst [vmem:[#allocation3 + $0x210] sm:$0xf] %v2196
        %2293 = vst [vmem:[#allocation3 + $0x220] sm:$0xf] %v2197
        %2294 = vst [vmem:[#allocation3 + $0x230] sm:$0xf] %v2198
        %2295 = vst [vmem:[#allocation3 + $0x240] sm:$0xf] %v2199
        %2296 = vst [vmem:[#allocation3 + $0x250] sm:$0xf] %v2200
        %2297 = vst [vmem:[#allocation3 + $0x260] sm:$0xf] %v2201
        %2298 = vst [vmem:[#allocation3 + $0x270] sm:$0xf] %v2202
        %2299 = vst [vmem:[#allocation3 + $0x280] sm:$0xf] %v2203
        %2300 = vst [vmem:[#allocation3 + $0x290] sm:$0xf] %v2204
        %2301 = vst [vmem:[#allocation3 + $0x2a0] sm:$0xf] %v2205
        %2302 = vst [vmem:[#allocation3 + $0x2b0] sm:$0xf] %v2206
        %2303 = vst [vmem:[#allocation3 + $0x2c0] sm:$0xf] %v2207
        %2304 = vst [vmem:[#allocation3 + $0x2d0] sm:$0xf] %v2208
        %2305 = vst [vmem:[#allocation3 + $0x2e0] sm:$0xf] %v2209
        %2306 = vst [vmem:[#allocation3 + $0x2f0] sm:$0xf] %v2210
        %v2307 = vld [vmem:[%s232] sm:$0xff]
        %v2308 = vld [vmem:[%s232 + $0x8] sm:$0xff]
        %v2309 = vld [vmem:[%s232 + $0x10] sm:$0xff]
        %v2310 = vld [vmem:[%s232 + $0x18] sm:$0xff]
        %v2311 = vld [vmem:[%s232 + $0x20] sm:$0xff]
        %v2312 = vld [vmem:[%s232 + $0x28] sm:$0xff]
        %v2313 = vld [vmem:[%s232 + $0x30] sm:$0xff]
        %v2314 = vld [vmem:[%s232 + $0x38] sm:$0xff]
        %v2315 = vld [vmem:[%s232 + $0x40] sm:$0xff]
        %v2316 = vld [vmem:[%s232 + $0x48] sm:$0xff]
        %v2317 = vld [vmem:[%s232 + $0x50] sm:$0xff]
        %v2318 = vld [vmem:[%s232 + $0x58] sm:$0xff]
        %v2319 = vld [vmem:[%s232 + $0x60] sm:$0xff]
        %v2320 = vld [vmem:[%s232 + $0x68] sm:$0xff]
        %v2321 = vld [vmem:[%s232 + $0x70] sm:$0xff]
        %v2322 = vld [vmem:[%s232 + $0x78] sm:$0xff]
        %v2323 = vld [vmem:[%s232 + $0x80] sm:$0xff]
        %v2324 = vld [vmem:[%s232 + $0x88] sm:$0xff]
        %v2325 = vld [vmem:[%s232 + $0x90] sm:$0xff]
        %v2326 = vld [vmem:[%s232 + $0x98] sm:$0xff]
        %v2327 = vld [vmem:[%s232 + $0xa0] sm:$0xff]
        %v2328 = vld [vmem:[%s232 + $0xa8] sm:$0xff]
        %v2329 = vld [vmem:[%s232 + $0xb0] sm:$0xff]
        %v2330 = vld [vmem:[%s232 + $0xb8] sm:$0xff]
        %v2331 = vld [vmem:[%s232 + $0xc0] sm:$0xff]
        %v2332 = vld [vmem:[%s232 + $0xc8] sm:$0xff]
        %v2333 = vld [vmem:[%s232 + $0xd0] sm:$0xff]
        %v2334 = vld [vmem:[%s232 + $0xd8] sm:$0xff]
        %v2335 = vld [vmem:[%s232 + $0xe0] sm:$0xff]
        %v2336 = vld [vmem:[%s232 + $0xe8] sm:$0xff]
        %v2337 = vld [vmem:[%s232 + $0xf0] sm:$0xff]
        %v2338 = vld [vmem:[%s232 + $0xf8] sm:$0xff]
        %v2339 = vld [vmem:[%s232 + $0x100] sm:$0xff]
        %v2340 = vld [vmem:[%s232 + $0x108] sm:$0xff]
        %v2341 = vld [vmem:[%s232 + $0x110] sm:$0xff]
        %v2342 = vld [vmem:[%s232 + $0x118] sm:$0xff]
        %v2343 = vld [vmem:[%s232 + $0x120] sm:$0xff]
        %v2344 = vld [vmem:[%s232 + $0x128] sm:$0xff]
        %v2345 = vld [vmem:[%s232 + $0x130] sm:$0xff]
        %v2346 = vld [vmem:[%s232 + $0x138] sm:$0xff]
        %v2347 = vld [vmem:[%s232 + $0x140] sm:$0xff]
        %v2348 = vld [vmem:[%s232 + $0x148] sm:$0xff]
        %v2349 = vld [vmem:[%s232 + $0x150] sm:$0xff]
        %v2350 = vld [vmem:[%s232 + $0x158] sm:$0xff]
        %v2351 = vld [vmem:[%s232 + $0x160] sm:$0xff]
        %v2352 = vld [vmem:[%s232 + $0x168] sm:$0xff]
        %v2353 = vld [vmem:[%s232 + $0x170] sm:$0xff]
        %v2354 = vld [vmem:[%s232 + $0x178] sm:$0xff]
        %v2355 = vld [vmem:[%s2 + $0x1] sm:$0x1]
        %v2356 = vld [vmem:[%s3 + $0x1] sm:$0x1]
        %2358 = vset.pattern.permute.xlu0 1
        %2359 = vperm.xlu0 %2358, %v2307
        %v2360 = vpop.permute.xlu0 %2359
        %2363 = vset.pattern.permute.xlu0 1
        %2364 = vperm.xlu0 %2363, %v2308
        %v2365 = vpop.permute.xlu0 %2364
        %2368 = vset.pattern.permute.xlu0 1
        %2369 = vperm.xlu0 %2368, %v2309
        %v2370 = vpop.permute.xlu0 %2369
        %2373 = vset.pattern.permute.xlu0 1
        %2374 = vperm.xlu0 %2373, %v2310
        %v2375 = vpop.permute.xlu0 %2374
        %2378 = vset.pattern.permute.xlu0 1
        %2379 = vperm.xlu0 %2378, %v2311
        %v2380 = vpop.permute.xlu0 %2379
        %2383 = vset.pattern.permute.xlu0 1
        %2384 = vperm.xlu0 %2383, %v2312
        %v2385 = vpop.permute.xlu0 %2384
        %2388 = vset.pattern.permute.xlu0 1
        %2389 = vperm.xlu0 %2388, %v2313
        %v2390 = vpop.permute.xlu0 %2389
        %2393 = vset.pattern.permute.xlu0 1
        %2394 = vperm.xlu0 %2393, %v2314
        %v2395 = vpop.permute.xlu0 %2394
        %2398 = vset.pattern.permute.xlu0 1
        %2399 = vperm.xlu0 %2398, %v2315
        %v2400 = vpop.permute.xlu0 %2399
        %2403 = vset.pattern.permute.xlu0 1
        %2404 = vperm.xlu0 %2403, %v2316
        %v2405 = vpop.permute.xlu0 %2404
        %2408 = vset.pattern.permute.xlu0 1
        %2409 = vperm.xlu0 %2408, %v2317
        %v2410 = vpop.permute.xlu0 %2409
        %2413 = vset.pattern.permute.xlu0 1
        %2414 = vperm.xlu0 %2413, %v2318
        %v2415 = vpop.permute.xlu0 %2414
        %2418 = vset.pattern.permute.xlu0 1
        %2419 = vperm.xlu0 %2418, %v2319
        %v2420 = vpop.permute.xlu0 %2419
        %2423 = vset.pattern.permute.xlu0 1
        %2424 = vperm.xlu0 %2423, %v2320
        %v2425 = vpop.permute.xlu0 %2424
        %2428 = vset.pattern.permute.xlu0 1
        %2429 = vperm.xlu0 %2428, %v2321
        %v2430 = vpop.permute.xlu0 %2429
        %2433 = vset.pattern.permute.xlu0 1
        %2434 = vperm.xlu0 %2433, %v2322
        %v2435 = vpop.permute.xlu0 %2434
        %2438 = vset.pattern.permute.xlu0 1
        %2439 = vperm.xlu0 %2438, %v2323
        %v2440 = vpop.permute.xlu0 %2439
        %2443 = vset.pattern.permute.xlu0 1
        %2444 = vperm.xlu0 %2443, %v2324
        %v2445 = vpop.permute.xlu0 %2444
        %2448 = vset.pattern.permute.xlu0 1
        %2449 = vperm.xlu0 %2448, %v2325
        %v2450 = vpop.permute.xlu0 %2449
        %2453 = vset.pattern.permute.xlu0 1
        %2454 = vperm.xlu0 %2453, %v2326
        %v2455 = vpop.permute.xlu0 %2454
        %2458 = vset.pattern.permute.xlu0 1
        %2459 = vperm.xlu0 %2458, %v2327
        %v2460 = vpop.permute.xlu0 %2459
        %2463 = vset.pattern.permute.xlu0 1
        %2464 = vperm.xlu0 %2463, %v2328
        %v2465 = vpop.permute.xlu0 %2464
        %2468 = vset.pattern.permute.xlu0 1
        %2469 = vperm.xlu0 %2468, %v2329
        %v2470 = vpop.permute.xlu0 %2469
        %2473 = vset.pattern.permute.xlu0 1
        %2474 = vperm.xlu0 %2473, %v2330
        %v2475 = vpop.permute.xlu0 %2474
        %2478 = vset.pattern.permute.xlu0 1
        %2479 = vperm.xlu0 %2478, %v2331
        %v2480 = vpop.permute.xlu0 %2479
        %2483 = vset.pattern.permute.xlu0 1
        %2484 = vperm.xlu0 %2483, %v2332
        %v2485 = vpop.permute.xlu0 %2484
        %2488 = vset.pattern.permute.xlu0 1
        %2489 = vperm.xlu0 %2488, %v2333
        %v2490 = vpop.permute.xlu0 %2489
        %2493 = vset.pattern.permute.xlu0 1
        %2494 = vperm.xlu0 %2493, %v2334
        %v2495 = vpop.permute.xlu0 %2494
        %2498 = vset.pattern.permute.xlu0 1
        %2499 = vperm.xlu0 %2498, %v2335
        %v2500 = vpop.permute.xlu0 %2499
        %2503 = vset.pattern.permute.xlu0 1
        %2504 = vperm.xlu0 %2503, %v2336
        %v2505 = vpop.permute.xlu0 %2504
        %2508 = vset.pattern.permute.xlu0 1
        %2509 = vperm.xlu0 %2508, %v2337
        %v2510 = vpop.permute.xlu0 %2509
        %2513 = vset.pattern.permute.xlu0 1
        %2514 = vperm.xlu0 %2513, %v2338
        %v2515 = vpop.permute.xlu0 %2514
        %2518 = vset.pattern.permute.xlu0 1
        %2519 = vperm.xlu0 %2518, %v2339
        %v2520 = vpop.permute.xlu0 %2519
        %2523 = vset.pattern.permute.xlu0 1
        %2524 = vperm.xlu0 %2523, %v2340
        %v2525 = vpop.permute.xlu0 %2524
        %2528 = vset.pattern.permute.xlu0 1
        %2529 = vperm.xlu0 %2528, %v2341
        %v2530 = vpop.permute.xlu0 %2529
        %2533 = vset.pattern.permute.xlu0 1
        %2534 = vperm.xlu0 %2533, %v2342
        %v2535 = vpop.permute.xlu0 %2534
        %2538 = vset.pattern.permute.xlu0 1
        %2539 = vperm.xlu0 %2538, %v2343
        %v2540 = vpop.permute.xlu0 %2539
        %2543 = vset.pattern.permute.xlu0 1
        %2544 = vperm.xlu0 %2543, %v2344
        %v2545 = vpop.permute.xlu0 %2544
        %2548 = vset.pattern.permute.xlu0 1
        %2549 = vperm.xlu0 %2548, %v2345
        %v2550 = vpop.permute.xlu0 %2549
        %2553 = vset.pattern.permute.xlu0 1
        %2554 = vperm.xlu0 %2553, %v2346
        %v2555 = vpop.permute.xlu0 %2554
        %2558 = vset.pattern.permute.xlu0 1
        %2559 = vperm.xlu0 %2558, %v2347
        %v2560 = vpop.permute.xlu0 %2559
        %2563 = vset.pattern.permute.xlu0 1
        %2564 = vperm.xlu0 %2563, %v2348
        %v2565 = vpop.permute.xlu0 %2564
        %2568 = vset.pattern.permute.xlu0 1
        %2569 = vperm.xlu0 %2568, %v2349
        %v2570 = vpop.permute.xlu0 %2569
        %2573 = vset.pattern.permute.xlu0 1
        %2574 = vperm.xlu0 %2573, %v2350
        %v2575 = vpop.permute.xlu0 %2574
        %2578 = vset.pattern.permute.xlu0 1
        %2579 = vperm.xlu0 %2578, %v2351
        %v2580 = vpop.permute.xlu0 %2579
        %2583 = vset.pattern.permute.xlu0 1
        %2584 = vperm.xlu0 %2583, %v2352
        %v2585 = vpop.permute.xlu0 %2584
        %2588 = vset.pattern.permute.xlu0 1
        %2589 = vperm.xlu0 %2588, %v2353
        %v2590 = vpop.permute.xlu0 %2589
        %2593 = vset.pattern.permute.xlu0 1
        %2594 = vperm.xlu0 %2593, %v2354
        %v2595 = vpop.permute.xlu0 %2594
        %v2597 = vlaneseq
        %v2598 = vshrl.u32 %v2597, 7
        %v2599 = vsub.s32 0, %v2598
        %v2600 = vrot.slane %v2355, %v2599
        %v2601 = vmul.f32 %v2360, %v2600
        %v2602 = vmul.f32 %v2365, %v2600
        %v2603 = vmul.f32 %v2370, %v2600
        %v2604 = vmul.f32 %v2375, %v2600
        %v2605 = vmul.f32 %v2380, %v2600
        %v2606 = vmul.f32 %v2385, %v2600
        %v2607 = vmul.f32 %v2390, %v2600
        %v2608 = vmul.f32 %v2395, %v2600
        %v2609 = vmul.f32 %v2400, %v2600
        %v2610 = vmul.f32 %v2405, %v2600
        %v2611 = vmul.f32 %v2410, %v2600
        %v2612 = vmul.f32 %v2415, %v2600
        %v2613 = vmul.f32 %v2420, %v2600
        %v2614 = vmul.f32 %v2425, %v2600
        %v2615 = vmul.f32 %v2430, %v2600
        %v2616 = vmul.f32 %v2435, %v2600
        %v2617 = vmul.f32 %v2440, %v2600
        %v2618 = vmul.f32 %v2445, %v2600
        %v2619 = vmul.f32 %v2450, %v2600
        %v2620 = vmul.f32 %v2455, %v2600
        %v2621 = vmul.f32 %v2460, %v2600
        %v2622 = vmul.f32 %v2465, %v2600
        %v2623 = vmul.f32 %v2470, %v2600
        %v2624 = vmul.f32 %v2475, %v2600
        %v2625 = vmul.f32 %v2480, %v2600
        %v2626 = vmul.f32 %v2485, %v2600
        %v2627 = vmul.f32 %v2490, %v2600
        %v2628 = vmul.f32 %v2495, %v2600
        %v2629 = vmul.f32 %v2500, %v2600
        %v2630 = vmul.f32 %v2505, %v2600
        %v2631 = vmul.f32 %v2510, %v2600
        %v2632 = vmul.f32 %v2515, %v2600
        %v2633 = vmul.f32 %v2520, %v2600
        %v2634 = vmul.f32 %v2525, %v2600
        %v2635 = vmul.f32 %v2530, %v2600
        %v2636 = vmul.f32 %v2535, %v2600
        %v2637 = vmul.f32 %v2540, %v2600
        %v2638 = vmul.f32 %v2545, %v2600
        %v2639 = vmul.f32 %v2550, %v2600
        %v2640 = vmul.f32 %v2555, %v2600
        %v2641 = vmul.f32 %v2560, %v2600
        %v2642 = vmul.f32 %v2565, %v2600
        %v2643 = vmul.f32 %v2570, %v2600
        %v2644 = vmul.f32 %v2575, %v2600
        %v2645 = vmul.f32 %v2580, %v2600
        %v2646 = vmul.f32 %v2585, %v2600
        %v2647 = vmul.f32 %v2590, %v2600
        %v2648 = vmul.f32 %v2595, %v2600
        %2649 = vset.pattern.permute.xlu0 5
        %2650 = vperm.xlu0 %2649, %v2307
        %v2651 = vpop.permute.xlu0 %2650
        %2653 = vset.pattern.permute.xlu0 5
        %2654 = vperm.xlu0 %2653, %v2308
        %v2655 = vpop.permute.xlu0 %2654
        %2657 = vset.pattern.permute.xlu0 5
        %2658 = vperm.xlu0 %2657, %v2309
        %v2659 = vpop.permute.xlu0 %2658
        %2661 = vset.pattern.permute.xlu0 5
        %2662 = vperm.xlu0 %2661, %v2310
        %v2663 = vpop.permute.xlu0 %2662
        %2665 = vset.pattern.permute.xlu0 5
        %2666 = vperm.xlu0 %2665, %v2311
        %v2667 = vpop.permute.xlu0 %2666
        %2669 = vset.pattern.permute.xlu0 5
        %2670 = vperm.xlu0 %2669, %v2312
        %v2671 = vpop.permute.xlu0 %2670
        %2673 = vset.pattern.permute.xlu0 5
        %2674 = vperm.xlu0 %2673, %v2313
        %v2675 = vpop.permute.xlu0 %2674
        %2677 = vset.pattern.permute.xlu0 5
        %2678 = vperm.xlu0 %2677, %v2314
        %v2679 = vpop.permute.xlu0 %2678
        %2681 = vset.pattern.permute.xlu0 5
        %2682 = vperm.xlu0 %2681, %v2315
        %v2683 = vpop.permute.xlu0 %2682
        %2685 = vset.pattern.permute.xlu0 5
        %2686 = vperm.xlu0 %2685, %v2316
        %v2687 = vpop.permute.xlu0 %2686
        %2689 = vset.pattern.permute.xlu0 5
        %2690 = vperm.xlu0 %2689, %v2317
        %v2691 = vpop.permute.xlu0 %2690
        %2693 = vset.pattern.permute.xlu0 5
        %2694 = vperm.xlu0 %2693, %v2318
        %v2695 = vpop.permute.xlu0 %2694
        %2697 = vset.pattern.permute.xlu0 5
        %2698 = vperm.xlu0 %2697, %v2319
        %v2699 = vpop.permute.xlu0 %2698
        %2701 = vset.pattern.permute.xlu0 5
        %2702 = vperm.xlu0 %2701, %v2320
        %v2703 = vpop.permute.xlu0 %2702
        %2705 = vset.pattern.permute.xlu0 5
        %2706 = vperm.xlu0 %2705, %v2321
        %v2707 = vpop.permute.xlu0 %2706
        %2709 = vset.pattern.permute.xlu0 5
        %2710 = vperm.xlu0 %2709, %v2322
        %v2711 = vpop.permute.xlu0 %2710
        %2713 = vset.pattern.permute.xlu0 5
        %2714 = vperm.xlu0 %2713, %v2323
        %v2715 = vpop.permute.xlu0 %2714
        %2717 = vset.pattern.permute.xlu0 5
        %2718 = vperm.xlu0 %2717, %v2324
        %v2719 = vpop.permute.xlu0 %2718
        %2721 = vset.pattern.permute.xlu0 5
        %2722 = vperm.xlu0 %2721, %v2325
        %v2723 = vpop.permute.xlu0 %2722
        %2725 = vset.pattern.permute.xlu0 5
        %2726 = vperm.xlu0 %2725, %v2326
        %v2727 = vpop.permute.xlu0 %2726
        %2729 = vset.pattern.permute.xlu0 5
        %2730 = vperm.xlu0 %2729, %v2327
        %v2731 = vpop.permute.xlu0 %2730
        %2733 = vset.pattern.permute.xlu0 5
        %2734 = vperm.xlu0 %2733, %v2328
        %v2735 = vpop.permute.xlu0 %2734
        %2737 = vset.pattern.permute.xlu0 5
        %2738 = vperm.xlu0 %2737, %v2329
        %v2739 = vpop.permute.xlu0 %2738
        %2741 = vset.pattern.permute.xlu0 5
        %2742 = vperm.xlu0 %2741, %v2330
        %v2743 = vpop.permute.xlu0 %2742
        %2745 = vset.pattern.permute.xlu0 5
        %2746 = vperm.xlu0 %2745, %v2331
        %v2747 = vpop.permute.xlu0 %2746
        %2749 = vset.pattern.permute.xlu0 5
        %2750 = vperm.xlu0 %2749, %v2332
        %v2751 = vpop.permute.xlu0 %2750
        %2753 = vset.pattern.permute.xlu0 5
        %2754 = vperm.xlu0 %2753, %v2333
        %v2755 = vpop.permute.xlu0 %2754
        %2757 = vset.pattern.permute.xlu0 5
        %2758 = vperm.xlu0 %2757, %v2334
        %v2759 = vpop.permute.xlu0 %2758
        %2761 = vset.pattern.permute.xlu0 5
        %2762 = vperm.xlu0 %2761, %v2335
        %v2763 = vpop.permute.xlu0 %2762
        %2765 = vset.pattern.permute.xlu0 5
        %2766 = vperm.xlu0 %2765, %v2336
        %v2767 = vpop.permute.xlu0 %2766
        %2769 = vset.pattern.permute.xlu0 5
        %2770 = vperm.xlu0 %2769, %v2337
        %v2771 = vpop.permute.xlu0 %2770
        %2773 = vset.pattern.permute.xlu0 5
        %2774 = vperm.xlu0 %2773, %v2338
        %v2775 = vpop.permute.xlu0 %2774
        %2777 = vset.pattern.permute.xlu0 5
        %2778 = vperm.xlu0 %2777, %v2339
        %v2779 = vpop.permute.xlu0 %2778
        %2781 = vset.pattern.permute.xlu0 5
        %2782 = vperm.xlu0 %2781, %v2340
        %v2783 = vpop.permute.xlu0 %2782
        %2785 = vset.pattern.permute.xlu0 5
        %2786 = vperm.xlu0 %2785, %v2341
        %v2787 = vpop.permute.xlu0 %2786
        %2789 = vset.pattern.permute.xlu0 5
        %2790 = vperm.xlu0 %2789, %v2342
        %v2791 = vpop.permute.xlu0 %2790
        %2793 = vset.pattern.permute.xlu0 5
        %2794 = vperm.xlu0 %2793, %v2343
        %v2795 = vpop.permute.xlu0 %2794
        %2797 = vset.pattern.permute.xlu0 5
        %2798 = vperm.xlu0 %2797, %v2344
        %v2799 = vpop.permute.xlu0 %2798
        %2801 = vset.pattern.permute.xlu0 5
        %2802 = vperm.xlu0 %2801, %v2345
        %v2803 = vpop.permute.xlu0 %2802
        %2805 = vset.pattern.permute.xlu0 5
        %2806 = vperm.xlu0 %2805, %v2346
        %v2807 = vpop.permute.xlu0 %2806
        %2809 = vset.pattern.permute.xlu0 5
        %2810 = vperm.xlu0 %2809, %v2347
        %v2811 = vpop.permute.xlu0 %2810
        %2813 = vset.pattern.permute.xlu0 5
        %2814 = vperm.xlu0 %2813, %v2348
        %v2815 = vpop.permute.xlu0 %2814
        %2817 = vset.pattern.permute.xlu0 5
        %2818 = vperm.xlu0 %2817, %v2349
        %v2819 = vpop.permute.xlu0 %2818
        %2821 = vset.pattern.permute.xlu0 5
        %2822 = vperm.xlu0 %2821, %v2350
        %v2823 = vpop.permute.xlu0 %2822
        %2825 = vset.pattern.permute.xlu0 5
        %2826 = vperm.xlu0 %2825, %v2351
        %v2827 = vpop.permute.xlu0 %2826
        %2829 = vset.pattern.permute.xlu0 5
        %2830 = vperm.xlu0 %2829, %v2352
        %v2831 = vpop.permute.xlu0 %2830
        %2833 = vset.pattern.permute.xlu0 5
        %2834 = vperm.xlu0 %2833, %v2353
        %v2835 = vpop.permute.xlu0 %2834
        %2837 = vset.pattern.permute.xlu0 5
        %2838 = vperm.xlu0 %2837, %v2354
        %v2839 = vpop.permute.xlu0 %2838
        %v2841 = vlaneseq
        %v2842 = vshrl.u32 %v2841, 7
        %v2843 = vsub.s32 0, %v2842
        %v2844 = vrot.slane %v2356, %v2843
        %v2845 = vmul.f32 %v2651, %v2844
        %v2846 = vmul.f32 %v2655, %v2844
        %v2847 = vmul.f32 %v2659, %v2844
        %v2848 = vmul.f32 %v2663, %v2844
        %v2849 = vmul.f32 %v2667, %v2844
        %v2850 = vmul.f32 %v2671, %v2844
        %v2851 = vmul.f32 %v2675, %v2844
        %v2852 = vmul.f32 %v2679, %v2844
        %v2853 = vmul.f32 %v2683, %v2844
        %v2854 = vmul.f32 %v2687, %v2844
        %v2855 = vmul.f32 %v2691, %v2844
        %v2856 = vmul.f32 %v2695, %v2844
        %v2857 = vmul.f32 %v2699, %v2844
        %v2858 = vmul.f32 %v2703, %v2844
        %v2859 = vmul.f32 %v2707, %v2844
        %v2860 = vmul.f32 %v2711, %v2844
        %v2861 = vmul.f32 %v2715, %v2844
        %v2862 = vmul.f32 %v2719, %v2844
        %v2863 = vmul.f32 %v2723, %v2844
        %v2864 = vmul.f32 %v2727, %v2844
        %v2865 = vmul.f32 %v2731, %v2844
        %v2866 = vmul.f32 %v2735, %v2844
        %v2867 = vmul.f32 %v2739, %v2844
        %v2868 = vmul.f32 %v2743, %v2844
        %v2869 = vmul.f32 %v2747, %v2844
        %v2870 = vmul.f32 %v2751, %v2844
        %v2871 = vmul.f32 %v2755, %v2844
        %v2872 = vmul.f32 %v2759, %v2844
        %v2873 = vmul.f32 %v2763, %v2844
        %v2874 = vmul.f32 %v2767, %v2844
        %v2875 = vmul.f32 %v2771, %v2844
        %v2876 = vmul.f32 %v2775, %v2844
        %v2877 = vmul.f32 %v2779, %v2844
        %v2878 = vmul.f32 %v2783, %v2844
        %v2879 = vmul.f32 %v2787, %v2844
        %v2880 = vmul.f32 %v2791, %v2844
        %v2881 = vmul.f32 %v2795, %v2844
        %v2882 = vmul.f32 %v2799, %v2844
        %v2883 = vmul.f32 %v2803, %v2844
        %v2884 = vmul.f32 %v2807, %v2844
        %v2885 = vmul.f32 %v2811, %v2844
        %v2886 = vmul.f32 %v2815, %v2844
        %v2887 = vmul.f32 %v2819, %v2844
        %v2888 = vmul.f32 %v2823, %v2844
        %v2889 = vmul.f32 %v2827, %v2844
        %v2890 = vmul.f32 %v2831, %v2844
        %v2891 = vmul.f32 %v2835, %v2844
        %v2892 = vmul.f32 %v2839, %v2844
        %v2893 = vadd.f32 %v2601, %v2845
        %v2894 = vadd.f32 %v2602, %v2846
        %v2895 = vadd.f32 %v2603, %v2847
        %v2896 = vadd.f32 %v2604, %v2848
        %v2897 = vadd.f32 %v2605, %v2849
        %v2898 = vadd.f32 %v2606, %v2850
        %v2899 = vadd.f32 %v2607, %v2851
        %v2900 = vadd.f32 %v2608, %v2852
        %v2901 = vadd.f32 %v2609, %v2853
        %v2902 = vadd.f32 %v2610, %v2854
        %v2903 = vadd.f32 %v2611, %v2855
        %v2904 = vadd.f32 %v2612, %v2856
        %v2905 = vadd.f32 %v2613, %v2857
        %v2906 = vadd.f32 %v2614, %v2858
        %v2907 = vadd.f32 %v2615, %v2859
        %v2908 = vadd.f32 %v2616, %v2860
        %v2909 = vadd.f32 %v2617, %v2861
        %v2910 = vadd.f32 %v2618, %v2862
        %v2911 = vadd.f32 %v2619, %v2863
        %v2912 = vadd.f32 %v2620, %v2864
        %v2913 = vadd.f32 %v2621, %v2865
        %v2914 = vadd.f32 %v2622, %v2866
        %v2915 = vadd.f32 %v2623, %v2867
        %v2916 = vadd.f32 %v2624, %v2868
        %v2917 = vadd.f32 %v2625, %v2869
        %v2918 = vadd.f32 %v2626, %v2870
        %v2919 = vadd.f32 %v2627, %v2871
        %v2920 = vadd.f32 %v2628, %v2872
        %v2921 = vadd.f32 %v2629, %v2873
        %v2922 = vadd.f32 %v2630, %v2874
        %v2923 = vadd.f32 %v2631, %v2875
        %v2924 = vadd.f32 %v2632, %v2876
        %v2925 = vadd.f32 %v2633, %v2877
        %v2926 = vadd.f32 %v2634, %v2878
        %v2927 = vadd.f32 %v2635, %v2879
        %v2928 = vadd.f32 %v2636, %v2880
        %v2929 = vadd.f32 %v2637, %v2881
        %v2930 = vadd.f32 %v2638, %v2882
        %v2931 = vadd.f32 %v2639, %v2883
        %v2932 = vadd.f32 %v2640, %v2884
        %v2933 = vadd.f32 %v2641, %v2885
        %v2934 = vadd.f32 %v2642, %v2886
        %v2935 = vadd.f32 %v2643, %v2887
        %v2936 = vadd.f32 %v2644, %v2888
        %v2937 = vadd.f32 %v2645, %v2889
        %v2938 = vadd.f32 %v2646, %v2890
        %v2939 = vadd.f32 %v2647, %v2891
        %v2940 = vadd.f32 %v2648, %v2892
        %v2941 = vpack.c.bf16 %v2894, %v2893
        %v2942 = vpack.c.bf16 %v2896, %v2895
        %v2943 = vpack.c.bf16 %v2898, %v2897
        %v2944 = vpack.c.bf16 %v2900, %v2899
        %v2945 = vpack.c.bf16 %v2902, %v2901
        %v2946 = vpack.c.bf16 %v2904, %v2903
        %v2947 = vpack.c.bf16 %v2906, %v2905
        %v2948 = vpack.c.bf16 %v2908, %v2907
        %v2949 = vpack.c.bf16 %v2910, %v2909
        %v2950 = vpack.c.bf16 %v2912, %v2911
        %v2951 = vpack.c.bf16 %v2914, %v2913
        %v2952 = vpack.c.bf16 %v2916, %v2915
        %v2953 = vpack.c.bf16 %v2918, %v2917
        %v2954 = vpack.c.bf16 %v2920, %v2919
        %v2955 = vpack.c.bf16 %v2922, %v2921
        %v2956 = vpack.c.bf16 %v2924, %v2923
        %v2957 = vpack.c.bf16 %v2926, %v2925
        %v2958 = vpack.c.bf16 %v2928, %v2927
        %v2959 = vpack.c.bf16 %v2930, %v2929
        %v2960 = vpack.c.bf16 %v2932, %v2931
        %v2961 = vpack.c.bf16 %v2934, %v2933
        %v2962 = vpack.c.bf16 %v2936, %v2935
        %v2963 = vpack.c.bf16 %v2938, %v2937
        %v2964 = vpack.c.bf16 %v2940, %v2939
        %v2989 = vunpack.c.l.b16 %v2941
        %v2990 = vunpack.c.h.b16 %v2941
        %v2991 = vunpack.c.l.b16 %v2942
        %v2992 = vunpack.c.h.b16 %v2942
        %v2993 = vunpack.c.l.b16 %v2943
        %v2994 = vunpack.c.h.b16 %v2943
        %v2995 = vunpack.c.l.b16 %v2944
        %v2996 = vunpack.c.h.b16 %v2944
        %v2997 = vunpack.c.l.b16 %v2945
        %v2998 = vunpack.c.h.b16 %v2945
        %v2999 = vunpack.c.l.b16 %v2946
        %v3000 = vunpack.c.h.b16 %v2946
        %v3001 = vunpack.c.l.b16 %v2947
        %v3002 = vunpack.c.h.b16 %v2947
        %v3003 = vunpack.c.l.b16 %v2948
        %v3004 = vunpack.c.h.b16 %v2948
        %v3005 = vunpack.c.l.b16 %v2949
        %v3006 = vunpack.c.h.b16 %v2949
        %v3007 = vunpack.c.l.b16 %v2950
        %v3008 = vunpack.c.h.b16 %v2950
        %v3009 = vunpack.c.l.b16 %v2951
        %v3010 = vunpack.c.h.b16 %v2951
        %v3011 = vunpack.c.l.b16 %v2952
        %v3012 = vunpack.c.h.b16 %v2952
        %v3013 = vunpack.c.l.b16 %v2953
        %v3014 = vunpack.c.h.b16 %v2953
        %v3015 = vunpack.c.l.b16 %v2954
        %v3016 = vunpack.c.h.b16 %v2954
        %v3017 = vunpack.c.l.b16 %v2955
        %v3018 = vunpack.c.h.b16 %v2955
        %v3019 = vunpack.c.l.b16 %v2956
        %v3020 = vunpack.c.h.b16 %v2956
        %v3021 = vunpack.c.l.b16 %v2957
        %v3022 = vunpack.c.h.b16 %v2957
        %v3023 = vunpack.c.l.b16 %v2958
        %v3024 = vunpack.c.h.b16 %v2958
        %v3025 = vunpack.c.l.b16 %v2959
        %v3026 = vunpack.c.h.b16 %v2959
        %v3027 = vunpack.c.l.b16 %v2960
        %v3028 = vunpack.c.h.b16 %v2960
        %v3029 = vunpack.c.l.b16 %v2961
        %v3030 = vunpack.c.h.b16 %v2961
        %v3031 = vunpack.c.l.b16 %v2962
        %v3032 = vunpack.c.h.b16 %v2962
        %v3033 = vunpack.c.l.b16 %v2963
        %v3034 = vunpack.c.h.b16 %v2963
        %v3035 = vunpack.c.l.b16 %v2964
        %v3036 = vunpack.c.h.b16 %v2964
        %v3037 = vpack.c.b16 %v2989, %v2989
        %v3038 = vpack.c.b16 %v2990, %v2990
        %v3039 = vpack.c.b16 %v2991, %v2991
        %v3040 = vpack.c.b16 %v2992, %v2992
        %v3041 = vpack.c.b16 %v2993, %v2993
        %v3042 = vpack.c.b16 %v2994, %v2994
        %v3043 = vpack.c.b16 %v2995, %v2995
        %v3044 = vpack.c.b16 %v2996, %v2996
        %v3045 = vpack.c.b16 %v2997, %v2997
        %v3046 = vpack.c.b16 %v2998, %v2998
        %v3047 = vpack.c.b16 %v2999, %v2999
        %v3048 = vpack.c.b16 %v3000, %v3000
        %v3049 = vpack.c.b16 %v3001, %v3001
        %v3050 = vpack.c.b16 %v3002, %v3002
        %v3051 = vpack.c.b16 %v3003, %v3003
        %v3052 = vpack.c.b16 %v3004, %v3004
        %v3053 = vpack.c.b16 %v3005, %v3005
        %v3054 = vpack.c.b16 %v3006, %v3006
        %v3055 = vpack.c.b16 %v3007, %v3007
        %v3056 = vpack.c.b16 %v3008, %v3008
        %v3057 = vpack.c.b16 %v3009, %v3009
        %v3058 = vpack.c.b16 %v3010, %v3010
        %v3059 = vpack.c.b16 %v3011, %v3011
        %v3060 = vpack.c.b16 %v3012, %v3012
        %v3061 = vpack.c.b16 %v3013, %v3013
        %v3062 = vpack.c.b16 %v3014, %v3014
        %v3063 = vpack.c.b16 %v3015, %v3015
        %v3064 = vpack.c.b16 %v3016, %v3016
        %v3065 = vpack.c.b16 %v3017, %v3017
        %v3066 = vpack.c.b16 %v3018, %v3018
        %v3067 = vpack.c.b16 %v3019, %v3019
        %v3068 = vpack.c.b16 %v3020, %v3020
        %v3069 = vpack.c.b16 %v3021, %v3021
        %v3070 = vpack.c.b16 %v3022, %v3022
        %v3071 = vpack.c.b16 %v3023, %v3023
        %v3072 = vpack.c.b16 %v3024, %v3024
        %v3073 = vpack.c.b16 %v3025, %v3025
        %v3074 = vpack.c.b16 %v3026, %v3026
        %v3075 = vpack.c.b16 %v3027, %v3027
        %v3076 = vpack.c.b16 %v3028, %v3028
        %v3077 = vpack.c.b16 %v3029, %v3029
        %v3078 = vpack.c.b16 %v3030, %v3030
        %v3079 = vpack.c.b16 %v3031, %v3031
        %v3080 = vpack.c.b16 %v3032, %v3032
        %v3081 = vpack.c.b16 %v3033, %v3033
        %v3082 = vpack.c.b16 %v3034, %v3034
        %v3083 = vpack.c.b16 %v3035, %v3035
        %v3084 = vpack.c.b16 %v3036, %v3036
        %3133 = vst [vmem:[#allocation3 + $0x4] sm:$0xf] %v3037
        %3134 = vst [vmem:[#allocation3 + $0x14] sm:$0xf] %v3038
        %3135 = vst [vmem:[#allocation3 + $0x24] sm:$0xf] %v3039
        %3136 = vst [vmem:[#allocation3 + $0x34] sm:$0xf] %v3040
        %3137 = vst [vmem:[#allocation3 + $0x44] sm:$0xf] %v3041
        %3138 = vst [vmem:[#allocation3 + $0x54] sm:$0xf] %v3042
        %3139 = vst [vmem:[#allocation3 + $0x64] sm:$0xf] %v3043
        %3140 = vst [vmem:[#allocation3 + $0x74] sm:$0xf] %v3044
        %3141 = vst [vmem:[#allocation3 + $0x84] sm:$0xf] %v3045
        %3142 = vst [vmem:[#allocation3 + $0x94] sm:$0xf] %v3046
        %3143 = vst [vmem:[#allocation3 + $0xa4] sm:$0xf] %v3047
        %3144 = vst [vmem:[#allocation3 + $0xb4] sm:$0xf] %v3048
        %3145 = vst [vmem:[#allocation3 + $0xc4] sm:$0xf] %v3049
        %3146 = vst [vmem:[#allocation3 + $0xd4] sm:$0xf] %v3050
        %3147 = vst [vmem:[#allocation3 + $0xe4] sm:$0xf] %v3051
        %3148 = vst [vmem:[#allocation3 + $0xf4] sm:$0xf] %v3052
        %3149 = vst [vmem:[#allocation3 + $0x104] sm:$0xf] %v3053
        %3150 = vst [vmem:[#allocation3 + $0x114] sm:$0xf] %v3054
        %3151 = vst [vmem:[#allocation3 + $0x124] sm:$0xf] %v3055
        %3152 = vst [vmem:[#allocation3 + $0x134] sm:$0xf] %v3056
        %3153 = vst [vmem:[#allocation3 + $0x144] sm:$0xf] %v3057
        %3154 = vst [vmem:[#allocation3 + $0x154] sm:$0xf] %v3058
        %3155 = vst [vmem:[#allocation3 + $0x164] sm:$0xf] %v3059
        %3156 = vst [vmem:[#allocation3 + $0x174] sm:$0xf] %v3060
        %3157 = vst [vmem:[#allocation3 + $0x184] sm:$0xf] %v3061
        %3158 = vst [vmem:[#allocation3 + $0x194] sm:$0xf] %v3062
        %3159 = vst [vmem:[#allocation3 + $0x1a4] sm:$0xf] %v3063
        %3160 = vst [vmem:[#allocation3 + $0x1b4] sm:$0xf] %v3064
        %3161 = vst [vmem:[#allocation3 + $0x1c4] sm:$0xf] %v3065
        %3162 = vst [vmem:[#allocation3 + $0x1d4] sm:$0xf] %v3066
        %3163 = vst [vmem:[#allocation3 + $0x1e4] sm:$0xf] %v3067
        %3164 = vst [vmem:[#allocation3 + $0x1f4] sm:$0xf] %v3068
        %3165 = vst [vmem:[#allocation3 + $0x204] sm:$0xf] %v3069
        %3166 = vst [vmem:[#allocation3 + $0x214] sm:$0xf] %v3070
        %3167 = vst [vmem:[#allocation3 + $0x224] sm:$0xf] %v3071
        %3168 = vst [vmem:[#allocation3 + $0x234] sm:$0xf] %v3072
        %3169 = vst [vmem:[#allocation3 + $0x244] sm:$0xf] %v3073
        %3170 = vst [vmem:[#allocation3 + $0x254] sm:$0xf] %v3074
        %3171 = vst [vmem:[#allocation3 + $0x264] sm:$0xf] %v3075
        %3172 = vst [vmem:[#allocation3 + $0x274] sm:$0xf] %v3076
        %3173 = vst [vmem:[#allocation3 + $0x284] sm:$0xf] %v3077
        %3174 = vst [vmem:[#allocation3 + $0x294] sm:$0xf] %v3078
        %3175 = vst [vmem:[#allocation3 + $0x2a4] sm:$0xf] %v3079
        %3176 = vst [vmem:[#allocation3 + $0x2b4] sm:$0xf] %v3080
        %3177 = vst [vmem:[#allocation3 + $0x2c4] sm:$0xf] %v3081
        %3178 = vst [vmem:[#allocation3 + $0x2d4] sm:$0xf] %v3082
        %3179 = vst [vmem:[#allocation3 + $0x2e4] sm:$0xf] %v3083
        %3180 = vst [vmem:[#allocation3 + $0x2f4] sm:$0xf] %v3084
        %v3181 = vld [vmem:[%s232] sm:$0xff]
        %v3182 = vld [vmem:[%s232 + $0x8] sm:$0xff]
        %v3183 = vld [vmem:[%s232 + $0x10] sm:$0xff]
        %v3184 = vld [vmem:[%s232 + $0x18] sm:$0xff]
        %v3185 = vld [vmem:[%s232 + $0x20] sm:$0xff]
        %v3186 = vld [vmem:[%s232 + $0x28] sm:$0xff]
        %v3187 = vld [vmem:[%s232 + $0x30] sm:$0xff]
        %v3188 = vld [vmem:[%s232 + $0x38] sm:$0xff]
        %v3189 = vld [vmem:[%s232 + $0x40] sm:$0xff]
        %v3190 = vld [vmem:[%s232 + $0x48] sm:$0xff]
        %v3191 = vld [vmem:[%s232 + $0x50] sm:$0xff]
        %v3192 = vld [vmem:[%s232 + $0x58] sm:$0xff]
        %v3193 = vld [vmem:[%s232 + $0x60] sm:$0xff]
        %v3194 = vld [vmem:[%s232 + $0x68] sm:$0xff]
        %v3195 = vld [vmem:[%s232 + $0x70] sm:$0xff]
        %v3196 = vld [vmem:[%s232 + $0x78] sm:$0xff]
        %v3197 = vld [vmem:[%s232 + $0x80] sm:$0xff]
        %v3198 = vld [vmem:[%s232 + $0x88] sm:$0xff]
        %v3199 = vld [vmem:[%s232 + $0x90] sm:$0xff]
        %v3200 = vld [vmem:[%s232 + $0x98] sm:$0xff]
        %v3201 = vld [vmem:[%s232 + $0xa0] sm:$0xff]
        %v3202 = vld [vmem:[%s232 + $0xa8] sm:$0xff]
        %v3203 = vld [vmem:[%s232 + $0xb0] sm:$0xff]
        %v3204 = vld [vmem:[%s232 + $0xb8] sm:$0xff]
        %v3205 = vld [vmem:[%s232 + $0xc0] sm:$0xff]
        %v3206 = vld [vmem:[%s232 + $0xc8] sm:$0xff]
        %v3207 = vld [vmem:[%s232 + $0xd0] sm:$0xff]
        %v3208 = vld [vmem:[%s232 + $0xd8] sm:$0xff]
        %v3209 = vld [vmem:[%s232 + $0xe0] sm:$0xff]
        %v3210 = vld [vmem:[%s232 + $0xe8] sm:$0xff]
        %v3211 = vld [vmem:[%s232 + $0xf0] sm:$0xff]
        %v3212 = vld [vmem:[%s232 + $0xf8] sm:$0xff]
        %v3213 = vld [vmem:[%s232 + $0x100] sm:$0xff]
        %v3214 = vld [vmem:[%s232 + $0x108] sm:$0xff]
        %v3215 = vld [vmem:[%s232 + $0x110] sm:$0xff]
        %v3216 = vld [vmem:[%s232 + $0x118] sm:$0xff]
        %v3217 = vld [vmem:[%s232 + $0x120] sm:$0xff]
        %v3218 = vld [vmem:[%s232 + $0x128] sm:$0xff]
        %v3219 = vld [vmem:[%s232 + $0x130] sm:$0xff]
        %v3220 = vld [vmem:[%s232 + $0x138] sm:$0xff]
        %v3221 = vld [vmem:[%s232 + $0x140] sm:$0xff]
        %v3222 = vld [vmem:[%s232 + $0x148] sm:$0xff]
        %v3223 = vld [vmem:[%s232 + $0x150] sm:$0xff]
        %v3224 = vld [vmem:[%s232 + $0x158] sm:$0xff]
        %v3225 = vld [vmem:[%s232 + $0x160] sm:$0xff]
        %v3226 = vld [vmem:[%s232 + $0x168] sm:$0xff]
        %v3227 = vld [vmem:[%s232 + $0x170] sm:$0xff]
        %v3228 = vld [vmem:[%s232 + $0x178] sm:$0xff]
        %v3229 = vld [vmem:[%s2 + $0x2] sm:$0x1]
        %v3230 = vld [vmem:[%s3 + $0x2] sm:$0x1]
        %3232 = vset.pattern.permute.xlu0 2
        %3233 = vperm.xlu0 %3232, %v3181
        %v3234 = vpop.permute.xlu0 %3233
        %3237 = vset.pattern.permute.xlu0 2
        %3238 = vperm.xlu0 %3237, %v3182
        %v3239 = vpop.permute.xlu0 %3238
        %3242 = vset.pattern.permute.xlu0 2
        %3243 = vperm.xlu0 %3242, %v3183
        %v3244 = vpop.permute.xlu0 %3243
        %3247 = vset.pattern.permute.xlu0 2
        %3248 = vperm.xlu0 %3247, %v3184
        %v3249 = vpop.permute.xlu0 %3248
        %3252 = vset.pattern.permute.xlu0 2
        %3253 = vperm.xlu0 %3252, %v3185
        %v3254 = vpop.permute.xlu0 %3253
        %3257 = vset.pattern.permute.xlu0 2
        %3258 = vperm.xlu0 %3257, %v3186
        %v3259 = vpop.permute.xlu0 %3258
        %3262 = vset.pattern.permute.xlu0 2
        %3263 = vperm.xlu0 %3262, %v3187
        %v3264 = vpop.permute.xlu0 %3263
        %3267 = vset.pattern.permute.xlu0 2
        %3268 = vperm.xlu0 %3267, %v3188
        %v3269 = vpop.permute.xlu0 %3268
        %3272 = vset.pattern.permute.xlu0 2
        %3273 = vperm.xlu0 %3272, %v3189
        %v3274 = vpop.permute.xlu0 %3273
        %3277 = vset.pattern.permute.xlu0 2
        %3278 = vperm.xlu0 %3277, %v3190
        %v3279 = vpop.permute.xlu0 %3278
        %3282 = vset.pattern.permute.xlu0 2
        %3283 = vperm.xlu0 %3282, %v3191
        %v3284 = vpop.permute.xlu0 %3283
        %3287 = vset.pattern.permute.xlu0 2
        %3288 = vperm.xlu0 %3287, %v3192
        %v3289 = vpop.permute.xlu0 %3288
        %3292 = vset.pattern.permute.xlu0 2
        %3293 = vperm.xlu0 %3292, %v3193
        %v3294 = vpop.permute.xlu0 %3293
        %3297 = vset.pattern.permute.xlu0 2
        %3298 = vperm.xlu0 %3297, %v3194
        %v3299 = vpop.permute.xlu0 %3298
        %3302 = vset.pattern.permute.xlu0 2
        %3303 = vperm.xlu0 %3302, %v3195
        %v3304 = vpop.permute.xlu0 %3303
        %3307 = vset.pattern.permute.xlu0 2
        %3308 = vperm.xlu0 %3307, %v3196
        %v3309 = vpop.permute.xlu0 %3308
        %3312 = vset.pattern.permute.xlu0 2
        %3313 = vperm.xlu0 %3312, %v3197
        %v3314 = vpop.permute.xlu0 %3313
        %3317 = vset.pattern.permute.xlu0 2
        %3318 = vperm.xlu0 %3317, %v3198
        %v3319 = vpop.permute.xlu0 %3318
        %3322 = vset.pattern.permute.xlu0 2
        %3323 = vperm.xlu0 %3322, %v3199
        %v3324 = vpop.permute.xlu0 %3323
        %3327 = vset.pattern.permute.xlu0 2
        %3328 = vperm.xlu0 %3327, %v3200
        %v3329 = vpop.permute.xlu0 %3328
        %3332 = vset.pattern.permute.xlu0 2
        %3333 = vperm.xlu0 %3332, %v3201
        %v3334 = vpop.permute.xlu0 %3333
        %3337 = vset.pattern.permute.xlu0 2
        %3338 = vperm.xlu0 %3337, %v3202
        %v3339 = vpop.permute.xlu0 %3338
        %3342 = vset.pattern.permute.xlu0 2
        %3343 = vperm.xlu0 %3342, %v3203
        %v3344 = vpop.permute.xlu0 %3343
        %3347 = vset.pattern.permute.xlu0 2
        %3348 = vperm.xlu0 %3347, %v3204
        %v3349 = vpop.permute.xlu0 %3348
        %3352 = vset.pattern.permute.xlu0 2
        %3353 = vperm.xlu0 %3352, %v3205
        %v3354 = vpop.permute.xlu0 %3353
        %3357 = vset.pattern.permute.xlu0 2
        %3358 = vperm.xlu0 %3357, %v3206
        %v3359 = vpop.permute.xlu0 %3358
        %3362 = vset.pattern.permute.xlu0 2
        %3363 = vperm.xlu0 %3362, %v3207
        %v3364 = vpop.permute.xlu0 %3363
        %3367 = vset.pattern.permute.xlu0 2
        %3368 = vperm.xlu0 %3367, %v3208
        %v3369 = vpop.permute.xlu0 %3368
        %3372 = vset.pattern.permute.xlu0 2
        %3373 = vperm.xlu0 %3372, %v3209
        %v3374 = vpop.permute.xlu0 %3373
        %3377 = vset.pattern.permute.xlu0 2
        %3378 = vperm.xlu0 %3377, %v3210
        %v3379 = vpop.permute.xlu0 %3378
        %3382 = vset.pattern.permute.xlu0 2
        %3383 = vperm.xlu0 %3382, %v3211
        %v3384 = vpop.permute.xlu0 %3383
        %3387 = vset.pattern.permute.xlu0 2
        %3388 = vperm.xlu0 %3387, %v3212
        %v3389 = vpop.permute.xlu0 %3388
        %3392 = vset.pattern.permute.xlu0 2
        %3393 = vperm.xlu0 %3392, %v3213
        %v3394 = vpop.permute.xlu0 %3393
        %3397 = vset.pattern.permute.xlu0 2
        %3398 = vperm.xlu0 %3397, %v3214
        %v3399 = vpop.permute.xlu0 %3398
        %3402 = vset.pattern.permute.xlu0 2
        %3403 = vperm.xlu0 %3402, %v3215
        %v3404 = vpop.permute.xlu0 %3403
        %3407 = vset.pattern.permute.xlu0 2
        %3408 = vperm.xlu0 %3407, %v3216
        %v3409 = vpop.permute.xlu0 %3408
        %3412 = vset.pattern.permute.xlu0 2
        %3413 = vperm.xlu0 %3412, %v3217
        %v3414 = vpop.permute.xlu0 %3413
        %3417 = vset.pattern.permute.xlu0 2
        %3418 = vperm.xlu0 %3417, %v3218
        %v3419 = vpop.permute.xlu0 %3418
        %3422 = vset.pattern.permute.xlu0 2
        %3423 = vperm.xlu0 %3422, %v3219
        %v3424 = vpop.permute.xlu0 %3423
        %3427 = vset.pattern.permute.xlu0 2
        %3428 = vperm.xlu0 %3427, %v3220
        %v3429 = vpop.permute.xlu0 %3428
        %3432 = vset.pattern.permute.xlu0 2
        %3433 = vperm.xlu0 %3432, %v3221
        %v3434 = vpop.permute.xlu0 %3433
        %3437 = vset.pattern.permute.xlu0 2
        %3438 = vperm.xlu0 %3437, %v3222
        %v3439 = vpop.permute.xlu0 %3438
        %3442 = vset.pattern.permute.xlu0 2
        %3443 = vperm.xlu0 %3442, %v3223
        %v3444 = vpop.permute.xlu0 %3443
        %3447 = vset.pattern.permute.xlu0 2
        %3448 = vperm.xlu0 %3447, %v3224
        %v3449 = vpop.permute.xlu0 %3448
        %3452 = vset.pattern.permute.xlu0 2
        %3453 = vperm.xlu0 %3452, %v3225
        %v3454 = vpop.permute.xlu0 %3453
        %3457 = vset.pattern.permute.xlu0 2
        %3458 = vperm.xlu0 %3457, %v3226
        %v3459 = vpop.permute.xlu0 %3458
        %3462 = vset.pattern.permute.xlu0 2
        %3463 = vperm.xlu0 %3462, %v3227
        %v3464 = vpop.permute.xlu0 %3463
        %3467 = vset.pattern.permute.xlu0 2
        %3468 = vperm.xlu0 %3467, %v3228
        %v3469 = vpop.permute.xlu0 %3468
        %v3471 = vlaneseq
        %v3472 = vshrl.u32 %v3471, 7
        %v3473 = vsub.s32 0, %v3472
        %v3474 = vrot.slane %v3229, %v3473
        %v3475 = vmul.f32 %v3234, %v3474
        %v3476 = vmul.f32 %v3239, %v3474
        %v3477 = vmul.f32 %v3244, %v3474
        %v3478 = vmul.f32 %v3249, %v3474
        %v3479 = vmul.f32 %v3254, %v3474
        %v3480 = vmul.f32 %v3259, %v3474
        %v3481 = vmul.f32 %v3264, %v3474
        %v3482 = vmul.f32 %v3269, %v3474
        %v3483 = vmul.f32 %v3274, %v3474
        %v3484 = vmul.f32 %v3279, %v3474
        %v3485 = vmul.f32 %v3284, %v3474
        %v3486 = vmul.f32 %v3289, %v3474
        %v3487 = vmul.f32 %v3294, %v3474
        %v3488 = vmul.f32 %v3299, %v3474
        %v3489 = vmul.f32 %v3304, %v3474
        %v3490 = vmul.f32 %v3309, %v3474
        %v3491 = vmul.f32 %v3314, %v3474
        %v3492 = vmul.f32 %v3319, %v3474
        %v3493 = vmul.f32 %v3324, %v3474
        %v3494 = vmul.f32 %v3329, %v3474
        %v3495 = vmul.f32 %v3334, %v3474
        %v3496 = vmul.f32 %v3339, %v3474
        %v3497 = vmul.f32 %v3344, %v3474
        %v3498 = vmul.f32 %v3349, %v3474
        %v3499 = vmul.f32 %v3354, %v3474
        %v3500 = vmul.f32 %v3359, %v3474
        %v3501 = vmul.f32 %v3364, %v3474
        %v3502 = vmul.f32 %v3369, %v3474
        %v3503 = vmul.f32 %v3374, %v3474
        %v3504 = vmul.f32 %v3379, %v3474
        %v3505 = vmul.f32 %v3384, %v3474
        %v3506 = vmul.f32 %v3389, %v3474
        %v3507 = vmul.f32 %v3394, %v3474
        %v3508 = vmul.f32 %v3399, %v3474
        %v3509 = vmul.f32 %v3404, %v3474
        %v3510 = vmul.f32 %v3409, %v3474
        %v3511 = vmul.f32 %v3414, %v3474
        %v3512 = vmul.f32 %v3419, %v3474
        %v3513 = vmul.f32 %v3424, %v3474
        %v3514 = vmul.f32 %v3429, %v3474
        %v3515 = vmul.f32 %v3434, %v3474
        %v3516 = vmul.f32 %v3439, %v3474
        %v3517 = vmul.f32 %v3444, %v3474
        %v3518 = vmul.f32 %v3449, %v3474
        %v3519 = vmul.f32 %v3454, %v3474
        %v3520 = vmul.f32 %v3459, %v3474
        %v3521 = vmul.f32 %v3464, %v3474
        %v3522 = vmul.f32 %v3469, %v3474
        %3523 = vset.pattern.permute.xlu0 6
        %3524 = vperm.xlu0 %3523, %v3181
        %v3525 = vpop.permute.xlu0 %3524
        %3527 = vset.pattern.permute.xlu0 6
        %3528 = vperm.xlu0 %3527, %v3182
        %v3529 = vpop.permute.xlu0 %3528
        %3531 = vset.pattern.permute.xlu0 6
        %3532 = vperm.xlu0 %3531, %v3183
        %v3533 = vpop.permute.xlu0 %3532
        %3535 = vset.pattern.permute.xlu0 6
        %3536 = vperm.xlu0 %3535, %v3184
        %v3537 = vpop.permute.xlu0 %3536
        %3539 = vset.pattern.permute.xlu0 6
        %3540 = vperm.xlu0 %3539, %v3185
        %v3541 = vpop.permute.xlu0 %3540
        %3543 = vset.pattern.permute.xlu0 6
        %3544 = vperm.xlu0 %3543, %v3186
        %v3545 = vpop.permute.xlu0 %3544
        %3547 = vset.pattern.permute.xlu0 6
        %3548 = vperm.xlu0 %3547, %v3187
        %v3549 = vpop.permute.xlu0 %3548
        %3551 = vset.pattern.permute.xlu0 6
        %3552 = vperm.xlu0 %3551, %v3188
        %v3553 = vpop.permute.xlu0 %3552
        %3555 = vset.pattern.permute.xlu0 6
        %3556 = vperm.xlu0 %3555, %v3189
        %v3557 = vpop.permute.xlu0 %3556
        %3559 = vset.pattern.permute.xlu0 6
        %3560 = vperm.xlu0 %3559, %v3190
        %v3561 = vpop.permute.xlu0 %3560
        %3563 = vset.pattern.permute.xlu0 6
        %3564 = vperm.xlu0 %3563, %v3191
        %v3565 = vpop.permute.xlu0 %3564
        %3567 = vset.pattern.permute.xlu0 6
        %3568 = vperm.xlu0 %3567, %v3192
        %v3569 = vpop.permute.xlu0 %3568
        %3571 = vset.pattern.permute.xlu0 6
        %3572 = vperm.xlu0 %3571, %v3193
        %v3573 = vpop.permute.xlu0 %3572
        %3575 = vset.pattern.permute.xlu0 6
        %3576 = vperm.xlu0 %3575, %v3194
        %v3577 = vpop.permute.xlu0 %3576
        %3579 = vset.pattern.permute.xlu0 6
        %3580 = vperm.xlu0 %3579, %v3195
        %v3581 = vpop.permute.xlu0 %3580
        %3583 = vset.pattern.permute.xlu0 6
        %3584 = vperm.xlu0 %3583, %v3196
        %v3585 = vpop.permute.xlu0 %3584
        %3587 = vset.pattern.permute.xlu0 6
        %3588 = vperm.xlu0 %3587, %v3197
        %v3589 = vpop.permute.xlu0 %3588
        %3591 = vset.pattern.permute.xlu0 6
        %3592 = vperm.xlu0 %3591, %v3198
        %v3593 = vpop.permute.xlu0 %3592
        %3595 = vset.pattern.permute.xlu0 6
        %3596 = vperm.xlu0 %3595, %v3199
        %v3597 = vpop.permute.xlu0 %3596
        %3599 = vset.pattern.permute.xlu0 6
        %3600 = vperm.xlu0 %3599, %v3200
        %v3601 = vpop.permute.xlu0 %3600
        %3603 = vset.pattern.permute.xlu0 6
        %3604 = vperm.xlu0 %3603, %v3201
        %v3605 = vpop.permute.xlu0 %3604
        %3607 = vset.pattern.permute.xlu0 6
        %3608 = vperm.xlu0 %3607, %v3202
        %v3609 = vpop.permute.xlu0 %3608
        %3611 = vset.pattern.permute.xlu0 6
        %3612 = vperm.xlu0 %3611, %v3203
        %v3613 = vpop.permute.xlu0 %3612
        %3615 = vset.pattern.permute.xlu0 6
        %3616 = vperm.xlu0 %3615, %v3204
        %v3617 = vpop.permute.xlu0 %3616
        %3619 = vset.pattern.permute.xlu0 6
        %3620 = vperm.xlu0 %3619, %v3205
        %v3621 = vpop.permute.xlu0 %3620
        %3623 = vset.pattern.permute.xlu0 6
        %3624 = vperm.xlu0 %3623, %v3206
        %v3625 = vpop.permute.xlu0 %3624
        %3627 = vset.pattern.permute.xlu0 6
        %3628 = vperm.xlu0 %3627, %v3207
        %v3629 = vpop.permute.xlu0 %3628
        %3631 = vset.pattern.permute.xlu0 6
        %3632 = vperm.xlu0 %3631, %v3208
        %v3633 = vpop.permute.xlu0 %3632
        %3635 = vset.pattern.permute.xlu0 6
        %3636 = vperm.xlu0 %3635, %v3209
        %v3637 = vpop.permute.xlu0 %3636
        %3639 = vset.pattern.permute.xlu0 6
        %3640 = vperm.xlu0 %3639, %v3210
        %v3641 = vpop.permute.xlu0 %3640
        %3643 = vset.pattern.permute.xlu0 6
        %3644 = vperm.xlu0 %3643, %v3211
        %v3645 = vpop.permute.xlu0 %3644
        %3647 = vset.pattern.permute.xlu0 6
        %3648 = vperm.xlu0 %3647, %v3212
        %v3649 = vpop.permute.xlu0 %3648
        %3651 = vset.pattern.permute.xlu0 6
        %3652 = vperm.xlu0 %3651, %v3213
        %v3653 = vpop.permute.xlu0 %3652
        %3655 = vset.pattern.permute.xlu0 6
        %3656 = vperm.xlu0 %3655, %v3214
        %v3657 = vpop.permute.xlu0 %3656
        %3659 = vset.pattern.permute.xlu0 6
        %3660 = vperm.xlu0 %3659, %v3215
        %v3661 = vpop.permute.xlu0 %3660
        %3663 = vset.pattern.permute.xlu0 6
        %3664 = vperm.xlu0 %3663, %v3216
        %v3665 = vpop.permute.xlu0 %3664
        %3667 = vset.pattern.permute.xlu0 6
        %3668 = vperm.xlu0 %3667, %v3217
        %v3669 = vpop.permute.xlu0 %3668
        %3671 = vset.pattern.permute.xlu0 6
        %3672 = vperm.xlu0 %3671, %v3218
        %v3673 = vpop.permute.xlu0 %3672
        %3675 = vset.pattern.permute.xlu0 6
        %3676 = vperm.xlu0 %3675, %v3219
        %v3677 = vpop.permute.xlu0 %3676
        %3679 = vset.pattern.permute.xlu0 6
        %3680 = vperm.xlu0 %3679, %v3220
        %v3681 = vpop.permute.xlu0 %3680
        %3683 = vset.pattern.permute.xlu0 6
        %3684 = vperm.xlu0 %3683, %v3221
        %v3685 = vpop.permute.xlu0 %3684
        %3687 = vset.pattern.permute.xlu0 6
        %3688 = vperm.xlu0 %3687, %v3222
        %v3689 = vpop.permute.xlu0 %3688
        %3691 = vset.pattern.permute.xlu0 6
        %3692 = vperm.xlu0 %3691, %v3223
        %v3693 = vpop.permute.xlu0 %3692
        %3695 = vset.pattern.permute.xlu0 6
        %3696 = vperm.xlu0 %3695, %v3224
        %v3697 = vpop.permute.xlu0 %3696
        %3699 = vset.pattern.permute.xlu0 6
        %3700 = vperm.xlu0 %3699, %v3225
        %v3701 = vpop.permute.xlu0 %3700
        %3703 = vset.pattern.permute.xlu0 6
        %3704 = vperm.xlu0 %3703, %v3226
        %v3705 = vpop.permute.xlu0 %3704
        %3707 = vset.pattern.permute.xlu0 6
        %3708 = vperm.xlu0 %3707, %v3227
        %v3709 = vpop.permute.xlu0 %3708
        %3711 = vset.pattern.permute.xlu0 6
        %3712 = vperm.xlu0 %3711, %v3228
        %v3713 = vpop.permute.xlu0 %3712
        %v3715 = vlaneseq
        %v3716 = vshrl.u32 %v3715, 7
        %v3717 = vsub.s32 0, %v3716
        %v3718 = vrot.slane %v3230, %v3717
        %v3719 = vmul.f32 %v3525, %v3718
        %v3720 = vmul.f32 %v3529, %v3718
        %v3721 = vmul.f32 %v3533, %v3718
        %v3722 = vmul.f32 %v3537, %v3718
        %v3723 = vmul.f32 %v3541, %v3718
        %v3724 = vmul.f32 %v3545, %v3718
        %v3725 = vmul.f32 %v3549, %v3718
        %v3726 = vmul.f32 %v3553, %v3718
        %v3727 = vmul.f32 %v3557, %v3718
        %v3728 = vmul.f32 %v3561, %v3718
        %v3729 = vmul.f32 %v3565, %v3718
        %v3730 = vmul.f32 %v3569, %v3718
        %v3731 = vmul.f32 %v3573, %v3718
        %v3732 = vmul.f32 %v3577, %v3718
        %v3733 = vmul.f32 %v3581, %v3718
        %v3734 = vmul.f32 %v3585, %v3718
        %v3735 = vmul.f32 %v3589, %v3718
        %v3736 = vmul.f32 %v3593, %v3718
        %v3737 = vmul.f32 %v3597, %v3718
        %v3738 = vmul.f32 %v3601, %v3718
        %v3739 = vmul.f32 %v3605, %v3718
        %v3740 = vmul.f32 %v3609, %v3718
        %v3741 = vmul.f32 %v3613, %v3718
        %v3742 = vmul.f32 %v3617, %v3718
        %v3743 = vmul.f32 %v3621, %v3718
        %v3744 = vmul.f32 %v3625, %v3718
        %v3745 = vmul.f32 %v3629, %v3718
        %v3746 = vmul.f32 %v3633, %v3718
        %v3747 = vmul.f32 %v3637, %v3718
        %v3748 = vmul.f32 %v3641, %v3718
        %v3749 = vmul.f32 %v3645, %v3718
        %v3750 = vmul.f32 %v3649, %v3718
        %v3751 = vmul.f32 %v3653, %v3718
        %v3752 = vmul.f32 %v3657, %v3718
        %v3753 = vmul.f32 %v3661, %v3718
        %v3754 = vmul.f32 %v3665, %v3718
        %v3755 = vmul.f32 %v3669, %v3718
        %v3756 = vmul.f32 %v3673, %v3718
        %v3757 = vmul.f32 %v3677, %v3718
        %v3758 = vmul.f32 %v3681, %v3718
        %v3759 = vmul.f32 %v3685, %v3718
        %v3760 = vmul.f32 %v3689, %v3718
        %v3761 = vmul.f32 %v3693, %v3718
        %v3762 = vmul.f32 %v3697, %v3718
        %v3763 = vmul.f32 %v3701, %v3718
        %v3764 = vmul.f32 %v3705, %v3718
        %v3765 = vmul.f32 %v3709, %v3718
        %v3766 = vmul.f32 %v3713, %v3718
        %v3767 = vadd.f32 %v3475, %v3719
        %v3768 = vadd.f32 %v3476, %v3720
        %v3769 = vadd.f32 %v3477, %v3721
        %v3770 = vadd.f32 %v3478, %v3722
        %v3771 = vadd.f32 %v3479, %v3723
        %v3772 = vadd.f32 %v3480, %v3724
        %v3773 = vadd.f32 %v3481, %v3725
        %v3774 = vadd.f32 %v3482, %v3726
        %v3775 = vadd.f32 %v3483, %v3727
        %v3776 = vadd.f32 %v3484, %v3728
        %v3777 = vadd.f32 %v3485, %v3729
        %v3778 = vadd.f32 %v3486, %v3730
        %v3779 = vadd.f32 %v3487, %v3731
        %v3780 = vadd.f32 %v3488, %v3732
        %v3781 = vadd.f32 %v3489, %v3733
        %v3782 = vadd.f32 %v3490, %v3734
        %v3783 = vadd.f32 %v3491, %v3735
        %v3784 = vadd.f32 %v3492, %v3736
        %v3785 = vadd.f32 %v3493, %v3737
        %v3786 = vadd.f32 %v3494, %v3738
        %v3787 = vadd.f32 %v3495, %v3739
        %v3788 = vadd.f32 %v3496, %v3740
        %v3789 = vadd.f32 %v3497, %v3741
        %v3790 = vadd.f32 %v3498, %v3742
        %v3791 = vadd.f32 %v3499, %v3743
        %v3792 = vadd.f32 %v3500, %v3744
        %v3793 = vadd.f32 %v3501, %v3745
        %v3794 = vadd.f32 %v3502, %v3746
        %v3795 = vadd.f32 %v3503, %v3747
        %v3796 = vadd.f32 %v3504, %v3748
        %v3797 = vadd.f32 %v3505, %v3749
        %v3798 = vadd.f32 %v3506, %v3750
        %v3799 = vadd.f32 %v3507, %v3751
        %v3800 = vadd.f32 %v3508, %v3752
        %v3801 = vadd.f32 %v3509, %v3753
        %v3802 = vadd.f32 %v3510, %v3754
        %v3803 = vadd.f32 %v3511, %v3755
        %v3804 = vadd.f32 %v3512, %v3756
        %v3805 = vadd.f32 %v3513, %v3757
        %v3806 = vadd.f32 %v3514, %v3758
        %v3807 = vadd.f32 %v3515, %v3759
        %v3808 = vadd.f32 %v3516, %v3760
        %v3809 = vadd.f32 %v3517, %v3761
        %v3810 = vadd.f32 %v3518, %v3762
        %v3811 = vadd.f32 %v3519, %v3763
        %v3812 = vadd.f32 %v3520, %v3764
        %v3813 = vadd.f32 %v3521, %v3765
        %v3814 = vadd.f32 %v3522, %v3766
        %v3815 = vpack.c.bf16 %v3768, %v3767
        %v3816 = vpack.c.bf16 %v3770, %v3769
        %v3817 = vpack.c.bf16 %v3772, %v3771
        %v3818 = vpack.c.bf16 %v3774, %v3773
        %v3819 = vpack.c.bf16 %v3776, %v3775
        %v3820 = vpack.c.bf16 %v3778, %v3777
        %v3821 = vpack.c.bf16 %v3780, %v3779
        %v3822 = vpack.c.bf16 %v3782, %v3781
        %v3823 = vpack.c.bf16 %v3784, %v3783
        %v3824 = vpack.c.bf16 %v3786, %v3785
        %v3825 = vpack.c.bf16 %v3788, %v3787
        %v3826 = vpack.c.bf16 %v3790, %v3789
        %v3827 = vpack.c.bf16 %v3792, %v3791
        %v3828 = vpack.c.bf16 %v3794, %v3793
        %v3829 = vpack.c.bf16 %v3796, %v3795
        %v3830 = vpack.c.bf16 %v3798, %v3797
        %v3831 = vpack.c.bf16 %v3800, %v3799
        %v3832 = vpack.c.bf16 %v3802, %v3801
        %v3833 = vpack.c.bf16 %v3804, %v3803
        %v3834 = vpack.c.bf16 %v3806, %v3805
        %v3835 = vpack.c.bf16 %v3808, %v3807
        %v3836 = vpack.c.bf16 %v3810, %v3809
        %v3837 = vpack.c.bf16 %v3812, %v3811
        %v3838 = vpack.c.bf16 %v3814, %v3813
        %v3863 = vunpack.c.l.b16 %v3815
        %v3864 = vunpack.c.h.b16 %v3815
        %v3865 = vunpack.c.l.b16 %v3816
        %v3866 = vunpack.c.h.b16 %v3816
        %v3867 = vunpack.c.l.b16 %v3817
        %v3868 = vunpack.c.h.b16 %v3817
        %v3869 = vunpack.c.l.b16 %v3818
        %v3870 = vunpack.c.h.b16 %v3818
        %v3871 = vunpack.c.l.b16 %v3819
        %v3872 = vunpack.c.h.b16 %v3819
        %v3873 = vunpack.c.l.b16 %v3820
        %v3874 = vunpack.c.h.b16 %v3820
        %v3875 = vunpack.c.l.b16 %v3821
        %v3876 = vunpack.c.h.b16 %v3821
        %v3877 = vunpack.c.l.b16 %v3822
        %v3878 = vunpack.c.h.b16 %v3822
        %v3879 = vunpack.c.l.b16 %v3823
        %v3880 = vunpack.c.h.b16 %v3823
        %v3881 = vunpack.c.l.b16 %v3824
        %v3882 = vunpack.c.h.b16 %v3824
        %v3883 = vunpack.c.l.b16 %v3825
        %v3884 = vunpack.c.h.b16 %v3825
        %v3885 = vunpack.c.l.b16 %v3826
        %v3886 = vunpack.c.h.b16 %v3826
        %v3887 = vunpack.c.l.b16 %v3827
        %v3888 = vunpack.c.h.b16 %v3827
        %v3889 = vunpack.c.l.b16 %v3828
        %v3890 = vunpack.c.h.b16 %v3828
        %v3891 = vunpack.c.l.b16 %v3829
        %v3892 = vunpack.c.h.b16 %v3829
        %v3893 = vunpack.c.l.b16 %v3830
        %v3894 = vunpack.c.h.b16 %v3830
        %v3895 = vunpack.c.l.b16 %v3831
        %v3896 = vunpack.c.h.b16 %v3831
        %v3897 = vunpack.c.l.b16 %v3832
        %v3898 = vunpack.c.h.b16 %v3832
        %v3899 = vunpack.c.l.b16 %v3833
        %v3900 = vunpack.c.h.b16 %v3833
        %v3901 = vunpack.c.l.b16 %v3834
        %v3902 = vunpack.c.h.b16 %v3834
        %v3903 = vunpack.c.l.b16 %v3835
        %v3904 = vunpack.c.h.b16 %v3835
        %v3905 = vunpack.c.l.b16 %v3836
        %v3906 = vunpack.c.h.b16 %v3836
        %v3907 = vunpack.c.l.b16 %v3837
        %v3908 = vunpack.c.h.b16 %v3837
        %v3909 = vunpack.c.l.b16 %v3838
        %v3910 = vunpack.c.h.b16 %v3838
        %v3911 = vpack.c.b16 %v3863, %v3863
        %v3912 = vpack.c.b16 %v3864, %v3864
        %v3913 = vpack.c.b16 %v3865, %v3865
        %v3914 = vpack.c.b16 %v3866, %v3866
        %v3915 = vpack.c.b16 %v3867, %v3867
        %v3916 = vpack.c.b16 %v3868, %v3868
        %v3917 = vpack.c.b16 %v3869, %v3869
        %v3918 = vpack.c.b16 %v3870, %v3870
        %v3919 = vpack.c.b16 %v3871, %v3871
        %v3920 = vpack.c.b16 %v3872, %v3872
        %v3921 = vpack.c.b16 %v3873, %v3873
        %v3922 = vpack.c.b16 %v3874, %v3874
        %v3923 = vpack.c.b16 %v3875, %v3875
        %v3924 = vpack.c.b16 %v3876, %v3876
        %v3925 = vpack.c.b16 %v3877, %v3877
        %v3926 = vpack.c.b16 %v3878, %v3878
        %v3927 = vpack.c.b16 %v3879, %v3879
        %v3928 = vpack.c.b16 %v3880, %v3880
        %v3929 = vpack.c.b16 %v3881, %v3881
        %v3930 = vpack.c.b16 %v3882, %v3882
        %v3931 = vpack.c.b16 %v3883, %v3883
        %v3932 = vpack.c.b16 %v3884, %v3884
        %v3933 = vpack.c.b16 %v3885, %v3885
        %v3934 = vpack.c.b16 %v3886, %v3886
        %v3935 = vpack.c.b16 %v3887, %v3887
        %v3936 = vpack.c.b16 %v3888, %v3888
        %v3937 = vpack.c.b16 %v3889, %v3889
        %v3938 = vpack.c.b16 %v3890, %v3890
        %v3939 = vpack.c.b16 %v3891, %v3891
        %v3940 = vpack.c.b16 %v3892, %v3892
        %v3941 = vpack.c.b16 %v3893, %v3893
        %v3942 = vpack.c.b16 %v3894, %v3894
        %v3943 = vpack.c.b16 %v3895, %v3895
        %v3944 = vpack.c.b16 %v3896, %v3896
        %v3945 = vpack.c.b16 %v3897, %v3897
        %v3946 = vpack.c.b16 %v3898, %v3898
        %v3947 = vpack.c.b16 %v3899, %v3899
        %v3948 = vpack.c.b16 %v3900, %v3900
        %v3949 = vpack.c.b16 %v3901, %v3901
        %v3950 = vpack.c.b16 %v3902, %v3902
        %v3951 = vpack.c.b16 %v3903, %v3903
        %v3952 = vpack.c.b16 %v3904, %v3904
        %v3953 = vpack.c.b16 %v3905, %v3905
        %v3954 = vpack.c.b16 %v3906, %v3906
        %v3955 = vpack.c.b16 %v3907, %v3907
        %v3956 = vpack.c.b16 %v3908, %v3908
        %v3957 = vpack.c.b16 %v3909, %v3909
        %v3958 = vpack.c.b16 %v3910, %v3910
        %4007 = vst [vmem:[#allocation3 + $0x8] sm:$0xf] %v3911
        %4008 = vst [vmem:[#allocation3 + $0x18] sm:$0xf] %v3912
        %4009 = vst [vmem:[#allocation3 + $0x28] sm:$0xf] %v3913
        %4010 = vst [vmem:[#allocation3 + $0x38] sm:$0xf] %v3914
        %4011 = vst [vmem:[#allocation3 + $0x48] sm:$0xf] %v3915
        %4012 = vst [vmem:[#allocation3 + $0x58] sm:$0xf] %v3916
        %4013 = vst [vmem:[#allocation3 + $0x68] sm:$0xf] %v3917
        %4014 = vst [vmem:[#allocation3 + $0x78] sm:$0xf] %v3918
        %4015 = vst [vmem:[#allocation3 + $0x88] sm:$0xf] %v3919
        %4016 = vst [vmem:[#allocation3 + $0x98] sm:$0xf] %v3920
        %4017 = vst [vmem:[#allocation3 + $0xa8] sm:$0xf] %v3921
        %4018 = vst [vmem:[#allocation3 + $0xb8] sm:$0xf] %v3922
        %4019 = vst [vmem:[#allocation3 + $0xc8] sm:$0xf] %v3923
        %4020 = vst [vmem:[#allocation3 + $0xd8] sm:$0xf] %v3924
        %4021 = vst [vmem:[#allocation3 + $0xe8] sm:$0xf] %v3925
        %4022 = vst [vmem:[#allocation3 + $0xf8] sm:$0xf] %v3926
        %4023 = vst [vmem:[#allocation3 + $0x108] sm:$0xf] %v3927
        %4024 = vst [vmem:[#allocation3 + $0x118] sm:$0xf] %v3928
        %4025 = vst [vmem:[#allocation3 + $0x128] sm:$0xf] %v3929
        %4026 = vst [vmem:[#allocation3 + $0x138] sm:$0xf] %v3930
        %4027 = vst [vmem:[#allocation3 + $0x148] sm:$0xf] %v3931
        %4028 = vst [vmem:[#allocation3 + $0x158] sm:$0xf] %v3932
        %4029 = vst [vmem:[#allocation3 + $0x168] sm:$0xf] %v3933
        %4030 = vst [vmem:[#allocation3 + $0x178] sm:$0xf] %v3934
        %4031 = vst [vmem:[#allocation3 + $0x188] sm:$0xf] %v3935
        %4032 = vst [vmem:[#allocation3 + $0x198] sm:$0xf] %v3936
        %4033 = vst [vmem:[#allocation3 + $0x1a8] sm:$0xf] %v3937
        %4034 = vst [vmem:[#allocation3 + $0x1b8] sm:$0xf] %v3938
        %4035 = vst [vmem:[#allocation3 + $0x1c8] sm:$0xf] %v3939
        %4036 = vst [vmem:[#allocation3 + $0x1d8] sm:$0xf] %v3940
        %4037 = vst [vmem:[#allocation3 + $0x1e8] sm:$0xf] %v3941
        %4038 = vst [vmem:[#allocation3 + $0x1f8] sm:$0xf] %v3942
        %4039 = vst [vmem:[#allocation3 + $0x208] sm:$0xf] %v3943
        %4040 = vst [vmem:[#allocation3 + $0x218] sm:$0xf] %v3944
        %4041 = vst [vmem:[#allocation3 + $0x228] sm:$0xf] %v3945
        %4042 = vst [vmem:[#allocation3 + $0x238] sm:$0xf] %v3946
        %4043 = vst [vmem:[#allocation3 + $0x248] sm:$0xf] %v3947
        %4044 = vst [vmem:[#allocation3 + $0x258] sm:$0xf] %v3948
        %4045 = vst [vmem:[#allocation3 + $0x268] sm:$0xf] %v3949
        %4046 = vst [vmem:[#allocation3 + $0x278] sm:$0xf] %v3950
        %4047 = vst [vmem:[#allocation3 + $0x288] sm:$0xf] %v3951
        %4048 = vst [vmem:[#allocation3 + $0x298] sm:$0xf] %v3952
        %4049 = vst [vmem:[#allocation3 + $0x2a8] sm:$0xf] %v3953
        %4050 = vst [vmem:[#allocation3 + $0x2b8] sm:$0xf] %v3954
        %4051 = vst [vmem:[#allocation3 + $0x2c8] sm:$0xf] %v3955
        %4052 = vst [vmem:[#allocation3 + $0x2d8] sm:$0xf] %v3956
        %4053 = vst [vmem:[#allocation3 + $0x2e8] sm:$0xf] %v3957
        %4054 = vst [vmem:[#allocation3 + $0x2f8] sm:$0xf] %v3958
        %v4055 = vld [vmem:[%s232] sm:$0xff]
        %v4056 = vld [vmem:[%s232 + $0x8] sm:$0xff]
        %v4057 = vld [vmem:[%s232 + $0x10] sm:$0xff]
        %v4058 = vld [vmem:[%s232 + $0x18] sm:$0xff]
        %v4059 = vld [vmem:[%s232 + $0x20] sm:$0xff]
        %v4060 = vld [vmem:[%s232 + $0x28] sm:$0xff]
        %v4061 = vld [vmem:[%s232 + $0x30] sm:$0xff]
        %v4062 = vld [vmem:[%s232 + $0x38] sm:$0xff]
        %v4063 = vld [vmem:[%s232 + $0x40] sm:$0xff]
        %v4064 = vld [vmem:[%s232 + $0x48] sm:$0xff]
        %v4065 = vld [vmem:[%s232 + $0x50] sm:$0xff]
        %v4066 = vld [vmem:[%s232 + $0x58] sm:$0xff]
        %v4067 = vld [vmem:[%s232 + $0x60] sm:$0xff]
        %v4068 = vld [vmem:[%s232 + $0x68] sm:$0xff]
        %v4069 = vld [vmem:[%s232 + $0x70] sm:$0xff]
        %v4070 = vld [vmem:[%s232 + $0x78] sm:$0xff]
        %v4071 = vld [vmem:[%s232 + $0x80] sm:$0xff]
        %v4072 = vld [vmem:[%s232 + $0x88] sm:$0xff]
        %v4073 = vld [vmem:[%s232 + $0x90] sm:$0xff]
        %v4074 = vld [vmem:[%s232 + $0x98] sm:$0xff]
        %v4075 = vld [vmem:[%s232 + $0xa0] sm:$0xff]
        %v4076 = vld [vmem:[%s232 + $0xa8] sm:$0xff]
        %v4077 = vld [vmem:[%s232 + $0xb0] sm:$0xff]
        %v4078 = vld [vmem:[%s232 + $0xb8] sm:$0xff]
        %v4079 = vld [vmem:[%s232 + $0xc0] sm:$0xff]
        %v4080 = vld [vmem:[%s232 + $0xc8] sm:$0xff]
        %v4081 = vld [vmem:[%s232 + $0xd0] sm:$0xff]
        %v4082 = vld [vmem:[%s232 + $0xd8] sm:$0xff]
        %v4083 = vld [vmem:[%s232 + $0xe0] sm:$0xff]
        %v4084 = vld [vmem:[%s232 + $0xe8] sm:$0xff]
        %v4085 = vld [vmem:[%s232 + $0xf0] sm:$0xff]
        %v4086 = vld [vmem:[%s232 + $0xf8] sm:$0xff]
        %v4087 = vld [vmem:[%s232 + $0x100] sm:$0xff]
        %v4088 = vld [vmem:[%s232 + $0x108] sm:$0xff]
        %v4089 = vld [vmem:[%s232 + $0x110] sm:$0xff]
        %v4090 = vld [vmem:[%s232 + $0x118] sm:$0xff]
        %v4091 = vld [vmem:[%s232 + $0x120] sm:$0xff]
        %v4092 = vld [vmem:[%s232 + $0x128] sm:$0xff]
        %v4093 = vld [vmem:[%s232 + $0x130] sm:$0xff]
        %v4094 = vld [vmem:[%s232 + $0x138] sm:$0xff]
        %v4095 = vld [vmem:[%s232 + $0x140] sm:$0xff]
        %v4096 = vld [vmem:[%s232 + $0x148] sm:$0xff]
        %v4097 = vld [vmem:[%s232 + $0x150] sm:$0xff]
        %v4098 = vld [vmem:[%s232 + $0x158] sm:$0xff]
        %v4099 = vld [vmem:[%s232 + $0x160] sm:$0xff]
        %v4100 = vld [vmem:[%s232 + $0x168] sm:$0xff]
        %v4101 = vld [vmem:[%s232 + $0x170] sm:$0xff]
        %v4102 = vld [vmem:[%s232 + $0x178] sm:$0xff]
        %v4103 = vld [vmem:[%s2 + $0x3] sm:$0x1]
        %v4104 = vld [vmem:[%s3 + $0x3] sm:$0x1]
        %4106 = vset.pattern.permute.xlu0 3
        %4107 = vperm.xlu0 %4106, %v4055
        %v4108 = vpop.permute.xlu0 %4107
        %4111 = vset.pattern.permute.xlu0 3
        %4112 = vperm.xlu0 %4111, %v4056
        %v4113 = vpop.permute.xlu0 %4112
        %4116 = vset.pattern.permute.xlu0 3
        %4117 = vperm.xlu0 %4116, %v4057
        %v4118 = vpop.permute.xlu0 %4117
        %4121 = vset.pattern.permute.xlu0 3
        %4122 = vperm.xlu0 %4121, %v4058
        %v4123 = vpop.permute.xlu0 %4122
        %4126 = vset.pattern.permute.xlu0 3
        %4127 = vperm.xlu0 %4126, %v4059
        %v4128 = vpop.permute.xlu0 %4127
        %4131 = vset.pattern.permute.xlu0 3
        %4132 = vperm.xlu0 %4131, %v4060
        %v4133 = vpop.permute.xlu0 %4132
        %4136 = vset.pattern.permute.xlu0 3
        %4137 = vperm.xlu0 %4136, %v4061
        %v4138 = vpop.permute.xlu0 %4137
        %4141 = vset.pattern.permute.xlu0 3
        %4142 = vperm.xlu0 %4141, %v4062
        %v4143 = vpop.permute.xlu0 %4142
        %4146 = vset.pattern.permute.xlu0 3
        %4147 = vperm.xlu0 %4146, %v4063
        %v4148 = vpop.permute.xlu0 %4147
        %4151 = vset.pattern.permute.xlu0 3
        %4152 = vperm.xlu0 %4151, %v4064
        %v4153 = vpop.permute.xlu0 %4152
        %4156 = vset.pattern.permute.xlu0 3
        %4157 = vperm.xlu0 %4156, %v4065
        %v4158 = vpop.permute.xlu0 %4157
        %4161 = vset.pattern.permute.xlu0 3
        %4162 = vperm.xlu0 %4161, %v4066
        %v4163 = vpop.permute.xlu0 %4162
        %4166 = vset.pattern.permute.xlu0 3
        %4167 = vperm.xlu0 %4166, %v4067
        %v4168 = vpop.permute.xlu0 %4167
        %4171 = vset.pattern.permute.xlu0 3
        %4172 = vperm.xlu0 %4171, %v4068
        %v4173 = vpop.permute.xlu0 %4172
        %4176 = vset.pattern.permute.xlu0 3
        %4177 = vperm.xlu0 %4176, %v4069
        %v4178 = vpop.permute.xlu0 %4177
        %4181 = vset.pattern.permute.xlu0 3
        %4182 = vperm.xlu0 %4181, %v4070
        %v4183 = vpop.permute.xlu0 %4182
        %4186 = vset.pattern.permute.xlu0 3
        %4187 = vperm.xlu0 %4186, %v4071
        %v4188 = vpop.permute.xlu0 %4187
        %4191 = vset.pattern.permute.xlu0 3
        %4192 = vperm.xlu0 %4191, %v4072
        %v4193 = vpop.permute.xlu0 %4192
        %4196 = vset.pattern.permute.xlu0 3
        %4197 = vperm.xlu0 %4196, %v4073
        %v4198 = vpop.permute.xlu0 %4197
        %4201 = vset.pattern.permute.xlu0 3
        %4202 = vperm.xlu0 %4201, %v4074
        %v4203 = vpop.permute.xlu0 %4202
        %4206 = vset.pattern.permute.xlu0 3
        %4207 = vperm.xlu0 %4206, %v4075
        %v4208 = vpop.permute.xlu0 %4207
        %4211 = vset.pattern.permute.xlu0 3
        %4212 = vperm.xlu0 %4211, %v4076
        %v4213 = vpop.permute.xlu0 %4212
        %4216 = vset.pattern.permute.xlu0 3
        %4217 = vperm.xlu0 %4216, %v4077
        %v4218 = vpop.permute.xlu0 %4217
        %4221 = vset.pattern.permute.xlu0 3
        %4222 = vperm.xlu0 %4221, %v4078
        %v4223 = vpop.permute.xlu0 %4222
        %4226 = vset.pattern.permute.xlu0 3
        %4227 = vperm.xlu0 %4226, %v4079
        %v4228 = vpop.permute.xlu0 %4227
        %4231 = vset.pattern.permute.xlu0 3
        %4232 = vperm.xlu0 %4231, %v4080
        %v4233 = vpop.permute.xlu0 %4232
        %4236 = vset.pattern.permute.xlu0 3
        %4237 = vperm.xlu0 %4236, %v4081
        %v4238 = vpop.permute.xlu0 %4237
        %4241 = vset.pattern.permute.xlu0 3
        %4242 = vperm.xlu0 %4241, %v4082
        %v4243 = vpop.permute.xlu0 %4242
        %4246 = vset.pattern.permute.xlu0 3
        %4247 = vperm.xlu0 %4246, %v4083
        %v4248 = vpop.permute.xlu0 %4247
        %4251 = vset.pattern.permute.xlu0 3
        %4252 = vperm.xlu0 %4251, %v4084
        %v4253 = vpop.permute.xlu0 %4252
        %4256 = vset.pattern.permute.xlu0 3
        %4257 = vperm.xlu0 %4256, %v4085
        %v4258 = vpop.permute.xlu0 %4257
        %4261 = vset.pattern.permute.xlu0 3
        %4262 = vperm.xlu0 %4261, %v4086
        %v4263 = vpop.permute.xlu0 %4262
        %4266 = vset.pattern.permute.xlu0 3
        %4267 = vperm.xlu0 %4266, %v4087
        %v4268 = vpop.permute.xlu0 %4267
        %4271 = vset.pattern.permute.xlu0 3
        %4272 = vperm.xlu0 %4271, %v4088
        %v4273 = vpop.permute.xlu0 %4272
        %4276 = vset.pattern.permute.xlu0 3
        %4277 = vperm.xlu0 %4276, %v4089
        %v4278 = vpop.permute.xlu0 %4277
        %4281 = vset.pattern.permute.xlu0 3
        %4282 = vperm.xlu0 %4281, %v4090
        %v4283 = vpop.permute.xlu0 %4282
        %4286 = vset.pattern.permute.xlu0 3
        %4287 = vperm.xlu0 %4286, %v4091
        %v4288 = vpop.permute.xlu0 %4287
        %4291 = vset.pattern.permute.xlu0 3
        %4292 = vperm.xlu0 %4291, %v4092
        %v4293 = vpop.permute.xlu0 %4292
        %4296 = vset.pattern.permute.xlu0 3
        %4297 = vperm.xlu0 %4296, %v4093
        %v4298 = vpop.permute.xlu0 %4297
        %4301 = vset.pattern.permute.xlu0 3
        %4302 = vperm.xlu0 %4301, %v4094
        %v4303 = vpop.permute.xlu0 %4302
        %4306 = vset.pattern.permute.xlu0 3
        %4307 = vperm.xlu0 %4306, %v4095
        %v4308 = vpop.permute.xlu0 %4307
        %4311 = vset.pattern.permute.xlu0 3
        %4312 = vperm.xlu0 %4311, %v4096
        %v4313 = vpop.permute.xlu0 %4312
        %4316 = vset.pattern.permute.xlu0 3
        %4317 = vperm.xlu0 %4316, %v4097
        %v4318 = vpop.permute.xlu0 %4317
        %4321 = vset.pattern.permute.xlu0 3
        %4322 = vperm.xlu0 %4321, %v4098
        %v4323 = vpop.permute.xlu0 %4322
        %4326 = vset.pattern.permute.xlu0 3
        %4327 = vperm.xlu0 %4326, %v4099
        %v4328 = vpop.permute.xlu0 %4327
        %4331 = vset.pattern.permute.xlu0 3
        %4332 = vperm.xlu0 %4331, %v4100
        %v4333 = vpop.permute.xlu0 %4332
        %4336 = vset.pattern.permute.xlu0 3
        %4337 = vperm.xlu0 %4336, %v4101
        %v4338 = vpop.permute.xlu0 %4337
        %4341 = vset.pattern.permute.xlu0 3
        %4342 = vperm.xlu0 %4341, %v4102
        %v4343 = vpop.permute.xlu0 %4342
        %v4345 = vlaneseq
        %v4346 = vshrl.u32 %v4345, 7
        %v4347 = vsub.s32 0, %v4346
        %v4348 = vrot.slane %v4103, %v4347
        %v4349 = vmul.f32 %v4108, %v4348
        %v4350 = vmul.f32 %v4113, %v4348
        %v4351 = vmul.f32 %v4118, %v4348
        %v4352 = vmul.f32 %v4123, %v4348
        %v4353 = vmul.f32 %v4128, %v4348
        %v4354 = vmul.f32 %v4133, %v4348
        %v4355 = vmul.f32 %v4138, %v4348
        %v4356 = vmul.f32 %v4143, %v4348
        %v4357 = vmul.f32 %v4148, %v4348
        %v4358 = vmul.f32 %v4153, %v4348
        %v4359 = vmul.f32 %v4158, %v4348
        %v4360 = vmul.f32 %v4163, %v4348
        %v4361 = vmul.f32 %v4168, %v4348
        %v4362 = vmul.f32 %v4173, %v4348
        %v4363 = vmul.f32 %v4178, %v4348
        %v4364 = vmul.f32 %v4183, %v4348
        %v4365 = vmul.f32 %v4188, %v4348
        %v4366 = vmul.f32 %v4193, %v4348
        %v4367 = vmul.f32 %v4198, %v4348
        %v4368 = vmul.f32 %v4203, %v4348
        %v4369 = vmul.f32 %v4208, %v4348
        %v4370 = vmul.f32 %v4213, %v4348
        %v4371 = vmul.f32 %v4218, %v4348
        %v4372 = vmul.f32 %v4223, %v4348
        %v4373 = vmul.f32 %v4228, %v4348
        %v4374 = vmul.f32 %v4233, %v4348
        %v4375 = vmul.f32 %v4238, %v4348
        %v4376 = vmul.f32 %v4243, %v4348
        %v4377 = vmul.f32 %v4248, %v4348
        %v4378 = vmul.f32 %v4253, %v4348
        %v4379 = vmul.f32 %v4258, %v4348
        %v4380 = vmul.f32 %v4263, %v4348
        %v4381 = vmul.f32 %v4268, %v4348
        %v4382 = vmul.f32 %v4273, %v4348
        %v4383 = vmul.f32 %v4278, %v4348
        %v4384 = vmul.f32 %v4283, %v4348
        %v4385 = vmul.f32 %v4288, %v4348
        %v4386 = vmul.f32 %v4293, %v4348
        %v4387 = vmul.f32 %v4298, %v4348
        %v4388 = vmul.f32 %v4303, %v4348
        %v4389 = vmul.f32 %v4308, %v4348
        %v4390 = vmul.f32 %v4313, %v4348
        %v4391 = vmul.f32 %v4318, %v4348
        %v4392 = vmul.f32 %v4323, %v4348
        %v4393 = vmul.f32 %v4328, %v4348
        %v4394 = vmul.f32 %v4333, %v4348
        %v4395 = vmul.f32 %v4338, %v4348
        %v4396 = vmul.f32 %v4343, %v4348
        %4397 = vset.pattern.permute.xlu0 7
        %4398 = vperm.xlu0 %4397, %v4055
        %v4399 = vpop.permute.xlu0 %4398
        %4401 = vset.pattern.permute.xlu0 7
        %4402 = vperm.xlu0 %4401, %v4056
        %v4403 = vpop.permute.xlu0 %4402
        %4405 = vset.pattern.permute.xlu0 7
        %4406 = vperm.xlu0 %4405, %v4057
        %v4407 = vpop.permute.xlu0 %4406
        %4409 = vset.pattern.permute.xlu0 7
        %4410 = vperm.xlu0 %4409, %v4058
        %v4411 = vpop.permute.xlu0 %4410
        %4413 = vset.pattern.permute.xlu0 7
        %4414 = vperm.xlu0 %4413, %v4059
        %v4415 = vpop.permute.xlu0 %4414
        %4417 = vset.pattern.permute.xlu0 7
        %4418 = vperm.xlu0 %4417, %v4060
        %v4419 = vpop.permute.xlu0 %4418
        %4421 = vset.pattern.permute.xlu0 7
        %4422 = vperm.xlu0 %4421, %v4061
        %v4423 = vpop.permute.xlu0 %4422
        %4425 = vset.pattern.permute.xlu0 7
        %4426 = vperm.xlu0 %4425, %v4062
        %v4427 = vpop.permute.xlu0 %4426
        %4429 = vset.pattern.permute.xlu0 7
        %4430 = vperm.xlu0 %4429, %v4063
        %v4431 = vpop.permute.xlu0 %4430
        %4433 = vset.pattern.permute.xlu0 7
        %4434 = vperm.xlu0 %4433, %v4064
        %v4435 = vpop.permute.xlu0 %4434
        %4437 = vset.pattern.permute.xlu0 7
        %4438 = vperm.xlu0 %4437, %v4065
        %v4439 = vpop.permute.xlu0 %4438
        %4441 = vset.pattern.permute.xlu0 7
        %4442 = vperm.xlu0 %4441, %v4066
        %v4443 = vpop.permute.xlu0 %4442
        %4445 = vset.pattern.permute.xlu0 7
        %4446 = vperm.xlu0 %4445, %v4067
        %v4447 = vpop.permute.xlu0 %4446
        %4449 = vset.pattern.permute.xlu0 7
        %4450 = vperm.xlu0 %4449, %v4068
        %v4451 = vpop.permute.xlu0 %4450
        %4453 = vset.pattern.permute.xlu0 7
        %4454 = vperm.xlu0 %4453, %v4069
        %v4455 = vpop.permute.xlu0 %4454
        %4457 = vset.pattern.permute.xlu0 7
        %4458 = vperm.xlu0 %4457, %v4070
        %v4459 = vpop.permute.xlu0 %4458
        %4461 = vset.pattern.permute.xlu0 7
        %4462 = vperm.xlu0 %4461, %v4071
        %v4463 = vpop.permute.xlu0 %4462
        %4465 = vset.pattern.permute.xlu0 7
        %4466 = vperm.xlu0 %4465, %v4072
        %v4467 = vpop.permute.xlu0 %4466
        %4469 = vset.pattern.permute.xlu0 7
        %4470 = vperm.xlu0 %4469, %v4073
        %v4471 = vpop.permute.xlu0 %4470
        %4473 = vset.pattern.permute.xlu0 7
        %4474 = vperm.xlu0 %4473, %v4074
        %v4475 = vpop.permute.xlu0 %4474
        %4477 = vset.pattern.permute.xlu0 7
        %4478 = vperm.xlu0 %4477, %v4075
        %v4479 = vpop.permute.xlu0 %4478
        %4481 = vset.pattern.permute.xlu0 7
        %4482 = vperm.xlu0 %4481, %v4076
        %v4483 = vpop.permute.xlu0 %4482
        %4485 = vset.pattern.permute.xlu0 7
        %4486 = vperm.xlu0 %4485, %v4077
        %v4487 = vpop.permute.xlu0 %4486
        %4489 = vset.pattern.permute.xlu0 7
        %4490 = vperm.xlu0 %4489, %v4078
        %v4491 = vpop.permute.xlu0 %4490
        %4493 = vset.pattern.permute.xlu0 7
        %4494 = vperm.xlu0 %4493, %v4079
        %v4495 = vpop.permute.xlu0 %4494
        %4497 = vset.pattern.permute.xlu0 7
        %4498 = vperm.xlu0 %4497, %v4080
        %v4499 = vpop.permute.xlu0 %4498
        %4501 = vset.pattern.permute.xlu0 7
        %4502 = vperm.xlu0 %4501, %v4081
        %v4503 = vpop.permute.xlu0 %4502
        %4505 = vset.pattern.permute.xlu0 7
        %4506 = vperm.xlu0 %4505, %v4082
        %v4507 = vpop.permute.xlu0 %4506
        %4509 = vset.pattern.permute.xlu0 7
        %4510 = vperm.xlu0 %4509, %v4083
        %v4511 = vpop.permute.xlu0 %4510
        %4513 = vset.pattern.permute.xlu0 7
        %4514 = vperm.xlu0 %4513, %v4084
        %v4515 = vpop.permute.xlu0 %4514
        %4517 = vset.pattern.permute.xlu0 7
        %4518 = vperm.xlu0 %4517, %v4085
        %v4519 = vpop.permute.xlu0 %4518
        %4521 = vset.pattern.permute.xlu0 7
        %4522 = vperm.xlu0 %4521, %v4086
        %v4523 = vpop.permute.xlu0 %4522
        %4525 = vset.pattern.permute.xlu0 7
        %4526 = vperm.xlu0 %4525, %v4087
        %v4527 = vpop.permute.xlu0 %4526
        %4529 = vset.pattern.permute.xlu0 7
        %4530 = vperm.xlu0 %4529, %v4088
        %v4531 = vpop.permute.xlu0 %4530
        %4533 = vset.pattern.permute.xlu0 7
        %4534 = vperm.xlu0 %4533, %v4089
        %v4535 = vpop.permute.xlu0 %4534
        %4537 = vset.pattern.permute.xlu0 7
        %4538 = vperm.xlu0 %4537, %v4090
        %v4539 = vpop.permute.xlu0 %4538
        %4541 = vset.pattern.permute.xlu0 7
        %4542 = vperm.xlu0 %4541, %v4091
        %v4543 = vpop.permute.xlu0 %4542
        %4545 = vset.pattern.permute.xlu0 7
        %4546 = vperm.xlu0 %4545, %v4092
        %v4547 = vpop.permute.xlu0 %4546
        %4549 = vset.pattern.permute.xlu0 7
        %4550 = vperm.xlu0 %4549, %v4093
        %v4551 = vpop.permute.xlu0 %4550
        %4553 = vset.pattern.permute.xlu0 7
        %4554 = vperm.xlu0 %4553, %v4094
        %v4555 = vpop.permute.xlu0 %4554
        %4557 = vset.pattern.permute.xlu0 7
        %4558 = vperm.xlu0 %4557, %v4095
        %v4559 = vpop.permute.xlu0 %4558
        %4561 = vset.pattern.permute.xlu0 7
        %4562 = vperm.xlu0 %4561, %v4096
        %v4563 = vpop.permute.xlu0 %4562
        %4565 = vset.pattern.permute.xlu0 7
        %4566 = vperm.xlu0 %4565, %v4097
        %v4567 = vpop.permute.xlu0 %4566
        %4569 = vset.pattern.permute.xlu0 7
        %4570 = vperm.xlu0 %4569, %v4098
        %v4571 = vpop.permute.xlu0 %4570
        %4573 = vset.pattern.permute.xlu0 7
        %4574 = vperm.xlu0 %4573, %v4099
        %v4575 = vpop.permute.xlu0 %4574
        %4577 = vset.pattern.permute.xlu0 7
        %4578 = vperm.xlu0 %4577, %v4100
        %v4579 = vpop.permute.xlu0 %4578
        %4581 = vset.pattern.permute.xlu0 7
        %4582 = vperm.xlu0 %4581, %v4101
        %v4583 = vpop.permute.xlu0 %4582
        %4585 = vset.pattern.permute.xlu0 7
        %4586 = vperm.xlu0 %4585, %v4102
        %v4587 = vpop.permute.xlu0 %4586
        %v4589 = vlaneseq
        %v4590 = vshrl.u32 %v4589, 7
        %v4591 = vsub.s32 0, %v4590
        %v4592 = vrot.slane %v4104, %v4591
        %v4593 = vmul.f32 %v4399, %v4592
        %v4594 = vmul.f32 %v4403, %v4592
        %v4595 = vmul.f32 %v4407, %v4592
        %v4596 = vmul.f32 %v4411, %v4592
        %v4597 = vmul.f32 %v4415, %v4592
        %v4598 = vmul.f32 %v4419, %v4592
        %v4599 = vmul.f32 %v4423, %v4592
        %v4600 = vmul.f32 %v4427, %v4592
        %v4601 = vmul.f32 %v4431, %v4592
        %v4602 = vmul.f32 %v4435, %v4592
        %v4603 = vmul.f32 %v4439, %v4592
        %v4604 = vmul.f32 %v4443, %v4592
        %v4605 = vmul.f32 %v4447, %v4592
        %v4606 = vmul.f32 %v4451, %v4592
        %v4607 = vmul.f32 %v4455, %v4592
        %v4608 = vmul.f32 %v4459, %v4592
        %v4609 = vmul.f32 %v4463, %v4592
        %v4610 = vmul.f32 %v4467, %v4592
        %v4611 = vmul.f32 %v4471, %v4592
        %v4612 = vmul.f32 %v4475, %v4592
        %v4613 = vmul.f32 %v4479, %v4592
        %v4614 = vmul.f32 %v4483, %v4592
        %v4615 = vmul.f32 %v4487, %v4592
        %v4616 = vmul.f32 %v4491, %v4592
        %v4617 = vmul.f32 %v4495, %v4592
        %v4618 = vmul.f32 %v4499, %v4592
        %v4619 = vmul.f32 %v4503, %v4592
        %v4620 = vmul.f32 %v4507, %v4592
        %v4621 = vmul.f32 %v4511, %v4592
        %v4622 = vmul.f32 %v4515, %v4592
        %v4623 = vmul.f32 %v4519, %v4592
        %v4624 = vmul.f32 %v4523, %v4592
        %v4625 = vmul.f32 %v4527, %v4592
        %v4626 = vmul.f32 %v4531, %v4592
        %v4627 = vmul.f32 %v4535, %v4592
        %v4628 = vmul.f32 %v4539, %v4592
        %v4629 = vmul.f32 %v4543, %v4592
        %v4630 = vmul.f32 %v4547, %v4592
        %v4631 = vmul.f32 %v4551, %v4592
        %v4632 = vmul.f32 %v4555, %v4592
        %v4633 = vmul.f32 %v4559, %v4592
        %v4634 = vmul.f32 %v4563, %v4592
        %v4635 = vmul.f32 %v4567, %v4592
        %v4636 = vmul.f32 %v4571, %v4592
        %v4637 = vmul.f32 %v4575, %v4592
        %v4638 = vmul.f32 %v4579, %v4592
        %v4639 = vmul.f32 %v4583, %v4592
        %v4640 = vmul.f32 %v4587, %v4592
        %v4641 = vadd.f32 %v4349, %v4593
        %v4642 = vadd.f32 %v4350, %v4594
        %v4643 = vadd.f32 %v4351, %v4595
        %v4644 = vadd.f32 %v4352, %v4596
        %v4645 = vadd.f32 %v4353, %v4597
        %v4646 = vadd.f32 %v4354, %v4598
        %v4647 = vadd.f32 %v4355, %v4599
        %v4648 = vadd.f32 %v4356, %v4600
        %v4649 = vadd.f32 %v4357, %v4601
        %v4650 = vadd.f32 %v4358, %v4602
        %v4651 = vadd.f32 %v4359, %v4603
        %v4652 = vadd.f32 %v4360, %v4604
        %v4653 = vadd.f32 %v4361, %v4605
        %v4654 = vadd.f32 %v4362, %v4606
        %v4655 = vadd.f32 %v4363, %v4607
        %v4656 = vadd.f32 %v4364, %v4608
        %v4657 = vadd.f32 %v4365, %v4609
        %v4658 = vadd.f32 %v4366, %v4610
        %v4659 = vadd.f32 %v4367, %v4611
        %v4660 = vadd.f32 %v4368, %v4612
        %v4661 = vadd.f32 %v4369, %v4613
        %v4662 = vadd.f32 %v4370, %v4614
        %v4663 = vadd.f32 %v4371, %v4615
        %v4664 = vadd.f32 %v4372, %v4616
        %v4665 = vadd.f32 %v4373, %v4617
        %v4666 = vadd.f32 %v4374, %v4618
        %v4667 = vadd.f32 %v4375, %v4619
        %v4668 = vadd.f32 %v4376, %v4620
        %v4669 = vadd.f32 %v4377, %v4621
        %v4670 = vadd.f32 %v4378, %v4622
        %v4671 = vadd.f32 %v4379, %v4623
        %v4672 = vadd.f32 %v4380, %v4624
        %v4673 = vadd.f32 %v4381, %v4625
        %v4674 = vadd.f32 %v4382, %v4626
        %v4675 = vadd.f32 %v4383, %v4627
        %v4676 = vadd.f32 %v4384, %v4628
        %v4677 = vadd.f32 %v4385, %v4629
        %v4678 = vadd.f32 %v4386, %v4630
        %v4679 = vadd.f32 %v4387, %v4631
        %v4680 = vadd.f32 %v4388, %v4632
        %v4681 = vadd.f32 %v4389, %v4633
        %v4682 = vadd.f32 %v4390, %v4634
        %v4683 = vadd.f32 %v4391, %v4635
        %v4684 = vadd.f32 %v4392, %v4636
        %v4685 = vadd.f32 %v4393, %v4637
        %v4686 = vadd.f32 %v4394, %v4638
        %v4687 = vadd.f32 %v4395, %v4639
        %v4688 = vadd.f32 %v4396, %v4640
        %v4689 = vpack.c.bf16 %v4642, %v4641
        %v4690 = vpack.c.bf16 %v4644, %v4643
        %v4691 = vpack.c.bf16 %v4646, %v4645
        %v4692 = vpack.c.bf16 %v4648, %v4647
        %v4693 = vpack.c.bf16 %v4650, %v4649
        %v4694 = vpack.c.bf16 %v4652, %v4651
        %v4695 = vpack.c.bf16 %v4654, %v4653
        %v4696 = vpack.c.bf16 %v4656, %v4655
        %v4697 = vpack.c.bf16 %v4658, %v4657
        %v4698 = vpack.c.bf16 %v4660, %v4659
        %v4699 = vpack.c.bf16 %v4662, %v4661
        %v4700 = vpack.c.bf16 %v4664, %v4663
        %v4701 = vpack.c.bf16 %v4666, %v4665
        %v4702 = vpack.c.bf16 %v4668, %v4667
        %v4703 = vpack.c.bf16 %v4670, %v4669
        %v4704 = vpack.c.bf16 %v4672, %v4671
        %v4705 = vpack.c.bf16 %v4674, %v4673
        %v4706 = vpack.c.bf16 %v4676, %v4675
        %v4707 = vpack.c.bf16 %v4678, %v4677
        %v4708 = vpack.c.bf16 %v4680, %v4679
        %v4709 = vpack.c.bf16 %v4682, %v4681
        %v4710 = vpack.c.bf16 %v4684, %v4683
        %v4711 = vpack.c.bf16 %v4686, %v4685
        %v4712 = vpack.c.bf16 %v4688, %v4687
        %v4737 = vunpack.c.l.b16 %v4689
        %v4738 = vunpack.c.h.b16 %v4689
        %v4739 = vunpack.c.l.b16 %v4690
        %v4740 = vunpack.c.h.b16 %v4690
        %v4741 = vunpack.c.l.b16 %v4691
        %v4742 = vunpack.c.h.b16 %v4691
        %v4743 = vunpack.c.l.b16 %v4692
        %v4744 = vunpack.c.h.b16 %v4692
        %v4745 = vunpack.c.l.b16 %v4693
        %v4746 = vunpack.c.h.b16 %v4693
        %v4747 = vunpack.c.l.b16 %v4694
        %v4748 = vunpack.c.h.b16 %v4694
        %v4749 = vunpack.c.l.b16 %v4695
        %v4750 = vunpack.c.h.b16 %v4695
        %v4751 = vunpack.c.l.b16 %v4696
        %v4752 = vunpack.c.h.b16 %v4696
        %v4753 = vunpack.c.l.b16 %v4697
        %v4754 = vunpack.c.h.b16 %v4697
        %v4755 = vunpack.c.l.b16 %v4698
        %v4756 = vunpack.c.h.b16 %v4698
        %v4757 = vunpack.c.l.b16 %v4699
        %v4758 = vunpack.c.h.b16 %v4699
        %v4759 = vunpack.c.l.b16 %v4700
        %v4760 = vunpack.c.h.b16 %v4700
        %v4761 = vunpack.c.l.b16 %v4701
        %v4762 = vunpack.c.h.b16 %v4701
        %v4763 = vunpack.c.l.b16 %v4702
        %v4764 = vunpack.c.h.b16 %v4702
        %v4765 = vunpack.c.l.b16 %v4703
        %v4766 = vunpack.c.h.b16 %v4703
        %v4767 = vunpack.c.l.b16 %v4704
        %v4768 = vunpack.c.h.b16 %v4704
        %v4769 = vunpack.c.l.b16 %v4705
        %v4770 = vunpack.c.h.b16 %v4705
        %v4771 = vunpack.c.l.b16 %v4706
        %v4772 = vunpack.c.h.b16 %v4706
        %v4773 = vunpack.c.l.b16 %v4707
        %v4774 = vunpack.c.h.b16 %v4707
        %v4775 = vunpack.c.l.b16 %v4708
        %v4776 = vunpack.c.h.b16 %v4708
        %v4777 = vunpack.c.l.b16 %v4709
        %v4778 = vunpack.c.h.b16 %v4709
        %v4779 = vunpack.c.l.b16 %v4710
        %v4780 = vunpack.c.h.b16 %v4710
        %v4781 = vunpack.c.l.b16 %v4711
        %v4782 = vunpack.c.h.b16 %v4711
        %v4783 = vunpack.c.l.b16 %v4712
        %v4784 = vunpack.c.h.b16 %v4712
        %v4785 = vpack.c.b16 %v4737, %v4737
        %v4786 = vpack.c.b16 %v4738, %v4738
        %v4787 = vpack.c.b16 %v4739, %v4739
        %v4788 = vpack.c.b16 %v4740, %v4740
        %v4789 = vpack.c.b16 %v4741, %v4741
        %v4790 = vpack.c.b16 %v4742, %v4742
        %v4791 = vpack.c.b16 %v4743, %v4743
        %v4792 = vpack.c.b16 %v4744, %v4744
        %v4793 = vpack.c.b16 %v4745, %v4745
        %v4794 = vpack.c.b16 %v4746, %v4746
        %v4795 = vpack.c.b16 %v4747, %v4747
        %v4796 = vpack.c.b16 %v4748, %v4748
        %v4797 = vpack.c.b16 %v4749, %v4749
        %v4798 = vpack.c.b16 %v4750, %v4750
        %v4799 = vpack.c.b16 %v4751, %v4751
        %v4800 = vpack.c.b16 %v4752, %v4752
        %v4801 = vpack.c.b16 %v4753, %v4753
        %v4802 = vpack.c.b16 %v4754, %v4754
        %v4803 = vpack.c.b16 %v4755, %v4755
        %v4804 = vpack.c.b16 %v4756, %v4756
        %v4805 = vpack.c.b16 %v4757, %v4757
        %v4806 = vpack.c.b16 %v4758, %v4758
        %v4807 = vpack.c.b16 %v4759, %v4759
        %v4808 = vpack.c.b16 %v4760, %v4760
        %v4809 = vpack.c.b16 %v4761, %v4761
        %v4810 = vpack.c.b16 %v4762, %v4762
        %v4811 = vpack.c.b16 %v4763, %v4763
        %v4812 = vpack.c.b16 %v4764, %v4764
        %v4813 = vpack.c.b16 %v4765, %v4765
        %v4814 = vpack.c.b16 %v4766, %v4766
        %v4815 = vpack.c.b16 %v4767, %v4767
        %v4816 = vpack.c.b16 %v4768, %v4768
        %v4817 = vpack.c.b16 %v4769, %v4769
        %v4818 = vpack.c.b16 %v4770, %v4770
        %v4819 = vpack.c.b16 %v4771, %v4771
        %v4820 = vpack.c.b16 %v4772, %v4772
        %v4821 = vpack.c.b16 %v4773, %v4773
        %v4822 = vpack.c.b16 %v4774, %v4774
        %v4823 = vpack.c.b16 %v4775, %v4775
        %v4824 = vpack.c.b16 %v4776, %v4776
        %v4825 = vpack.c.b16 %v4777, %v4777
        %v4826 = vpack.c.b16 %v4778, %v4778
        %v4827 = vpack.c.b16 %v4779, %v4779
        %v4828 = vpack.c.b16 %v4780, %v4780
        %v4829 = vpack.c.b16 %v4781, %v4781
        %v4830 = vpack.c.b16 %v4782, %v4782
        %v4831 = vpack.c.b16 %v4783, %v4783
        %v4832 = vpack.c.b16 %v4784, %v4784
        %4881 = vst [vmem:[#allocation3 + $0xc] sm:$0xf] %v4785
        %4882 = vst [vmem:[#allocation3 + $0x1c] sm:$0xf] %v4786
        %4883 = vst [vmem:[#allocation3 + $0x2c] sm:$0xf] %v4787
        %4884 = vst [vmem:[#allocation3 + $0x3c] sm:$0xf] %v4788
        %4885 = vst [vmem:[#allocation3 + $0x4c] sm:$0xf] %v4789
        %4886 = vst [vmem:[#allocation3 + $0x5c] sm:$0xf] %v4790
        %4887 = vst [vmem:[#allocation3 + $0x6c] sm:$0xf] %v4791
        %4888 = vst [vmem:[#allocation3 + $0x7c] sm:$0xf] %v4792
        %4889 = vst [vmem:[#allocation3 + $0x8c] sm:$0xf] %v4793
        %4890 = vst [vmem:[#allocation3 + $0x9c] sm:$0xf] %v4794
        %4891 = vst [vmem:[#allocation3 + $0xac] sm:$0xf] %v4795
        %4892 = vst [vmem:[#allocation3 + $0xbc] sm:$0xf] %v4796
        %4893 = vst [vmem:[#allocation3 + $0xcc] sm:$0xf] %v4797
        %4894 = vst [vmem:[#allocation3 + $0xdc] sm:$0xf] %v4798
        %4895 = vst [vmem:[#allocation3 + $0xec] sm:$0xf] %v4799
        %4896 = vst [vmem:[#allocation3 + $0xfc] sm:$0xf] %v4800
        %4897 = vst [vmem:[#allocation3 + $0x10c] sm:$0xf] %v4801
        %4898 = vst [vmem:[#allocation3 + $0x11c] sm:$0xf] %v4802
        %4899 = vst [vmem:[#allocation3 + $0x12c] sm:$0xf] %v4803
        %4900 = vst [vmem:[#allocation3 + $0x13c] sm:$0xf] %v4804
        %4901 = vst [vmem:[#allocation3 + $0x14c] sm:$0xf] %v4805
        %4902 = vst [vmem:[#allocation3 + $0x15c] sm:$0xf] %v4806
        %4903 = vst [vmem:[#allocation3 + $0x16c] sm:$0xf] %v4807
        %4904 = vst [vmem:[#allocation3 + $0x17c] sm:$0xf] %v4808
        %4905 = vst [vmem:[#allocation3 + $0x18c] sm:$0xf] %v4809
        %4906 = vst [vmem:[#allocation3 + $0x19c] sm:$0xf] %v4810
        %4907 = vst [vmem:[#allocation3 + $0x1ac] sm:$0xf] %v4811
        %4908 = vst [vmem:[#allocation3 + $0x1bc] sm:$0xf] %v4812
        %4909 = vst [vmem:[#allocation3 + $0x1cc] sm:$0xf] %v4813
        %4910 = vst [vmem:[#allocation3 + $0x1dc] sm:$0xf] %v4814
        %4911 = vst [vmem:[#allocation3 + $0x1ec] sm:$0xf] %v4815
        %4912 = vst [vmem:[#allocation3 + $0x1fc] sm:$0xf] %v4816
        %4913 = vst [vmem:[#allocation3 + $0x20c] sm:$0xf] %v4817
        %4914 = vst [vmem:[#allocation3 + $0x21c] sm:$0xf] %v4818
        %4915 = vst [vmem:[#allocation3 + $0x22c] sm:$0xf] %v4819
        %4916 = vst [vmem:[#allocation3 + $0x23c] sm:$0xf] %v4820
        %4917 = vst [vmem:[#allocation3 + $0x24c] sm:$0xf] %v4821
        %4918 = vst [vmem:[#allocation3 + $0x25c] sm:$0xf] %v4822
        %4919 = vst [vmem:[#allocation3 + $0x26c] sm:$0xf] %v4823
        %4920 = vst [vmem:[#allocation3 + $0x27c] sm:$0xf] %v4824
        %4921 = vst [vmem:[#allocation3 + $0x28c] sm:$0xf] %v4825
        %4922 = vst [vmem:[#allocation3 + $0x29c] sm:$0xf] %v4826
        %4923 = vst [vmem:[#allocation3 + $0x2ac] sm:$0xf] %v4827
        %4924 = vst [vmem:[#allocation3 + $0x2bc] sm:$0xf] %v4828
        %4925 = vst [vmem:[#allocation3 + $0x2cc] sm:$0xf] %v4829
        %4926 = vst [vmem:[#allocation3 + $0x2dc] sm:$0xf] %v4830
        %4927 = vst [vmem:[#allocation3 + $0x2ec] sm:$0xf] %v4831
        %4928 = vst [vmem:[#allocation3 + $0x2fc] sm:$0xf] %v4832
        %v4929 = vld [vmem:[#allocation2] sm:$0xff]
        %v4930 = vld [vmem:[#allocation2 + $0x8] sm:$0xff]
        %v4931 = vld [vmem:[#allocation2 + $0x10] sm:$0xff]
        %v4932 = vld [vmem:[#allocation2 + $0x18] sm:$0xff]
        %v4933 = vld [vmem:[#allocation2 + $0x20] sm:$0xff]
        %v4934 = vld [vmem:[#allocation2 + $0x28] sm:$0xff]
        %v4935 = vld [vmem:[#allocation2 + $0x30] sm:$0xff]
        %v4936 = vld [vmem:[#allocation2 + $0x38] sm:$0xff]
        %v4937 = vld [vmem:[#allocation2 + $0x40] sm:$0xff]
        %v4938 = vld [vmem:[#allocation2 + $0x48] sm:$0xff]
        %v4939 = vld [vmem:[#allocation2 + $0x50] sm:$0xff]
        %v4940 = vld [vmem:[#allocation2 + $0x58] sm:$0xff]
        %v4941 = vld [vmem:[#allocation2 + $0x60] sm:$0xff]
        %v4942 = vld [vmem:[#allocation2 + $0x68] sm:$0xff]
        %v4943 = vld [vmem:[#allocation2 + $0x70] sm:$0xff]
        %v4944 = vld [vmem:[#allocation2 + $0x78] sm:$0xff]
        %v4945 = vld [vmem:[#allocation2 + $0x80] sm:$0xff]
        %v4946 = vld [vmem:[#allocation2 + $0x88] sm:$0xff]
        %v4947 = vld [vmem:[#allocation2 + $0x90] sm:$0xff]
        %v4948 = vld [vmem:[#allocation2 + $0x98] sm:$0xff]
        %v4949 = vld [vmem:[#allocation2 + $0xa0] sm:$0xff]
        %v4950 = vld [vmem:[#allocation2 + $0xa8] sm:$0xff]
        %v4951 = vld [vmem:[#allocation2 + $0xb0] sm:$0xff]
        %v4952 = vld [vmem:[#allocation2 + $0xb8] sm:$0xff]
        %v4953 = vld [vmem:[#allocation2 + $0xc0] sm:$0xff]
        %v4954 = vld [vmem:[#allocation2 + $0xc8] sm:$0xff]
        %v4955 = vld [vmem:[#allocation2 + $0xd0] sm:$0xff]
        %v4956 = vld [vmem:[#allocation2 + $0xd8] sm:$0xff]
        %v4957 = vld [vmem:[#allocation2 + $0xe0] sm:$0xff]
        %v4958 = vld [vmem:[#allocation2 + $0xe8] sm:$0xff]
        %v4959 = vld [vmem:[#allocation2 + $0xf0] sm:$0xff]
        %v4960 = vld [vmem:[#allocation2 + $0xf8] sm:$0xff]
        %v4961 = vld [vmem:[#allocation3] sm:$0xff]
        %v4962 = vld [vmem:[#allocation3 + $0x8] sm:$0xff]
        %v4963 = vld [vmem:[#allocation3 + $0x10] sm:$0xff]
        %v4964 = vld [vmem:[#allocation3 + $0x18] sm:$0xff]
        %v4965 = vld [vmem:[#allocation3 + $0x20] sm:$0xff]
        %v4966 = vld [vmem:[#allocation3 + $0x28] sm:$0xff]
        %v4967 = vld [vmem:[#allocation3 + $0x30] sm:$0xff]
        %v4968 = vld [vmem:[#allocation3 + $0x38] sm:$0xff]
        %v4969 = vld [vmem:[#allocation3 + $0x40] sm:$0xff]
        %v4970 = vld [vmem:[#allocation3 + $0x48] sm:$0xff]
        %v4971 = vld [vmem:[#allocation3 + $0x50] sm:$0xff]
        %v4972 = vld [vmem:[#allocation3 + $0x58] sm:$0xff]
        %v4973 = vld [vmem:[#allocation3 + $0x60] sm:$0xff]
        %v4974 = vld [vmem:[#allocation3 + $0x68] sm:$0xff]
        %v4975 = vld [vmem:[#allocation3 + $0x70] sm:$0xff]
        %v4976 = vld [vmem:[#allocation3 + $0x78] sm:$0xff]
        %v4977 = vld [vmem:[#allocation3 + $0x80] sm:$0xff]
        %v4978 = vld [vmem:[#allocation3 + $0x88] sm:$0xff]
        %v4979 = vld [vmem:[#allocation3 + $0x90] sm:$0xff]
        %v4980 = vld [vmem:[#allocation3 + $0x98] sm:$0xff]
        %v4981 = vld [vmem:[#allocation3 + $0xa0] sm:$0xff]
        %v4982 = vld [vmem:[#allocation3 + $0xa8] sm:$0xff]
        %v4983 = vld [vmem:[#allocation3 + $0xb0] sm:$0xff]
        %v4984 = vld [vmem:[#allocation3 + $0xb8] sm:$0xff]
        %v4985 = vld [vmem:[#allocation3 + $0xc0] sm:$0xff]
        %v4986 = vld [vmem:[#allocation3 + $0xc8] sm:$0xff]
        %v4987 = vld [vmem:[#allocation3 + $0xd0] sm:$0xff]
        %v4988 = vld [vmem:[#allocation3 + $0xd8] sm:$0xff]
        %v4989 = vld [vmem:[#allocation3 + $0xe0] sm:$0xff]
        %v4990 = vld [vmem:[#allocation3 + $0xe8] sm:$0xff]
        %v4991 = vld [vmem:[#allocation3 + $0xf0] sm:$0xff]
        %v4992 = vld [vmem:[#allocation3 + $0xf8] sm:$0xff]
        %v4993 = vld [vmem:[#allocation3 + $0x100] sm:$0xff]
        %v4994 = vld [vmem:[#allocation3 + $0x108] sm:$0xff]
        %v4995 = vld [vmem:[#allocation3 + $0x110] sm:$0xff]
        %v4996 = vld [vmem:[#allocation3 + $0x118] sm:$0xff]
        %v4997 = vld [vmem:[#allocation3 + $0x120] sm:$0xff]
        %v4998 = vld [vmem:[#allocation3 + $0x128] sm:$0xff]
        %v4999 = vld [vmem:[#allocation3 + $0x130] sm:$0xff]
        %v5000 = vld [vmem:[#allocation3 + $0x138] sm:$0xff]
        %v5001 = vld [vmem:[#allocation3 + $0x140] sm:$0xff]
        %v5002 = vld [vmem:[#allocation3 + $0x148] sm:$0xff]
        %v5003 = vld [vmem:[#allocation3 + $0x150] sm:$0xff]
        %v5004 = vld [vmem:[#allocation3 + $0x158] sm:$0xff]
        %v5005 = vld [vmem:[#allocation3 + $0x160] sm:$0xff]
        %v5006 = vld [vmem:[#allocation3 + $0x168] sm:$0xff]
        %v5007 = vld [vmem:[#allocation3 + $0x170] sm:$0xff]
        %v5008 = vld [vmem:[#allocation3 + $0x178] sm:$0xff]
        %v5009 = vld [vmem:[#allocation3 + $0x180] sm:$0xff]
        %v5010 = vld [vmem:[#allocation3 + $0x188] sm:$0xff]
        %v5011 = vld [vmem:[#allocation3 + $0x190] sm:$0xff]
        %v5012 = vld [vmem:[#allocation3 + $0x198] sm:$0xff]
        %v5013 = vld [vmem:[#allocation3 + $0x1a0] sm:$0xff]
        %v5014 = vld [vmem:[#allocation3 + $0x1a8] sm:$0xff]
        %v5015 = vld [vmem:[#allocation3 + $0x1b0] sm:$0xff]
        %v5016 = vld [vmem:[#allocation3 + $0x1b8] sm:$0xff]
        %v5017 = vld [vmem:[#allocation3 + $0x1c0] sm:$0xff]
        %v5018 = vld [vmem:[#allocation3 + $0x1c8] sm:$0xff]
        %v5019 = vld [vmem:[#allocation3 + $0x1d0] sm:$0xff]
        %v5020 = vld [vmem:[#allocation3 + $0x1d8] sm:$0xff]
        %v5021 = vld [vmem:[#allocation3 + $0x1e0] sm:$0xff]
        %v5022 = vld [vmem:[#allocation3 + $0x1e8] sm:$0xff]
        %v5023 = vld [vmem:[#allocation3 + $0x1f0] sm:$0xff]
        %v5024 = vld [vmem:[#allocation3 + $0x1f8] sm:$0xff]
        %v5025 = vld [vmem:[#allocation3 + $0x200] sm:$0xff]
        %v5026 = vld [vmem:[#allocation3 + $0x208] sm:$0xff]
        %v5027 = vld [vmem:[#allocation3 + $0x210] sm:$0xff]
        %v5028 = vld [vmem:[#allocation3 + $0x218] sm:$0xff]
        %v5029 = vld [vmem:[#allocation3 + $0x220] sm:$0xff]
        %v5030 = vld [vmem:[#allocation3 + $0x228] sm:$0xff]
        %v5031 = vld [vmem:[#allocation3 + $0x230] sm:$0xff]
        %v5032 = vld [vmem:[#allocation3 + $0x238] sm:$0xff]
        %v5033 = vld [vmem:[#allocation3 + $0x240] sm:$0xff]
        %v5034 = vld [vmem:[#allocation3 + $0x248] sm:$0xff]
        %v5035 = vld [vmem:[#allocation3 + $0x250] sm:$0xff]
        %v5036 = vld [vmem:[#allocation3 + $0x258] sm:$0xff]
        %v5037 = vld [vmem:[#allocation3 + $0x260] sm:$0xff]
        %v5038 = vld [vmem:[#allocation3 + $0x268] sm:$0xff]
        %v5039 = vld [vmem:[#allocation3 + $0x270] sm:$0xff]
        %v5040 = vld [vmem:[#allocation3 + $0x278] sm:$0xff]
        %v5041 = vld [vmem:[#allocation3 + $0x280] sm:$0xff]
        %v5042 = vld [vmem:[#allocation3 + $0x288] sm:$0xff]
        %v5043 = vld [vmem:[#allocation3 + $0x290] sm:$0xff]
        %v5044 = vld [vmem:[#allocation3 + $0x298] sm:$0xff]
        %v5045 = vld [vmem:[#allocation3 + $0x2a0] sm:$0xff]
        %v5046 = vld [vmem:[#allocation3 + $0x2a8] sm:$0xff]
        %v5047 = vld [vmem:[#allocation3 + $0x2b0] sm:$0xff]
        %v5048 = vld [vmem:[#allocation3 + $0x2b8] sm:$0xff]
        %v5049 = vld [vmem:[#allocation3 + $0x2c0] sm:$0xff]
        %v5050 = vld [vmem:[#allocation3 + $0x2c8] sm:$0xff]
        %v5051 = vld [vmem:[#allocation3 + $0x2d0] sm:$0xff]
        %v5052 = vld [vmem:[#allocation3 + $0x2d8] sm:$0xff]
        %v5053 = vld [vmem:[#allocation3 + $0x2e0] sm:$0xff]
        %v5054 = vld [vmem:[#allocation3 + $0x2e8] sm:$0xff]
        %v5055 = vld [vmem:[#allocation3 + $0x2f0] sm:$0xff]
        %v5056 = vld [vmem:[#allocation3 + $0x2f8] sm:$0xff]
        %v5089 = vunpack.c.l.b16 %v4929
        %v5090 = vunpack.c.h.b16 %v4929
        %v5091 = vunpack.c.l.b16 %v4930
        %v5092 = vunpack.c.h.b16 %v4930
        %v5093 = vunpack.c.l.b16 %v4931
        %v5094 = vunpack.c.h.b16 %v4931
        %v5095 = vunpack.c.l.b16 %v4932
        %v5096 = vunpack.c.h.b16 %v4932
        %v5097 = vunpack.c.l.b16 %v4933
        %v5098 = vunpack.c.h.b16 %v4933
        %v5099 = vunpack.c.l.b16 %v4934
        %v5100 = vunpack.c.h.b16 %v4934
        %v5101 = vunpack.c.l.b16 %v4935
        %v5102 = vunpack.c.h.b16 %v4935
        %v5103 = vunpack.c.l.b16 %v4936
        %v5104 = vunpack.c.h.b16 %v4936
        %v5105 = vunpack.c.l.b16 %v4937
        %v5106 = vunpack.c.h.b16 %v4937
        %v5107 = vunpack.c.l.b16 %v4938
        %v5108 = vunpack.c.h.b16 %v4938
        %v5109 = vunpack.c.l.b16 %v4939
        %v5110 = vunpack.c.h.b16 %v4939
        %v5111 = vunpack.c.l.b16 %v4940
        %v5112 = vunpack.c.h.b16 %v4940
        %v5113 = vunpack.c.l.b16 %v4941
        %v5114 = vunpack.c.h.b16 %v4941
        %v5115 = vunpack.c.l.b16 %v4942
        %v5116 = vunpack.c.h.b16 %v4942
        %v5117 = vunpack.c.l.b16 %v4943
        %v5118 = vunpack.c.h.b16 %v4943
        %v5119 = vunpack.c.l.b16 %v4944
        %v5120 = vunpack.c.h.b16 %v4944
        %v5121 = vunpack.c.l.b16 %v4945
        %v5122 = vunpack.c.h.b16 %v4945
        %v5123 = vunpack.c.l.b16 %v4946
        %v5124 = vunpack.c.h.b16 %v4946
        %v5125 = vunpack.c.l.b16 %v4947
        %v5126 = vunpack.c.h.b16 %v4947
        %v5127 = vunpack.c.l.b16 %v4948
        %v5128 = vunpack.c.h.b16 %v4948
        %v5129 = vunpack.c.l.b16 %v4949
        %v5130 = vunpack.c.h.b16 %v4949
        %v5131 = vunpack.c.l.b16 %v4950
        %v5132 = vunpack.c.h.b16 %v4950
        %v5133 = vunpack.c.l.b16 %v4951
        %v5134 = vunpack.c.h.b16 %v4951
        %v5135 = vunpack.c.l.b16 %v4952
        %v5136 = vunpack.c.h.b16 %v4952
        %v5137 = vunpack.c.l.b16 %v4953
        %v5138 = vunpack.c.h.b16 %v4953
        %v5139 = vunpack.c.l.b16 %v4954
        %v5140 = vunpack.c.h.b16 %v4954
        %v5141 = vunpack.c.l.b16 %v4955
        %v5142 = vunpack.c.h.b16 %v4955
        %v5143 = vunpack.c.l.b16 %v4956
        %v5144 = vunpack.c.h.b16 %v4956
        %v5145 = vunpack.c.l.b16 %v4957
        %v5146 = vunpack.c.h.b16 %v4957
        %v5147 = vunpack.c.l.b16 %v4958
        %v5148 = vunpack.c.h.b16 %v4958
        %v5149 = vunpack.c.l.b16 %v4959
        %v5150 = vunpack.c.h.b16 %v4959
        %v5151 = vunpack.c.l.b16 %v4960
        %v5152 = vunpack.c.h.b16 %v4960
        %v5153 = vpack.c.b16 %v5093, %v5089
        %v5154 = vpack.c.b16 %v5094, %v5090
        %v5155 = vpack.c.b16 %v5095, %v5091
        %v5156 = vpack.c.b16 %v5096, %v5092
        %v5157 = vpack.c.b16 %v5101, %v5097
        %v5158 = vpack.c.b16 %v5102, %v5098
        %v5159 = vpack.c.b16 %v5103, %v5099
        %v5160 = vpack.c.b16 %v5104, %v5100
        %v5161 = vpack.c.b16 %v5109, %v5105
        %v5162 = vpack.c.b16 %v5110, %v5106
        %v5163 = vpack.c.b16 %v5111, %v5107
        %v5164 = vpack.c.b16 %v5112, %v5108
        %v5165 = vpack.c.b16 %v5117, %v5113
        %v5166 = vpack.c.b16 %v5118, %v5114
        %v5167 = vpack.c.b16 %v5119, %v5115
        %v5168 = vpack.c.b16 %v5120, %v5116
        %v5169 = vpack.c.b16 %v5125, %v5121
        %v5170 = vpack.c.b16 %v5126, %v5122
        %v5171 = vpack.c.b16 %v5127, %v5123
        %v5172 = vpack.c.b16 %v5128, %v5124
        %v5173 = vpack.c.b16 %v5133, %v5129
        %v5174 = vpack.c.b16 %v5134, %v5130
        %v5175 = vpack.c.b16 %v5135, %v5131
        %v5176 = vpack.c.b16 %v5136, %v5132
        %v5177 = vpack.c.b16 %v5141, %v5137
        %v5178 = vpack.c.b16 %v5142, %v5138
        %v5179 = vpack.c.b16 %v5143, %v5139
        %v5180 = vpack.c.b16 %v5144, %v5140
        %v5181 = vpack.c.b16 %v5149, %v5145
        %v5182 = vpack.c.b16 %v5150, %v5146
        %v5183 = vpack.c.b16 %v5151, %v5147
        %v5184 = vpack.c.b16 %v5152, %v5148
        %v5313 = vunpack.c.l.b16 %v4961
        %v5314 = vunpack.c.h.b16 %v4961
        %v5315 = vunpack.c.l.b16 %v4962
        %v5316 = vunpack.c.h.b16 %v4962
        %v5317 = vunpack.c.l.b16 %v4963
        %v5318 = vunpack.c.h.b16 %v4963
        %v5319 = vunpack.c.l.b16 %v4964
        %v5320 = vunpack.c.h.b16 %v4964
        %v5321 = vunpack.c.l.b16 %v4965
        %v5322 = vunpack.c.h.b16 %v4965
        %v5323 = vunpack.c.l.b16 %v4966
        %v5324 = vunpack.c.h.b16 %v4966
        %v5325 = vunpack.c.l.b16 %v4967
        %v5326 = vunpack.c.h.b16 %v4967
        %v5327 = vunpack.c.l.b16 %v4968
        %v5328 = vunpack.c.h.b16 %v4968
        %v5329 = vunpack.c.l.b16 %v4969
        %v5330 = vunpack.c.h.b16 %v4969
        %v5331 = vunpack.c.l.b16 %v4970
        %v5332 = vunpack.c.h.b16 %v4970
        %v5333 = vunpack.c.l.b16 %v4971
        %v5334 = vunpack.c.h.b16 %v4971
        %v5335 = vunpack.c.l.b16 %v4972
        %v5336 = vunpack.c.h.b16 %v4972
        %v5337 = vunpack.c.l.b16 %v4973
        %v5338 = vunpack.c.h.b16 %v4973
        %v5339 = vunpack.c.l.b16 %v4974
        %v5340 = vunpack.c.h.b16 %v4974
        %v5341 = vunpack.c.l.b16 %v4975
        %v5342 = vunpack.c.h.b16 %v4975
        %v5343 = vunpack.c.l.b16 %v4976
        %v5344 = vunpack.c.h.b16 %v4976
        %v5345 = vunpack.c.l.b16 %v4977
        %v5346 = vunpack.c.h.b16 %v4977
        %v5347 = vunpack.c.l.b16 %v4978
        %v5348 = vunpack.c.h.b16 %v4978
        %v5349 = vunpack.c.l.b16 %v4979
        %v5350 = vunpack.c.h.b16 %v4979
        %v5351 = vunpack.c.l.b16 %v4980
        %v5352 = vunpack.c.h.b16 %v4980
        %v5353 = vunpack.c.l.b16 %v4981
        %v5354 = vunpack.c.h.b16 %v4981
        %v5355 = vunpack.c.l.b16 %v4982
        %v5356 = vunpack.c.h.b16 %v4982
        %v5357 = vunpack.c.l.b16 %v4983
        %v5358 = vunpack.c.h.b16 %v4983
        %v5359 = vunpack.c.l.b16 %v4984
        %v5360 = vunpack.c.h.b16 %v4984
        %v5361 = vunpack.c.l.b16 %v4985
        %v5362 = vunpack.c.h.b16 %v4985
        %v5363 = vunpack.c.l.b16 %v4986
        %v5364 = vunpack.c.h.b16 %v4986
        %v5365 = vunpack.c.l.b16 %v4987
        %v5366 = vunpack.c.h.b16 %v4987
        %v5367 = vunpack.c.l.b16 %v4988
        %v5368 = vunpack.c.h.b16 %v4988
        %v5369 = vunpack.c.l.b16 %v4989
        %v5370 = vunpack.c.h.b16 %v4989
        %v5371 = vunpack.c.l.b16 %v4990
        %v5372 = vunpack.c.h.b16 %v4990
        %v5373 = vunpack.c.l.b16 %v4991
        %v5374 = vunpack.c.h.b16 %v4991
        %v5375 = vunpack.c.l.b16 %v4992
        %v5376 = vunpack.c.h.b16 %v4992
        %v5377 = vunpack.c.l.b16 %v4993
        %v5378 = vunpack.c.h.b16 %v4993
        %v5379 = vunpack.c.l.b16 %v4994
        %v5380 = vunpack.c.h.b16 %v4994
        %v5381 = vunpack.c.l.b16 %v4995
        %v5382 = vunpack.c.h.b16 %v4995
        %v5383 = vunpack.c.l.b16 %v4996
        %v5384 = vunpack.c.h.b16 %v4996
        %v5385 = vunpack.c.l.b16 %v4997
        %v5386 = vunpack.c.h.b16 %v4997
        %v5387 = vunpack.c.l.b16 %v4998
        %v5388 = vunpack.c.h.b16 %v4998
        %v5389 = vunpack.c.l.b16 %v4999
        %v5390 = vunpack.c.h.b16 %v4999
        %v5391 = vunpack.c.l.b16 %v5000
        %v5392 = vunpack.c.h.b16 %v5000
        %v5393 = vunpack.c.l.b16 %v5001
        %v5394 = vunpack.c.h.b16 %v5001
        %v5395 = vunpack.c.l.b16 %v5002
        %v5396 = vunpack.c.h.b16 %v5002
        %v5397 = vunpack.c.l.b16 %v5003
        %v5398 = vunpack.c.h.b16 %v5003
        %v5399 = vunpack.c.l.b16 %v5004
        %v5400 = vunpack.c.h.b16 %v5004
        %v5401 = vunpack.c.l.b16 %v5005
        %v5402 = vunpack.c.h.b16 %v5005
        %v5403 = vunpack.c.l.b16 %v5006
        %v5404 = vunpack.c.h.b16 %v5006
        %v5405 = vunpack.c.l.b16 %v5007
        %v5406 = vunpack.c.h.b16 %v5007
        %v5407 = vunpack.c.l.b16 %v5008
        %v5408 = vunpack.c.h.b16 %v5008
        %v5409 = vunpack.c.l.b16 %v5009
        %v5410 = vunpack.c.h.b16 %v5009
        %v5411 = vunpack.c.l.b16 %v5010
        %v5412 = vunpack.c.h.b16 %v5010
        %v5413 = vunpack.c.l.b16 %v5011
        %v5414 = vunpack.c.h.b16 %v5011
        %v5415 = vunpack.c.l.b16 %v5012
        %v5416 = vunpack.c.h.b16 %v5012
        %v5417 = vunpack.c.l.b16 %v5013
        %v5418 = vunpack.c.h.b16 %v5013
        %v5419 = vunpack.c.l.b16 %v5014
        %v5420 = vunpack.c.h.b16 %v5014
        %v5421 = vunpack.c.l.b16 %v5015
        %v5422 = vunpack.c.h.b16 %v5015
        %v5423 = vunpack.c.l.b16 %v5016
        %v5424 = vunpack.c.h.b16 %v5016
        %v5425 = vunpack.c.l.b16 %v5017
        %v5426 = vunpack.c.h.b16 %v5017
        %v5427 = vunpack.c.l.b16 %v5018
        %v5428 = vunpack.c.h.b16 %v5018
        %v5429 = vunpack.c.l.b16 %v5019
        %v5430 = vunpack.c.h.b16 %v5019
        %v5431 = vunpack.c.l.b16 %v5020
        %v5432 = vunpack.c.h.b16 %v5020
        %v5433 = vunpack.c.l.b16 %v5021
        %v5434 = vunpack.c.h.b16 %v5021
        %v5435 = vunpack.c.l.b16 %v5022
        %v5436 = vunpack.c.h.b16 %v5022
        %v5437 = vunpack.c.l.b16 %v5023
        %v5438 = vunpack.c.h.b16 %v5023
        %v5439 = vunpack.c.l.b16 %v5024
        %v5440 = vunpack.c.h.b16 %v5024
        %v5441 = vunpack.c.l.b16 %v5025
        %v5442 = vunpack.c.h.b16 %v5025
        %v5443 = vunpack.c.l.b16 %v5026
        %v5444 = vunpack.c.h.b16 %v5026
        %v5445 = vunpack.c.l.b16 %v5027
        %v5446 = vunpack.c.h.b16 %v5027
        %v5447 = vunpack.c.l.b16 %v5028
        %v5448 = vunpack.c.h.b16 %v5028
        %v5449 = vunpack.c.l.b16 %v5029
        %v5450 = vunpack.c.h.b16 %v5029
        %v5451 = vunpack.c.l.b16 %v5030
        %v5452 = vunpack.c.h.b16 %v5030
        %v5453 = vunpack.c.l.b16 %v5031
        %v5454 = vunpack.c.h.b16 %v5031
        %v5455 = vunpack.c.l.b16 %v5032
        %v5456 = vunpack.c.h.b16 %v5032
        %v5457 = vunpack.c.l.b16 %v5033
        %v5458 = vunpack.c.h.b16 %v5033
        %v5459 = vunpack.c.l.b16 %v5034
        %v5460 = vunpack.c.h.b16 %v5034
        %v5461 = vunpack.c.l.b16 %v5035
        %v5462 = vunpack.c.h.b16 %v5035
        %v5463 = vunpack.c.l.b16 %v5036
        %v5464 = vunpack.c.h.b16 %v5036
        %v5465 = vunpack.c.l.b16 %v5037
        %v5466 = vunpack.c.h.b16 %v5037
        %v5467 = vunpack.c.l.b16 %v5038
        %v5468 = vunpack.c.h.b16 %v5038
        %v5469 = vunpack.c.l.b16 %v5039
        %v5470 = vunpack.c.h.b16 %v5039
        %v5471 = vunpack.c.l.b16 %v5040
        %v5472 = vunpack.c.h.b16 %v5040
        %v5473 = vunpack.c.l.b16 %v5041
        %v5474 = vunpack.c.h.b16 %v5041
        %v5475 = vunpack.c.l.b16 %v5042
        %v5476 = vunpack.c.h.b16 %v5042
        %v5477 = vunpack.c.l.b16 %v5043
        %v5478 = vunpack.c.h.b16 %v5043
        %v5479 = vunpack.c.l.b16 %v5044
        %v5480 = vunpack.c.h.b16 %v5044
        %v5481 = vunpack.c.l.b16 %v5045
        %v5482 = vunpack.c.h.b16 %v5045
        %v5483 = vunpack.c.l.b16 %v5046
        %v5484 = vunpack.c.h.b16 %v5046
        %v5485 = vunpack.c.l.b16 %v5047
        %v5486 = vunpack.c.h.b16 %v5047
        %v5487 = vunpack.c.l.b16 %v5048
        %v5488 = vunpack.c.h.b16 %v5048
        %v5489 = vunpack.c.l.b16 %v5049
        %v5490 = vunpack.c.h.b16 %v5049
        %v5491 = vunpack.c.l.b16 %v5050
        %v5492 = vunpack.c.h.b16 %v5050
        %v5493 = vunpack.c.l.b16 %v5051
        %v5494 = vunpack.c.h.b16 %v5051
        %v5495 = vunpack.c.l.b16 %v5052
        %v5496 = vunpack.c.h.b16 %v5052
        %v5497 = vunpack.c.l.b16 %v5053
        %v5498 = vunpack.c.h.b16 %v5053
        %v5499 = vunpack.c.l.b16 %v5054
        %v5500 = vunpack.c.h.b16 %v5054
        %v5501 = vunpack.c.l.b16 %v5055
        %v5502 = vunpack.c.h.b16 %v5055
        %v5503 = vunpack.c.l.b16 %v5056
        %v5504 = vunpack.c.h.b16 %v5056
        %v5505 = vpack.c.b16 %v5317, %v5313
        %v5506 = vpack.c.b16 %v5318, %v5314
        %v5507 = vpack.c.b16 %v5319, %v5315
        %v5508 = vpack.c.b16 %v5320, %v5316
        %v5509 = vpack.c.b16 %v5325, %v5321
        %v5510 = vpack.c.b16 %v5326, %v5322
        %v5511 = vpack.c.b16 %v5327, %v5323
        %v5512 = vpack.c.b16 %v5328, %v5324
        %v5513 = vpack.c.b16 %v5333, %v5329
        %v5514 = vpack.c.b16 %v5334, %v5330
        %v5515 = vpack.c.b16 %v5335, %v5331
        %v5516 = vpack.c.b16 %v5336, %v5332
        %v5517 = vpack.c.b16 %v5341, %v5337
        %v5518 = vpack.c.b16 %v5342, %v5338
        %v5519 = vpack.c.b16 %v5343, %v5339
        %v5520 = vpack.c.b16 %v5344, %v5340
        %v5521 = vpack.c.b16 %v5349, %v5345
        %v5522 = vpack.c.b16 %v5350, %v5346
        %v5523 = vpack.c.b16 %v5351, %v5347
        %v5524 = vpack.c.b16 %v5352, %v5348
        %v5525 = vpack.c.b16 %v5357, %v5353
        %v5526 = vpack.c.b16 %v5358, %v5354
        %v5527 = vpack.c.b16 %v5359, %v5355
        %v5528 = vpack.c.b16 %v5360, %v5356
        %v5529 = vpack.c.b16 %v5365, %v5361
        %v5530 = vpack.c.b16 %v5366, %v5362
        %v5531 = vpack.c.b16 %v5367, %v5363
        %v5532 = vpack.c.b16 %v5368, %v5364
        %v5533 = vpack.c.b16 %v5373, %v5369
        %v5534 = vpack.c.b16 %v5374, %v5370
        %v5535 = vpack.c.b16 %v5375, %v5371
        %v5536 = vpack.c.b16 %v5376, %v5372
        %v5537 = vpack.c.b16 %v5381, %v5377
        %v5538 = vpack.c.b16 %v5382, %v5378
        %v5539 = vpack.c.b16 %v5383, %v5379
        %v5540 = vpack.c.b16 %v5384, %v5380
        %v5541 = vpack.c.b16 %v5389, %v5385
        %v5542 = vpack.c.b16 %v5390, %v5386
        %v5543 = vpack.c.b16 %v5391, %v5387
        %v5544 = vpack.c.b16 %v5392, %v5388
        %v5545 = vpack.c.b16 %v5397, %v5393
        %v5546 = vpack.c.b16 %v5398, %v5394
        %v5547 = vpack.c.b16 %v5399, %v5395
        %v5548 = vpack.c.b16 %v5400, %v5396
        %v5549 = vpack.c.b16 %v5405, %v5401
        %v5550 = vpack.c.b16 %v5406, %v5402
        %v5551 = vpack.c.b16 %v5407, %v5403
        %v5552 = vpack.c.b16 %v5408, %v5404
        %v5553 = vpack.c.b16 %v5413, %v5409
        %v5554 = vpack.c.b16 %v5414, %v5410
        %v5555 = vpack.c.b16 %v5415, %v5411
        %v5556 = vpack.c.b16 %v5416, %v5412
        %v5557 = vpack.c.b16 %v5421, %v5417
        %v5558 = vpack.c.b16 %v5422, %v5418
        %v5559 = vpack.c.b16 %v5423, %v5419
        %v5560 = vpack.c.b16 %v5424, %v5420
        %v5561 = vpack.c.b16 %v5429, %v5425
        %v5562 = vpack.c.b16 %v5430, %v5426
        %v5563 = vpack.c.b16 %v5431, %v5427
        %v5564 = vpack.c.b16 %v5432, %v5428
        %v5565 = vpack.c.b16 %v5437, %v5433
        %v5566 = vpack.c.b16 %v5438, %v5434
        %v5567 = vpack.c.b16 %v5439, %v5435
        %v5568 = vpack.c.b16 %v5440, %v5436
        %v5569 = vpack.c.b16 %v5445, %v5441
        %v5570 = vpack.c.b16 %v5446, %v5442
        %v5571 = vpack.c.b16 %v5447, %v5443
        %v5572 = vpack.c.b16 %v5448, %v5444
        %v5573 = vpack.c.b16 %v5453, %v5449
        %v5574 = vpack.c.b16 %v5454, %v5450
        %v5575 = vpack.c.b16 %v5455, %v5451
        %v5576 = vpack.c.b16 %v5456, %v5452
        %v5577 = vpack.c.b16 %v5461, %v5457
        %v5578 = vpack.c.b16 %v5462, %v5458
        %v5579 = vpack.c.b16 %v5463, %v5459
        %v5580 = vpack.c.b16 %v5464, %v5460
        %v5581 = vpack.c.b16 %v5469, %v5465
        %v5582 = vpack.c.b16 %v5470, %v5466
        %v5583 = vpack.c.b16 %v5471, %v5467
        %v5584 = vpack.c.b16 %v5472, %v5468
        %v5585 = vpack.c.b16 %v5477, %v5473
        %v5586 = vpack.c.b16 %v5478, %v5474
        %v5587 = vpack.c.b16 %v5479, %v5475
        %v5588 = vpack.c.b16 %v5480, %v5476
        %v5589 = vpack.c.b16 %v5485, %v5481
        %v5590 = vpack.c.b16 %v5486, %v5482
        %v5591 = vpack.c.b16 %v5487, %v5483
        %v5592 = vpack.c.b16 %v5488, %v5484
        %v5593 = vpack.c.b16 %v5493, %v5489
        %v5594 = vpack.c.b16 %v5494, %v5490
        %v5595 = vpack.c.b16 %v5495, %v5491
        %v5596 = vpack.c.b16 %v5496, %v5492
        %v5597 = vpack.c.b16 %v5501, %v5497
        %v5598 = vpack.c.b16 %v5502, %v5498
        %v5599 = vpack.c.b16 %v5503, %v5499
        %v5600 = vpack.c.b16 %v5504, %v5500
        %5697 = vmatprep.subr.bf16.mxu0 %v5534
        %5698 = vmatpush1.bf16.xpose.msra.mxu0 %v5533
        %5699 = vmatprep.subr.bf16.mxu0 %v5530
        %5700 = vmatpush1.bf16.xpose.msra.mxu0 %v5529
        %5701 = vmatprep.subr.bf16.mxu0 %v5526
        %5702 = vmatpush1.bf16.xpose.msra.mxu0 %v5525
        %5703 = vmatprep.subr.bf16.mxu0 %v5522
        %5704 = vmatpush1.bf16.xpose.msra.mxu0 %v5521
        %5705 = vmatprep.subr.bf16.mxu0 %v5518
        %5706 = vmatpush1.bf16.xpose.msra.mxu0 %v5517
        %5707 = vmatprep.subr.bf16.mxu0 %v5514
        %5708 = vmatpush1.bf16.xpose.msra.mxu0 %v5513
        %5709 = vmatprep.subr.bf16.mxu0 %v5510
        %5710 = vmatpush1.bf16.xpose.msra.mxu0 %v5509
        %5711 = vmatprep.subr.bf16.mxu0 %v5506
        %5712 = vmatpush1.bf16.xpose.msra.mxu0 %v5505
        %5713 = vmatprep.subr.bf16.mxu0 %v5566
        %5714 = vmatpush2.bf16.xpose.msra.mxu0 %v5565
        %5715 = vmatprep.subr.bf16.mxu0 %v5562
        %5716 = vmatpush2.bf16.xpose.msra.mxu0 %v5561
        %5717 = vmatprep.subr.bf16.mxu0 %v5558
        %5718 = vmatpush2.bf16.xpose.msra.mxu0 %v5557
        %5719 = vmatprep.subr.bf16.mxu0 %v5554
        %5720 = vmatpush2.bf16.xpose.msra.mxu0 %v5553
        %5721 = vmatprep.subr.bf16.mxu0 %v5550
        %5722 = vmatpush2.bf16.xpose.msra.mxu0 %v5549
        %5723 = vmatprep.subr.bf16.mxu0 %v5546
        %5724 = vmatpush2.bf16.xpose.msra.mxu0 %v5545
        %5725 = vmatprep.subr.bf16.mxu0 %v5542
        %5726 = vmatpush2.bf16.xpose.msra.mxu0 %v5541
        %5727 = vmatprep.subr.bf16.mxu0 %v5538
        %5728 = vmatpush2.bf16.xpose.msra.mxu0 %v5537
        %5729 = vmatprep.mubr.bf16.mxu0 %v5154
        %5730 = vmatmul.mubr.bf16.gmra.mxu0 %v5153
        %v5731 = vpop.f32.mrf.mxu0
        %v5732 = vadd.f32 0.0, %v5731
        %v5733 = vpop.f32.mrf.mxu0
        %v5734 = vadd.f32 0.0, %v5733
        %v5735 = vpop.f32.mrf.mxu0
        %v5736 = vadd.f32 0.0, %v5735
        %v5737 = vpop.f32.mrf.mxu0
        %v5738 = vadd.f32 0.0, %v5737
        %5739 = vmatprep.mubr.bf16.mxu0 %v5158
        %5740 = vmatmul.mubr.bf16.gmra.mxu0 %v5157
        %v5741 = vpop.f32.mrf.mxu0
        %v5742 = vadd.f32 0.0, %v5741
        %v5743 = vpop.f32.mrf.mxu0
        %v5744 = vadd.f32 0.0, %v5743
        %v5745 = vpop.f32.mrf.mxu0
        %v5746 = vadd.f32 0.0, %v5745
        %v5747 = vpop.f32.mrf.mxu0
        %v5748 = vadd.f32 0.0, %v5747
        %5749 = vmatprep.mubr.bf16.mxu0 %v5162
        %5750 = vmatmul.mubr.bf16.gmra.mxu0 %v5161
        %v5751 = vpop.f32.mrf.mxu0
        %v5752 = vadd.f32 0.0, %v5751
        %v5753 = vpop.f32.mrf.mxu0
        %v5754 = vadd.f32 0.0, %v5753
        %v5755 = vpop.f32.mrf.mxu0
        %v5756 = vadd.f32 0.0, %v5755
        %v5757 = vpop.f32.mrf.mxu0
        %v5758 = vadd.f32 0.0, %v5757
        %5759 = vmatprep.mubr.bf16.mxu0 %v5166
        %5760 = vmatmul.mubr.bf16.gmra.mxu0 %v5165
        %v5761 = vpop.f32.mrf.mxu0
        %v5762 = vadd.f32 0.0, %v5761
        %v5763 = vpop.f32.mrf.mxu0
        %v5764 = vadd.f32 0.0, %v5763
        %v5765 = vpop.f32.mrf.mxu0
        %v5766 = vadd.f32 0.0, %v5765
        %v5767 = vpop.f32.mrf.mxu0
        %v5768 = vadd.f32 0.0, %v5767
        %5769 = vmatprep.mubr.bf16.mxu0 %v5170
        %5770 = vmatmul.mubr.bf16.gmra.mxu0 %v5169
        %v5771 = vpop.f32.mrf.mxu0
        %v5772 = vadd.f32 0.0, %v5771
        %v5773 = vpop.f32.mrf.mxu0
        %v5774 = vadd.f32 0.0, %v5773
        %v5775 = vpop.f32.mrf.mxu0
        %v5776 = vadd.f32 0.0, %v5775
        %v5777 = vpop.f32.mrf.mxu0
        %v5778 = vadd.f32 0.0, %v5777
        %5779 = vmatprep.mubr.bf16.mxu0 %v5174
        %5780 = vmatmul.mubr.bf16.gmra.mxu0 %v5173
        %v5781 = vpop.f32.mrf.mxu0
        %v5782 = vadd.f32 0.0, %v5781
        %v5783 = vpop.f32.mrf.mxu0
        %v5784 = vadd.f32 0.0, %v5783
        %v5785 = vpop.f32.mrf.mxu0
        %v5786 = vadd.f32 0.0, %v5785
        %v5787 = vpop.f32.mrf.mxu0
        %v5788 = vadd.f32 0.0, %v5787
        %5789 = vmatprep.mubr.bf16.mxu0 %v5178
        %5790 = vmatmul.mubr.bf16.gmra.mxu0 %v5177
        %v5791 = vpop.f32.mrf.mxu0
        %v5792 = vadd.f32 0.0, %v5791
        %v5793 = vpop.f32.mrf.mxu0
        %v5794 = vadd.f32 0.0, %v5793
        %v5795 = vpop.f32.mrf.mxu0
        %v5796 = vadd.f32 0.0, %v5795
        %v5797 = vpop.f32.mrf.mxu0
        %v5798 = vadd.f32 0.0, %v5797
        %5799 = vmatprep.mubr.bf16.mxu0 %v5182
        %5800 = vmatmul.mubr.bf16.gmra.mxu0 %v5181
        %v5801 = vpop.f32.mrf.mxu0
        %v5802 = vadd.f32 0.0, %v5801
        %v5803 = vpop.f32.mrf.mxu0
        %v5804 = vadd.f32 0.0, %v5803
        %v5805 = vpop.f32.mrf.mxu0
        %v5806 = vadd.f32 0.0, %v5805
        %v5807 = vpop.f32.mrf.mxu0
        %v5808 = vadd.f32 0.0, %v5807
        %5809 = vdwg.mxu0
        %5810 = vmatprep.subr.bf16.mxu0 %v5536
        %5811 = vmatpush1.bf16.xpose.msra.mxu0 %v5535
        %5812 = vmatprep.subr.bf16.mxu0 %v5532
        %5813 = vmatpush1.bf16.xpose.msra.mxu0 %v5531
        %5814 = vmatprep.subr.bf16.mxu0 %v5528
        %5815 = vmatpush1.bf16.xpose.msra.mxu0 %v5527
        %5816 = vmatprep.subr.bf16.mxu0 %v5524
        %5817 = vmatpush1.bf16.xpose.msra.mxu0 %v5523
        %5818 = vmatprep.subr.bf16.mxu0 %v5520
        %5819 = vmatpush1.bf16.xpose.msra.mxu0 %v5519
        %5820 = vmatprep.subr.bf16.mxu0 %v5516
        %5821 = vmatpush1.bf16.xpose.msra.mxu0 %v5515
        %5822 = vmatprep.subr.bf16.mxu0 %v5512
        %5823 = vmatpush1.bf16.xpose.msra.mxu0 %v5511
        %5824 = vmatprep.subr.bf16.mxu0 %v5508
        %5825 = vmatpush1.bf16.xpose.msra.mxu0 %v5507
        %5826 = vmatprep.subr.bf16.mxu0 %v5568
        %5827 = vmatpush2.bf16.xpose.msra.mxu0 %v5567
        %5828 = vmatprep.subr.bf16.mxu0 %v5564
        %5829 = vmatpush2.bf16.xpose.msra.mxu0 %v5563
        %5830 = vmatprep.subr.bf16.mxu0 %v5560
        %5831 = vmatpush2.bf16.xpose.msra.mxu0 %v5559
        %5832 = vmatprep.subr.bf16.mxu0 %v5556
        %5833 = vmatpush2.bf16.xpose.msra.mxu0 %v5555
        %5834 = vmatprep.subr.bf16.mxu0 %v5552
        %5835 = vmatpush2.bf16.xpose.msra.mxu0 %v5551
        %5836 = vmatprep.subr.bf16.mxu0 %v5548
        %5837 = vmatpush2.bf16.xpose.msra.mxu0 %v5547
        %5838 = vmatprep.subr.bf16.mxu0 %v5544
        %5839 = vmatpush2.bf16.xpose.msra.mxu0 %v5543
        %5840 = vmatprep.subr.bf16.mxu0 %v5540
        %5841 = vmatpush2.bf16.xpose.msra.mxu0 %v5539
        %5842 = vmatprep.mubr.bf16.mxu0 %v5156
        %5843 = vmatmul.mubr.bf16.gmra.mxu0 %v5155
        %v5844 = vpop.f32.mrf.mxu0
        %v5845 = vadd.f32 %v5732, %v5844
        %v5846 = vpop.f32.mrf.mxu0
        %v5847 = vadd.f32 %v5734, %v5846
        %v5848 = vpop.f32.mrf.mxu0
        %v5849 = vadd.f32 %v5736, %v5848
        %v5850 = vpop.f32.mrf.mxu0
        %v5851 = vadd.f32 %v5738, %v5850
        %5852 = vmatprep.mubr.bf16.mxu0 %v5160
        %5853 = vmatmul.mubr.bf16.gmra.mxu0 %v5159
        %v5854 = vpop.f32.mrf.mxu0
        %v5855 = vadd.f32 %v5742, %v5854
        %v5856 = vpop.f32.mrf.mxu0
        %v5857 = vadd.f32 %v5744, %v5856
        %v5858 = vpop.f32.mrf.mxu0
        %v5859 = vadd.f32 %v5746, %v5858
        %v5860 = vpop.f32.mrf.mxu0
        %v5861 = vadd.f32 %v5748, %v5860
        %5862 = vmatprep.mubr.bf16.mxu0 %v5164
        %5863 = vmatmul.mubr.bf16.gmra.mxu0 %v5163
        %v5864 = vpop.f32.mrf.mxu0
        %v5865 = vadd.f32 %v5752, %v5864
        %v5866 = vpop.f32.mrf.mxu0
        %v5867 = vadd.f32 %v5754, %v5866
        %v5868 = vpop.f32.mrf.mxu0
        %v5869 = vadd.f32 %v5756, %v5868
        %v5870 = vpop.f32.mrf.mxu0
        %v5871 = vadd.f32 %v5758, %v5870
        %5872 = vmatprep.mubr.bf16.mxu0 %v5168
        %5873 = vmatmul.mubr.bf16.gmra.mxu0 %v5167
        %v5874 = vpop.f32.mrf.mxu0
        %v5875 = vadd.f32 %v5762, %v5874
        %v5876 = vpop.f32.mrf.mxu0
        %v5877 = vadd.f32 %v5764, %v5876
        %v5878 = vpop.f32.mrf.mxu0
        %v5879 = vadd.f32 %v5766, %v5878
        %v5880 = vpop.f32.mrf.mxu0
        %v5881 = vadd.f32 %v5768, %v5880
        %5882 = vmatprep.mubr.bf16.mxu0 %v5172
        %5883 = vmatmul.mubr.bf16.gmra.mxu0 %v5171
        %v5884 = vpop.f32.mrf.mxu0
        %v5885 = vadd.f32 %v5772, %v5884
        %v5886 = vpop.f32.mrf.mxu0
        %v5887 = vadd.f32 %v5774, %v5886
        %v5888 = vpop.f32.mrf.mxu0
        %v5889 = vadd.f32 %v5776, %v5888
        %v5890 = vpop.f32.mrf.mxu0
        %v5891 = vadd.f32 %v5778, %v5890
        %5892 = vmatprep.mubr.bf16.mxu0 %v5176
        %5893 = vmatmul.mubr.bf16.gmra.mxu0 %v5175
        %v5894 = vpop.f32.mrf.mxu0
        %v5895 = vadd.f32 %v5782, %v5894
        %v5896 = vpop.f32.mrf.mxu0
        %v5897 = vadd.f32 %v5784, %v5896
        %v5898 = vpop.f32.mrf.mxu0
        %v5899 = vadd.f32 %v5786, %v5898
        %v5900 = vpop.f32.mrf.mxu0
        %v5901 = vadd.f32 %v5788, %v5900
        %5902 = vmatprep.mubr.bf16.mxu0 %v5180
        %5903 = vmatmul.mubr.bf16.gmra.mxu0 %v5179
        %v5904 = vpop.f32.mrf.mxu0
        %v5905 = vadd.f32 %v5792, %v5904
        %v5906 = vpop.f32.mrf.mxu0
        %v5907 = vadd.f32 %v5794, %v5906
        %v5908 = vpop.f32.mrf.mxu0
        %v5909 = vadd.f32 %v5796, %v5908
        %v5910 = vpop.f32.mrf.mxu0
        %v5911 = vadd.f32 %v5798, %v5910
        %5912 = vmatprep.mubr.bf16.mxu0 %v5184
        %5913 = vmatmul.mubr.bf16.gmra.mxu0 %v5183
        %v5914 = vpop.f32.mrf.mxu0
        %v5915 = vadd.f32 %v5802, %v5914
        %v5916 = vpop.f32.mrf.mxu0
        %v5917 = vadd.f32 %v5804, %v5916
        %v5918 = vpop.f32.mrf.mxu0
        %v5919 = vadd.f32 %v5806, %v5918
        %v5920 = vpop.f32.mrf.mxu0
        %v5921 = vadd.f32 %v5808, %v5920
        %5922 = vdwg.mxu0
        %5923 = vmatprep.subr.bf16.mxu0 %v5598
        %5924 = vmatpush1.bf16.xpose.msra.mxu0 %v5597
        %5925 = vmatprep.subr.bf16.mxu0 %v5594
        %5926 = vmatpush1.bf16.xpose.msra.mxu0 %v5593
        %5927 = vmatprep.subr.bf16.mxu0 %v5590
        %5928 = vmatpush1.bf16.xpose.msra.mxu0 %v5589
        %5929 = vmatprep.subr.bf16.mxu0 %v5586
        %5930 = vmatpush1.bf16.xpose.msra.mxu0 %v5585
        %5931 = vmatprep.subr.bf16.mxu0 %v5582
        %5932 = vmatpush1.bf16.xpose.msra.mxu0 %v5581
        %5933 = vmatprep.subr.bf16.mxu0 %v5578
        %5934 = vmatpush1.bf16.xpose.msra.mxu0 %v5577
        %5935 = vmatprep.subr.bf16.mxu0 %v5574
        %5936 = vmatpush1.bf16.xpose.msra.mxu0 %v5573
        %5937 = vmatprep.subr.bf16.mxu0 %v5570
        %5938 = vmatpush1.bf16.xpose.msra.mxu0 %v5569
        %5939 = vmatprep.subr.bf16.mxu0 0
        %5940 = vmatpush2.bf16.xpose.msra.mxu0 0
        %5941 = vmatprep.subr.bf16.mxu0 0
        %5942 = vmatpush2.bf16.xpose.msra.mxu0 0
        %5943 = vmatprep.subr.bf16.mxu0 0
        %5944 = vmatpush2.bf16.xpose.msra.mxu0 0
        %5945 = vmatprep.subr.bf16.mxu0 0
        %5946 = vmatpush2.bf16.xpose.msra.mxu0 0
        %5947 = vmatprep.subr.bf16.mxu0 0
        %5948 = vmatpush2.bf16.xpose.msra.mxu0 0
        %5949 = vmatprep.subr.bf16.mxu0 0
        %5950 = vmatpush2.bf16.xpose.msra.mxu0 0
        %5951 = vmatprep.subr.bf16.mxu0 0
        %5952 = vmatpush2.bf16.xpose.msra.mxu0 0
        %5953 = vmatprep.subr.bf16.mxu0 0
        %5954 = vmatpush2.bf16.xpose.msra.mxu0 0
        %5955 = vmatprep.mubr.bf16.mxu0 %v5154
        %5956 = vmatmul.mubr.bf16.gmra.mxu0 %v5153
        %v5957 = vpop.f32.mrf.mxu0
        %v5958 = vadd.f32 0.0, %v5957
        %v5959 = vpop.f32.mrf.mxu0
        %v5960 = vpop.f32.mrf.mxu0
        %v5961 = vadd.f32 0.0, %v5960
        %v5962 = vpop.f32.mrf.mxu0
        %5963 = vmatprep.mubr.bf16.mxu0 %v5158
        %5964 = vmatmul.mubr.bf16.gmra.mxu0 %v5157
        %v5965 = vpop.f32.mrf.mxu0
        %v5966 = vadd.f32 0.0, %v5965
        %v5967 = vpop.f32.mrf.mxu0
        %v5968 = vpop.f32.mrf.mxu0
        %v5969 = vadd.f32 0.0, %v5968
        %v5970 = vpop.f32.mrf.mxu0
        %5971 = vmatprep.mubr.bf16.mxu0 %v5162
        %5972 = vmatmul.mubr.bf16.gmra.mxu0 %v5161
        %v5973 = vpop.f32.mrf.mxu0
        %v5974 = vadd.f32 0.0, %v5973
        %v5975 = vpop.f32.mrf.mxu0
        %v5976 = vpop.f32.mrf.mxu0
        %v5977 = vadd.f32 0.0, %v5976
        %v5978 = vpop.f32.mrf.mxu0
        %5979 = vmatprep.mubr.bf16.mxu0 %v5166
        %5980 = vmatmul.mubr.bf16.gmra.mxu0 %v5165
        %v5981 = vpop.f32.mrf.mxu0
        %v5982 = vadd.f32 0.0, %v5981
        %v5983 = vpop.f32.mrf.mxu0
        %v5984 = vpop.f32.mrf.mxu0
        %v5985 = vadd.f32 0.0, %v5984
        %v5986 = vpop.f32.mrf.mxu0
        %5987 = vmatprep.mubr.bf16.mxu0 %v5170
        %5988 = vmatmul.mubr.bf16.gmra.mxu0 %v5169
        %v5989 = vpop.f32.mrf.mxu0
        %v5990 = vadd.f32 0.0, %v5989
        %v5991 = vpop.f32.mrf.mxu0
        %v5992 = vpop.f32.mrf.mxu0
        %v5993 = vadd.f32 0.0, %v5992
        %v5994 = vpop.f32.mrf.mxu0
        %5995 = vmatprep.mubr.bf16.mxu0 %v5174
        %5996 = vmatmul.mubr.bf16.gmra.mxu0 %v5173
        %v5997 = vpop.f32.mrf.mxu0
        %v5998 = vadd.f32 0.0, %v5997
        %v5999 = vpop.f32.mrf.mxu0
        %v6000 = vpop.f32.mrf.mxu0
        %v6001 = vadd.f32 0.0, %v6000
        %v6002 = vpop.f32.mrf.mxu0
        %6003 = vmatprep.mubr.bf16.mxu0 %v5178
        %6004 = vmatmul.mubr.bf16.gmra.mxu0 %v5177
        %v6005 = vpop.f32.mrf.mxu0
        %v6006 = vadd.f32 0.0, %v6005
        %v6007 = vpop.f32.mrf.mxu0
        %v6008 = vpop.f32.mrf.mxu0
        %v6009 = vadd.f32 0.0, %v6008
        %v6010 = vpop.f32.mrf.mxu0
        %6011 = vmatprep.mubr.bf16.mxu0 %v5182
        %6012 = vmatmul.mubr.bf16.gmra.mxu0 %v5181
        %v6013 = vpop.f32.mrf.mxu0
        %v6014 = vadd.f32 0.0, %v6013
        %v6015 = vpop.f32.mrf.mxu0
        %v6016 = vpop.f32.mrf.mxu0
        %v6017 = vadd.f32 0.0, %v6016
        %v6018 = vpop.f32.mrf.mxu0
        %6019 = vdwg.mxu0
        %6020 = vmatprep.subr.bf16.mxu0 %v5600
        %6021 = vmatpush1.bf16.xpose.msra.mxu0 %v5599
        %6022 = vmatprep.subr.bf16.mxu0 %v5596
        %6023 = vmatpush1.bf16.xpose.msra.mxu0 %v5595
        %6024 = vmatprep.subr.bf16.mxu0 %v5592
        %6025 = vmatpush1.bf16.xpose.msra.mxu0 %v5591
        %6026 = vmatprep.subr.bf16.mxu0 %v5588
        %6027 = vmatpush1.bf16.xpose.msra.mxu0 %v5587
        %6028 = vmatprep.subr.bf16.mxu0 %v5584
        %6029 = vmatpush1.bf16.xpose.msra.mxu0 %v5583
        %6030 = vmatprep.subr.bf16.mxu0 %v5580
        %6031 = vmatpush1.bf16.xpose.msra.mxu0 %v5579
        %6032 = vmatprep.subr.bf16.mxu0 %v5576
        %6033 = vmatpush1.bf16.xpose.msra.mxu0 %v5575
        %6034 = vmatprep.subr.bf16.mxu0 %v5572
        %6035 = vmatpush1.bf16.xpose.msra.mxu0 %v5571
        %6036 = vmatprep.subr.bf16.mxu0 0
        %6037 = vmatpush2.bf16.xpose.msra.mxu0 0
        %6038 = vmatprep.subr.bf16.mxu0 0
        %6039 = vmatpush2.bf16.xpose.msra.mxu0 0
        %6040 = vmatprep.subr.bf16.mxu0 0
        %6041 = vmatpush2.bf16.xpose.msra.mxu0 0
        %6042 = vmatprep.subr.bf16.mxu0 0
        %6043 = vmatpush2.bf16.xpose.msra.mxu0 0
        %6044 = vmatprep.subr.bf16.mxu0 0
        %6045 = vmatpush2.bf16.xpose.msra.mxu0 0
        %6046 = vmatprep.subr.bf16.mxu0 0
        %6047 = vmatpush2.bf16.xpose.msra.mxu0 0
        %6048 = vmatprep.subr.bf16.mxu0 0
        %6049 = vmatpush2.bf16.xpose.msra.mxu0 0
        %6050 = vmatprep.subr.bf16.mxu0 0
        %6051 = vmatpush2.bf16.xpose.msra.mxu0 0
        %6052 = vmatprep.mubr.bf16.mxu0 %v5156
        %6053 = vmatmul.mubr.bf16.gmra.mxu0 %v5155
        %v6054 = vpop.f32.mrf.mxu0
        %v6055 = vadd.f32 %v5958, %v6054
        %v6056 = vpop.f32.mrf.mxu0
        %v6057 = vpop.f32.mrf.mxu0
        %v6058 = vadd.f32 %v5961, %v6057
        %v6059 = vpop.f32.mrf.mxu0
        %6060 = vmatprep.mubr.bf16.mxu0 %v5160
        %6061 = vmatmul.mubr.bf16.gmra.mxu0 %v5159
        %v6062 = vpop.f32.mrf.mxu0
        %v6063 = vadd.f32 %v5966, %v6062
        %v6064 = vpop.f32.mrf.mxu0
        %v6065 = vpop.f32.mrf.mxu0
        %v6066 = vadd.f32 %v5969, %v6065
        %v6067 = vpop.f32.mrf.mxu0
        %6068 = vmatprep.mubr.bf16.mxu0 %v5164
        %6069 = vmatmul.mubr.bf16.gmra.mxu0 %v5163
        %v6070 = vpop.f32.mrf.mxu0
        %v6071 = vadd.f32 %v5974, %v6070
        %v6072 = vpop.f32.mrf.mxu0
        %v6073 = vpop.f32.mrf.mxu0
        %v6074 = vadd.f32 %v5977, %v6073
        %v6075 = vpop.f32.mrf.mxu0
        %6076 = vmatprep.mubr.bf16.mxu0 %v5168
        %6077 = vmatmul.mubr.bf16.gmra.mxu0 %v5167
        %v6078 = vpop.f32.mrf.mxu0
        %v6079 = vadd.f32 %v5982, %v6078
        %v6080 = vpop.f32.mrf.mxu0
        %v6081 = vpop.f32.mrf.mxu0
        %v6082 = vadd.f32 %v5985, %v6081
        %v6083 = vpop.f32.mrf.mxu0
        %6084 = vmatprep.mubr.bf16.mxu0 %v5172
        %6085 = vmatmul.mubr.bf16.gmra.mxu0 %v5171
        %v6086 = vpop.f32.mrf.mxu0
        %v6087 = vadd.f32 %v5990, %v6086
        %v6088 = vpop.f32.mrf.mxu0
        %v6089 = vpop.f32.mrf.mxu0
        %v6090 = vadd.f32 %v5993, %v6089
        %v6091 = vpop.f32.mrf.mxu0
        %6092 = vmatprep.mubr.bf16.mxu0 %v5176
        %6093 = vmatmul.mubr.bf16.gmra.mxu0 %v5175
        %v6094 = vpop.f32.mrf.mxu0
        %v6095 = vadd.f32 %v5998, %v6094
        %v6096 = vpop.f32.mrf.mxu0
        %v6097 = vpop.f32.mrf.mxu0
        %v6098 = vadd.f32 %v6001, %v6097
        %v6099 = vpop.f32.mrf.mxu0
        %6100 = vmatprep.mubr.bf16.mxu0 %v5180
        %6101 = vmatmul.mubr.bf16.gmra.mxu0 %v5179
        %v6102 = vpop.f32.mrf.mxu0
        %v6103 = vadd.f32 %v6006, %v6102
        %v6104 = vpop.f32.mrf.mxu0
        %v6105 = vpop.f32.mrf.mxu0
        %v6106 = vadd.f32 %v6009, %v6105
        %v6107 = vpop.f32.mrf.mxu0
        %6108 = vmatprep.mubr.bf16.mxu0 %v5184
        %6109 = vmatmul.mubr.bf16.gmra.mxu0 %v5183
        %v6110 = vpop.f32.mrf.mxu0
        %v6111 = vadd.f32 %v6014, %v6110
        %v6112 = vpop.f32.mrf.mxu0
        %v6113 = vpop.f32.mrf.mxu0
        %v6114 = vadd.f32 %v6017, %v6113
        %v6115 = vpop.f32.mrf.mxu0
        %6116 = vdwg.mxu0
        %6117 = vst [vmem:[%s221] sm:$0xff] %v5845
        %6118 = vst [vmem:[%s221 + $0x8] sm:$0xff] %v5847
        %6119 = vst [vmem:[%s221 + $0x10] sm:$0xff] %v6055
        %6120 = vst [vmem:[%s221 + $0x18] sm:$0xff] %v5849
        %6121 = vst [vmem:[%s221 + $0x20] sm:$0xff] %v5851
        %6122 = vst [vmem:[%s221 + $0x28] sm:$0xff] %v6058
        %6123 = vst [vmem:[%s221 + $0x30] sm:$0xff] %v5855
        %6124 = vst [vmem:[%s221 + $0x38] sm:$0xff] %v5857
        %6125 = vst [vmem:[%s221 + $0x40] sm:$0xff] %v6063
        %6126 = vst [vmem:[%s221 + $0x48] sm:$0xff] %v5859
        %6127 = vst [vmem:[%s221 + $0x50] sm:$0xff] %v5861
        %6128 = vst [vmem:[%s221 + $0x58] sm:$0xff] %v6066
        %6129 = vst [vmem:[%s221 + $0x60] sm:$0xff] %v5865
        %6130 = vst [vmem:[%s221 + $0x68] sm:$0xff] %v5867
        %6131 = vst [vmem:[%s221 + $0x70] sm:$0xff] %v6071
        %6132 = vst [vmem:[%s221 + $0x78] sm:$0xff] %v5869
        %6133 = vst [vmem:[%s221 + $0x80] sm:$0xff] %v5871
        %6134 = vst [vmem:[%s221 + $0x88] sm:$0xff] %v6074
        %6135 = vst [vmem:[%s221 + $0x90] sm:$0xff] %v5875
        %6136 = vst [vmem:[%s221 + $0x98] sm:$0xff] %v5877
        %6137 = vst [vmem:[%s221 + $0xa0] sm:$0xff] %v6079
        %6138 = vst [vmem:[%s221 + $0xa8] sm:$0xff] %v5879
        %6139 = vst [vmem:[%s221 + $0xb0] sm:$0xff] %v5881
        %6140 = vst [vmem:[%s221 + $0xb8] sm:$0xff] %v6082
        %6141 = vst [vmem:[%s221 + $0xc0] sm:$0xff] %v5885
        %6142 = vst [vmem:[%s221 + $0xc8] sm:$0xff] %v5887
        %6143 = vst [vmem:[%s221 + $0xd0] sm:$0xff] %v6087
        %6144 = vst [vmem:[%s221 + $0xd8] sm:$0xff] %v5889
        %6145 = vst [vmem:[%s221 + $0xe0] sm:$0xff] %v5891
        %6146 = vst [vmem:[%s221 + $0xe8] sm:$0xff] %v6090
        %6147 = vst [vmem:[%s221 + $0xf0] sm:$0xff] %v5895
        %6148 = vst [vmem:[%s221 + $0xf8] sm:$0xff] %v5897
        %6149 = vst [vmem:[%s221 + $0x100] sm:$0xff] %v6095
        %6150 = vst [vmem:[%s221 + $0x108] sm:$0xff] %v5899
        %6151 = vst [vmem:[%s221 + $0x110] sm:$0xff] %v5901
        %6152 = vst [vmem:[%s221 + $0x118] sm:$0xff] %v6098
        %6153 = vst [vmem:[%s221 + $0x120] sm:$0xff] %v5905
        %6154 = vst [vmem:[%s221 + $0x128] sm:$0xff] %v5907
        %6155 = vst [vmem:[%s221 + $0x130] sm:$0xff] %v6103
        %6156 = vst [vmem:[%s221 + $0x138] sm:$0xff] %v5909
        %6157 = vst [vmem:[%s221 + $0x140] sm:$0xff] %v5911
        %6158 = vst [vmem:[%s221 + $0x148] sm:$0xff] %v6106
        %6159 = vst [vmem:[%s221 + $0x150] sm:$0xff] %v5915
        %6160 = vst [vmem:[%s221 + $0x158] sm:$0xff] %v5917
        %6161 = vst [vmem:[%s221 + $0x160] sm:$0xff] %v6111
        %6162 = vst [vmem:[%s221 + $0x168] sm:$0xff] %v5919
        %6163 = vst [vmem:[%s221 + $0x170] sm:$0xff] %v5921
        %6164 = vst [vmem:[%s221 + $0x178] sm:$0xff] %v6114
        %s6165 = sand.u32 %s134, 1
        %s6166 = scalar_lea.sflag [#allocation5], %s6165
        %s6167 = sand.u32 %s134, 1
        %s6168 = smul.addr %s6167, 384
        %s6169 = scalar_lea.vmem [#allocation4], %s6168
        // Predicated region
        $region41: #{tpu_custom_call.1} parent=35 // pred_check
          %p6170 = pneg %p144
        $region42: #{tpu_custom_call.1} parent=35 // pred_check_branch
          %6172 = sbr.rel (%p6170) target = $region44
        $region43: #{tpu_custom_call.1} parent=35 // pred_region
          %s6173 = smul.u32 16, %s22
          %s6174 = smul.u32 3, %s23
          %s6176 = ssub.s32 6144, 6144
          %6177 = vsyncadd %s6166, %s6176
          %s6178 = smul.addr %s6173, 3
          %s6179 = sadd.s32 %s6174, %s6178
          %s6180 = smul.addr %s6179, 128
          %s6181 = scalar_lea.hbm %s4, %s6180
          %s6182 = sshll.u32 %s6169, 4
          %s6183 = int_to_ptr.vmem [resolvable:$true] %s6182
          %6188 = dma.vmem_to_hbm [thread:$0]  %s6183, 6144, %s6181, %s6166, 384, 384, 24
        $region44: #{tpu_custom_call.1} parent=35 // pred_fallthru
          _
      $region36: #{tpu_custom_call.1} parent=5 // pred_fallthru
        _
      %p6189 = scmp.le.s32.totalorder 2, %s13
      // Predicated region
      $region45: #{tpu_custom_call.1} parent=5 // pred_check
        %p6190 = pneg %p6189
      $region46: #{tpu_custom_call.1} parent=5 // pred_check_branch
        %6192 = sbr.rel (%p6190) target = $region48
      $region47: #{tpu_custom_call.1} parent=5 // pred_region
        %s6193 = ssub.s32 %s13, 2
        // Predicated region
        $region49: #{tpu_custom_call.1} parent=47 // pred_check
          %p6194 = pneg %p150
        $region50: #{tpu_custom_call.1} parent=47 // pred_check_branch
          %6196 = sbr.rel (%p6194) target = $region52
        $region51: #{tpu_custom_call.1} parent=47 // pred_region
          %s6197 = sand.u32 %s135, 1
          %s6198 = scalar_lea.sflag [#allocation5], %s6197
          %s6199 = sand.u32 %s135, 1
          %s6200 = smul.addr %s6199, 384
          %s6201 = scalar_lea.vmem [#allocation4], %s6200
          %6202 = dma.done %s6198, 6144
        $region52: #{tpu_custom_call.1} parent=47 // pred_fallthru
          _
      $region48: #{tpu_custom_call.1} parent=5 // pred_fallthru
        _
    $region6: #{tpu_custom_call.1} parent=1 // loop_footer
      %s17 = sadd.s32 1, %s13
    $region7: #{tpu_custom_call.1} parent=1 // loop_footer_branch
      %12 = sbr.rel target = $region3
    $region8: #{tpu_custom_call.1} parent=1 // loop_exit
      _
    %6203 = vsyncpa [#allocation5], 1
    %s6204 = scalar_lea.sflag [#allocation5], 1
    %6205 = vsyncpa %s6204, 1

</llo_original>
